<compile_context>
chip_gen: v7x
topology: tpu7x:2x2x1
jax: 0.10.0
libtpu: 0.0.40
codegen_flags: <defaults>
</compile_context>

<pallas_src>
import jax
import jax.numpy as jnp
from jax import lax
from jax.experimental import pallas as pl
from jax.experimental.pallas import tpu as pltpu


def _round_up(x, m):
    return (x + m - 1) // m * m


def _reorder_pad_gate_rows(w, H, Hp):
    """(4H, K) in torch [i,f,g,o] row order -> (4Hp, K) in [i,f,o,g] order,
    each gate block zero-padded from H to Hp rows."""
    i, f, g, o = w[0:H], w[H:2 * H], w[2 * H:3 * H], w[3 * H:4 * H]
    pad = ((0, Hp - H), (0, 0))
    return jnp.concatenate([jnp.pad(b, pad) for b in (i, f, o, g)], axis=0)


def _reorder_pad_gate_bias(b, H, Hp):
    i, f, g, o = b[0:H], b[H:2 * H], b[2 * H:3 * H], b[3 * H:4 * H]
    return jnp.concatenate([jnp.pad(v, (0, Hp - H)) for v in (i, f, o, g)])


def _make_recurrence_kernel(T, t_chunk, Hp, mm_dtype):
    """LSTM recurrence over one (batch-tile, time-chunk) grid cell.

    xg_ref  : (T_CHUNK, tb, 4Hp)  precomputed x_t @ W_ih^T + (b_ih + b_hh)
    w_hh_ref: (Hp, 4Hp)           hidden->gates weight (transposed, resident)
    h_out   : (tb, Hp)            h at the final (valid) timestep
    h_ref, c_ref : (tb, Hp) f32   recurrent state (persists across time axis)
    Gate order (reordered at prep time): [i, f, o, g].
    """
    needs_mask = (T % t_chunk) != 0

    def kernel(xg_ref, w_hh_ref, h_out_ref, h_ref, c_ref):
        tc = pl.program_id(1)

        @pl.when(tc == 0)
        def _init():
            h_ref[...] = jnp.zeros_like(h_ref)
            c_ref[...] = jnp.zeros_like(c_ref)

        w_hh = w_hh_ref[...]  # hoisted out of the unrolled loop

        def step(s, carry):
            h, c = carry
            # One MXU push per serial step (input projection already hoisted).
            gates = xg_ref[s].astype(jnp.float32) + jnp.dot(
                h.astype(mm_dtype), w_hh, preferred_element_type=jnp.float32)
            # Lane-aligned gate views: one sigmoid over [i|f|o], one tanh on g.
            ifo = jax.nn.sigmoid(gates[:, :3 * Hp])
            g_g = jnp.tanh(gates[:, 3 * Hp:])
            i_g = ifo[:, 0 * Hp:1 * Hp]
            f_g = ifo[:, 1 * Hp:2 * Hp]
            o_g = ifo[:, 2 * Hp:3 * Hp]
            c_new = f_g * c + i_g * g_g
            h_new = o_g * jnp.tanh(c_new)
            if needs_mask:  # skip state update on padded timesteps
                keep = (tc * t_chunk + s) < T
                h_new = jnp.where(keep, h_new, h)
                c_new = jnp.where(keep, c_new, c)
            return h_new, c_new

        h, c = lax.fori_loop(0, t_chunk, step, (h_ref[...], c_ref[...]),
                             unroll=True)
        h_ref[...] = h
        c_ref[...] = c

        @pl.when(tc == pl.num_programs(1) - 1)
        def _finalize():
            h_out_ref[...] = h

    return kernel


def lstm_model_forward(x, params, *, batch_tile=None, t_chunk=None,
                       use_bf16=False):
    """x: (B, T, I) batch_first, like the PyTorch module. Returns (B, O)."""
    w_ih, w_hh, b_ih, b_hh, w_fc, b_fc = params
    B, T, I = x.shape
    H = w_hh.shape[1]
    O = w_fc.shape[0]

    mm_dtype = jnp.bfloat16 if use_bf16 else jnp.float32
    xg_dtype = jnp.bfloat16 if use_bf16 else jnp.float32

    # --- padding / tiling -------------------------------------------------
    Hp = _round_up(H, 128)            # lane-aligned gate blocks
    Gp = 4 * Hp
    B_pad = _round_up(B, 8)           # f32 sublane
    # v6e/v7x MXU is 256-wide: fill it when the batch allows.  (For very
    # large B on v7x, pick tb so n_bt is a multiple of 2 to use both TCs.)
    tb = batch_tile if batch_tile is not None else min(B_pad, 256)
    B_pad = _round_up(B_pad, tb)
    n_bt = B_pad // tb

    xg_bytes = 2 if use_bf16 else 4
    wbytes = 2 if use_bf16 else 4
    if t_chunk is None:
        # Fold up to 32 timesteps per grid step, capped so the streamed xg
        # block stays ~<= 8 MiB.
        by_vmem = max(1, (8 << 20) // max(1, tb * Gp * xg_bytes))
        t_chunk = max(1, min(32, T, by_vmem))
    else:
        t_chunk = max(1, min(t_chunk, T))
    n_tc = (T + t_chunk - 1) // t_chunk
    T_pad = n_tc * t_chunk

    # --- weight / bias prep (gate reorder [i,f,o,g] + per-gate H padding) --
    w_ih_g = _reorder_pad_gate_rows(w_ih.astype(jnp.float32), H, Hp)     # (4Hp, I)
    w_hh_g = _reorder_pad_gate_rows(w_hh.astype(jnp.float32), H, Hp)     # (4Hp, H)
    w_hh_g = jnp.pad(w_hh_g, ((0, 0), (0, Hp - H)))                      # (4Hp, Hp)
    bias_g = (_reorder_pad_gate_bias(b_ih.astype(jnp.float32), H, Hp) +
              _reorder_pad_gate_bias(b_hh.astype(jnp.float32), H, Hp))   # (4Hp,)
    w_hh_t = jnp.transpose(w_hh_g).astype(mm_dtype)                      # (Hp, 4Hp)

    # --- hoisted input projection (pad x FIRST, not xg) --------------------
    x = x.astype(jnp.float32)
    if B_pad != B or T_pad != T:
        x = jnp.pad(x, ((0, B_pad - B), (0, T_pad - T), (0, 0)))
    xg = jnp.einsum('bti,gi->tbg', x, w_ih_g,
                    preferred_element_type=jnp.float32) + bias_g          # (T_pad, B_pad, 4Hp)
    xg = xg.astype(xg_dtype)

    # --- VMEM budget (generation-aware cap) --------------------------------
    vmem_est = (2 * t_chunk * tb * Gp * xg_bytes   # streamed xg (double-buffered)
                + 2 * Hp * Gp * wbytes             # W_hh (worst case 2 bufs)
                + 2 * tb * Hp * 4                  # h_out block
                + 2 * tb * Hp * 4)                 # h/c scratch
    try:
        vmem_cap = int(pltpu.get_tpu_info().vmem_capacity_bytes)
    except Exception:
        vmem_cap = 64 << 20                        # conservative (v7x)
    vmem_limit = int(min(max(int(1.5 * vmem_est), 4 << 20),
                         max(vmem_cap - (12 << 20), 4 << 20)))

    kernel = _make_recurrence_kernel(T, t_chunk, Hp, mm_dtype)

    def run(weight_pipeline_mode):
        if weight_pipeline_mode is None:
            w_spec = pl.BlockSpec((Hp, Gp), lambda b, t: (0, 0))
        else:
            w_spec = pl.BlockSpec((Hp, Gp), lambda b, t: (0, 0),
                                  pipeline_mode=weight_pipeline_mode)
        return pl.pallas_call(
            kernel,
            out_shape=jax.ShapeDtypeStruct((B_pad, Hp), jnp.float32),
            grid_spec=pltpu.PrefetchScalarGridSpec(
                num_scalar_prefetch=0,
                grid=(n_bt, n_tc),
                in_specs=[
                    pl.BlockSpec((t_chunk, tb, Gp),
                                 lambda b, t: (t, b, 0)),   # xg (streamed)
                    w_spec,                                  # W_hh (resident)
                ],
                out_specs=pl.BlockSpec((tb, Hp), lambda b, t: (b, 0)),
                scratch_shapes=[pltpu.VMEM((tb, Hp), jnp.float32),   # h
                                pltpu.VMEM((tb, Hp), jnp.float32)],  # c
            ),
            compiler_params=pltpu.CompilerParams(
                dimension_semantics=("parallel", "arbitrary"),
                vmem_limit_bytes=vmem_limit),
        )(xg, w_hh_t)

    try:
        # Constant-index weight block: no need to double-buffer.
        h_final = run(pl.Buffered(1))
    except Exception:
        h_final = run(None)

    # Final Linear moved out of the recurrence kernel (used once; frees VMEM).
    h_last = h_final[:B, :H].astype(jnp.float32)
    return h_last @ jnp.transpose(w_fc).astype(jnp.float32) \
        + b_fc.astype(jnp.float32)


def lstm_model_reference(x, params):
    """Pure-JAX reference matching nn.LSTM(batch_first) + nn.Linear semantics."""
    w_ih, w_hh, b_ih, b_hh, w_fc, b_fc = params
    B, T, I = x.shape
    H = w_hh.shape[1]
    h = jnp.zeros((B, H), jnp.float32)
    c = jnp.zeros((B, H), jnp.float32)
    for t in range(T):
        gates = x[:, t, :] @ w_ih.T + h @ w_hh.T + b_ih + b_hh
        i_g = jax.nn.sigmoid(gates[:, 0 * H:1 * H])
        f_g = jax.nn.sigmoid(gates[:, 1 * H:2 * H])
        g_g = jnp.tanh(gates[:, 2 * H:3 * H])
        o_g = jax.nn.sigmoid(gates[:, 3 * H:4 * H])
        c = f_g * c + i_g * g_g
        h = o_g * jnp.tanh(c)
    return h @ w_fc.T + b_fc


def init_params(key, input_size, hidden_size, output_size):
    ks = jax.random.split(key, 6)
    scale = 0.1
    w_ih = scale * jax.random.normal(ks[0], (4 * hidden_size, input_size), jnp.float32)
    w_hh = scale * jax.random.normal(ks[1], (4 * hidden_size, hidden_size), jnp.float32)
    b_ih = scale * jax.random.normal(ks[2], (4 * hidden_size,), jnp.float32)
    b_hh = scale * jax.random.normal(ks[3], (4 * hidden_size,), jnp.float32)
    w_fc = scale * jax.random.normal(ks[4], (output_size, hidden_size), jnp.float32)
    b_fc = scale * jax.random.normal(ks[5], (output_size,), jnp.float32)
    return (w_ih, w_hh, b_ih, b_hh, w_fc, b_fc)


if __name__ == "__main__":
    # num_layers=1 as in the module's default; multi-layer would stack calls.
    B, T, I, H, O = 2, 8, 16, 32, 8
    key = jax.random.PRNGKey(0)
    k_x, k_p = jax.random.split(key)
    x = jax.random.normal(k_x, (B, T, I), jnp.float32)
    params = init_params(k_p, I, H, O)

    ref = lstm_model_reference(x, params)

    # Strict f32 path.
    out = jax.block_until_ready(lstm_model_forward(x, params, use_bf16=False))
    assert out.shape == (B, O), out.shape
    assert jnp.allclose(out, ref, rtol=1e-4, atol=1e-4), (
        f"f32 max abs err {jnp.max(jnp.abs(out - ref))}")

    # bf16 inference path (bf16 xg + bf16 matmul operands, f32 accumulate).
    out_bf16 = jax.block_until_ready(lstm_model_forward(x, params, use_bf16=True))
    assert jnp.allclose(out_bf16, ref, rtol=3e-2, atol=3e-2), (
        f"bf16 max abs err {jnp.max(jnp.abs(out_bf16 - ref))}")

    print("KERNEL_OK")
</pallas_src>

<mosaic_0001>
module attributes {stable_mosaic.version = 11 : i64} {
  func.func @kernel(%arg0: i32, %arg1: i32, %arg2: memref<8x8x512xf32, #tpu.memory_space<vmem>>, %arg3: memref<128x512xf32, #tpu.memory_space<vmem>>, %arg4: memref<8x128xf32, #tpu.memory_space<vmem>>, %arg5: memref<8x128xf32, #tpu.memory_space<vmem>>, %arg6: memref<8x128xf32, #tpu.memory_space<vmem>>) attributes {dimension_semantics = [#tpu.dimension_semantics<parallel>, #tpu.dimension_semantics<arbitrary>], iteration_bounds = array<i64: 1, 1>, scalar_prefetch = 0 : i64, scratch_operands = 2 : i64, tpu.core_type = #tpu.core_type<tc>, window_params = [{transform_indices = @transform_0, window_bounds = array<i64: 8, 8, 512>}, {pipeline_mode = #tpu.pipeline_mode<synchronous>, transform_indices = @transform_1, window_bounds = array<i64: 128, 512>}, {transform_indices = @transform_2, window_bounds = array<i64: 8, 128>}]} {
    %c0_i32 = arith.constant 0 : i32
    %0 = arith.cmpi eq, %arg1, %c0_i32 : i32
    %1 = arith.extui %0 : i1 to i32
    %c0_i32_0 = arith.constant 0 : i32
    %2 = arith.cmpi ne, %1, %c0_i32_0 : i32
    scf.if %2 {
      %cst_44 = arith.constant 0.000000e+00 : f32
      %179 = vector.broadcast %cst_44 : f32 to vector<8x128xf32>
      %c0_45 = arith.constant 0 : index
      %c0_46 = arith.constant 0 : index
      %180 = vector.load %arg5[%c0_45, %c0_46] : memref<8x128xf32, #tpu.memory_space<vmem>>, vector<8x128xf32>
      tpu.vector_store %arg5[%c0_45, %c0_46], %179 {strides = array<i32>} : memref<8x128xf32, #tpu.memory_space<vmem>>, vector<8x128xf32>,
      %cst_47 = arith.constant 0.000000e+00 : f32
      %181 = vector.broadcast %cst_47 : f32 to vector<8x128xf32>
      %c0_48 = arith.constant 0 : index
      %c0_49 = arith.constant 0 : index
      %182 = vector.load %arg6[%c0_48, %c0_49] : memref<8x128xf32, #tpu.memory_space<vmem>>, vector<8x128xf32>
      tpu.vector_store %arg6[%c0_48, %c0_49], %181 {strides = array<i32>} : memref<8x128xf32, #tpu.memory_space<vmem>>, vector<8x128xf32>,
    } else {
    }
    %c0 = arith.constant 0 : index
    %c0_1 = arith.constant 0 : index
    %3 = vector.load %arg3[%c0, %c0_1] : memref<128x512xf32, #tpu.memory_space<vmem>>, vector<128x512xf32>
    %c0_2 = arith.constant 0 : index
    %c0_3 = arith.constant 0 : index
    %4 = vector.load %arg5[%c0_2, %c0_3] : memref<8x128xf32, #tpu.memory_space<vmem>>, vector<8x128xf32>
    %c0_4 = arith.constant 0 : index
    %c0_5 = arith.constant 0 : index
    %5 = vector.load %arg6[%c0_4, %c0_5] : memref<8x128xf32, #tpu.memory_space<vmem>>, vector<8x128xf32>
    %c0_i32_6 = arith.constant 0 : i32
    %6 = arith.index_cast %c0_i32_6 : i32 to index
    %c0_7 = arith.constant 0 : index
    %c0_8 = arith.constant 0 : index
    %7 = vector.load %arg2[%6, %c0_7, %c0_8] : memref<8x8x512xf32, #tpu.memory_space<vmem>>, vector<1x8x512xf32>
    %8 = vector.shape_cast %7 : vector<1x8x512xf32> to vector<8x512xf32>
    %cst = arith.constant dense<0.000000e+00> : vector<8x512xf32>
    %9 = tpu.matmul %4, %3, %cst {dimension_numbers = #tpu.dot_dimension_numbers<[1], [0], [0], [1], [0, 0, 1, 1], [], []>} : vector<8x128xf32>, vector<128x512xf32>, vector<8x512xf32> -> vector<8x512xf32>
    %10 = arith.addf %8, %9 : vector<8x512xf32>
    %11 = vector.extract_strided_slice %10 {offsets = [0, 0], sizes = [8, 384], strides = [1, 1]} : vector<8x512xf32> to vector<8x384xf32>
    %12 = arith.negf %11 : vector<8x384xf32>
    %13 = math.exp %12 : vector<8x384xf32>
    %cst_9 = arith.constant 1.000000e+00 : f32
    %14 = vector.broadcast %cst_9 : f32 to vector<8x384xf32>
    %15 = arith.addf %14, %13 : vector<8x384xf32>
    %16 = arith.divf %14, %15 : vector<8x384xf32>
    %17 = vector.extract_strided_slice %10 {offsets = [0, 384], sizes = [8, 128], strides = [1, 1]} : vector<8x512xf32> to vector<8x128xf32>
    %18 = math.tanh %17 : vector<8x128xf32>
    %19 = vector.extract_strided_slice %16 {offsets = [0, 0], sizes = [8, 128], strides = [1, 1]} : vector<8x384xf32> to vector<8x128xf32>
    %20 = vector.extract_strided_slice %16 {offsets = [0, 128], sizes = [8, 128], strides = [1, 1]} : vector<8x384xf32> to vector<8x128xf32>
    %21 = vector.extract_strided_slice %16 {offsets = [0, 256], sizes = [8, 128], strides = [1, 1]} : vector<8x384xf32> to vector<8x128xf32>
    %22 = arith.mulf %20, %5 : vector<8x128xf32>
    %23 = arith.mulf %19, %18 : vector<8x128xf32>
    %24 = arith.addf %22, %23 : vector<8x128xf32>
    %25 = math.tanh %24 : vector<8x128xf32>
    %26 = arith.mulf %21, %25 : vector<8x128xf32>
    %c1_i32 = arith.constant 1 : i32
    %27 = arith.index_cast %c1_i32 : i32 to index
    %c0_10 = arith.constant 0 : index
    %c0_11 = arith.constant 0 : index
    %28 = vector.load %arg2[%27, %c0_10, %c0_11] : memref<8x8x512xf32, #tpu.memory_space<vmem>>, vector<1x8x512xf32>
    %29 = vector.shape_cast %28 : vector<1x8x512xf32> to vector<8x512xf32>
    %cst_12 = arith.constant dense<0.000000e+00> : vector<8x512xf32>
    %30 = tpu.matmul %26, %3, %cst_12 {dimension_numbers = #tpu.dot_dimension_numbers<[1], [0], [0], [1], [0, 0, 1, 1], [], []>} : vector<8x128xf32>, vector<128x512xf32>, vector<8x512xf32> -> vector<8x512xf32>
    %31 = arith.addf %29, %30 : vector<8x512xf32>
    %32 = vector.extract_strided_slice %31 {offsets = [0, 0], sizes = [8, 384], strides = [1, 1]} : vector<8x512xf32> to vector<8x384xf32>
    %33 = arith.negf %32 : vector<8x384xf32>
    %34 = math.exp %33 : vector<8x384xf32>
    %cst_13 = arith.constant 1.000000e+00 : f32
    %35 = vector.broadcast %cst_13 : f32 to vector<8x384xf32>
    %36 = arith.addf %35, %34 : vector<8x384xf32>
    %37 = arith.divf %35, %36 : vector<8x384xf32>
    %38 = vector.extract_strided_slice %31 {offsets = [0, 384], sizes = [8, 128], strides = [1, 1]} : vector<8x512xf32> to vector<8x128xf32>
    %39 = math.tanh %38 : vector<8x128xf32>
    %40 = vector.extract_strided_slice %37 {offsets = [0, 0], sizes = [8, 128], strides = [1, 1]} : vector<8x384xf32> to vector<8x128xf32>
    %41 = vector.extract_strided_slice %37 {offsets = [0, 128], sizes = [8, 128], strides = [1, 1]} : vector<8x384xf32> to vector<8x128xf32>
    %42 = vector.extract_strided_slice %37 {offsets = [0, 256], sizes = [8, 128], strides = [1, 1]} : vector<8x384xf32> to vector<8x128xf32>
    %43 = arith.mulf %41, %24 : vector<8x128xf32>
    %44 = arith.mulf %40, %39 : vector<8x128xf32>
    %45 = arith.addf %43, %44 : vector<8x128xf32>
    %46 = math.tanh %45 : vector<8x128xf32>
    %47 = arith.mulf %42, %46 : vector<8x128xf32>
    %c2_i32 = arith.constant 2 : i32
    %48 = arith.index_cast %c2_i32 : i32 to index
    %c0_14 = arith.constant 0 : index
    %c0_15 = arith.constant 0 : index
    %49 = vector.load %arg2[%48, %c0_14, %c0_15] : memref<8x8x512xf32, #tpu.memory_space<vmem>>, vector<1x8x512xf32>
    %50 = vector.shape_cast %49 : vector<1x8x512xf32> to vector<8x512xf32>
    %cst_16 = arith.constant dense<0.000000e+00> : vector<8x512xf32>
    %51 = tpu.matmul %47, %3, %cst_16 {dimension_numbers = #tpu.dot_dimension_numbers<[1], [0], [0], [1], [0, 0, 1, 1], [], []>} : vector<8x128xf32>, vector<128x512xf32>, vector<8x512xf32> -> vector<8x512xf32>
    %52 = arith.addf %50, %51 : vector<8x512xf32>
    %53 = vector.extract_strided_slice %52 {offsets = [0, 0], sizes = [8, 384], strides = [1, 1]} : vector<8x512xf32> to vector<8x384xf32>
    %54 = arith.negf %53 : vector<8x384xf32>
    %55 = math.exp %54 : vector<8x384xf32>
    %cst_17 = arith.constant 1.000000e+00 : f32
    %56 = vector.broadcast %cst_17 : f32 to vector<8x384xf32>
    %57 = arith.addf %56, %55 : vector<8x384xf32>
    %58 = arith.divf %56, %57 : vector<8x384xf32>
    %59 = vector.extract_strided_slice %52 {offsets = [0, 384], sizes = [8, 128], strides = [1, 1]} : vector<8x512xf32> to vector<8x128xf32>
    %60 = math.tanh %59 : vector<8x128xf32>
    %61 = vector.extract_strided_slice %58 {offsets = [0, 0], sizes = [8, 128], strides = [1, 1]} : vector<8x384xf32> to vector<8x128xf32>
    %62 = vector.extract_strided_slice %58 {offsets = [0, 128], sizes = [8, 128], strides = [1, 1]} : vector<8x384xf32> to vector<8x128xf32>
    %63 = vector.extract_strided_slice %58 {offsets = [0, 256], sizes = [8, 128], strides = [1, 1]} : vector<8x384xf32> to vector<8x128xf32>
    %64 = arith.mulf %62, %45 : vector<8x128xf32>
    %65 = arith.mulf %61, %60 : vector<8x128xf32>
    %66 = arith.addf %64, %65 : vector<8x128xf32>
    %67 = math.tanh %66 : vector<8x128xf32>
    %68 = arith.mulf %63, %67 : vector<8x128xf32>
    %c3_i32 = arith.constant 3 : i32
    %69 = arith.index_cast %c3_i32 : i32 to index
    %c0_18 = arith.constant 0 : index
    %c0_19 = arith.constant 0 : index
    %70 = vector.load %arg2[%69, %c0_18, %c0_19] : memref<8x8x512xf32, #tpu.memory_space<vmem>>, vector<1x8x512xf32>
    %71 = vector.shape_cast %70 : vector<1x8x512xf32> to vector<8x512xf32>
    %cst_20 = arith.constant dense<0.000000e+00> : vector<8x512xf32>
    %72 = tpu.matmul %68, %3, %cst_20 {dimension_numbers = #tpu.dot_dimension_numbers<[1], [0], [0], [1], [0, 0, 1, 1], [], []>} : vector<8x128xf32>, vector<128x512xf32>, vector<8x512xf32> -> vector<8x512xf32>
    %73 = arith.addf %71, %72 : vector<8x512xf32>
    %74 = vector.extract_strided_slice %73 {offsets = [0, 0], sizes = [8, 384], strides = [1, 1]} : vector<8x512xf32> to vector<8x384xf32>
    %75 = arith.negf %74 : vector<8x384xf32>
    %76 = math.exp %75 : vector<8x384xf32>
    %cst_21 = arith.constant 1.000000e+00 : f32
    %77 = vector.broadcast %cst_21 : f32 to vector<8x384xf32>
    %78 = arith.addf %77, %76 : vector<8x384xf32>
    %79 = arith.divf %77, %78 : vector<8x384xf32>
    %80 = vector.extract_strided_slice %73 {offsets = [0, 384], sizes = [8, 128], strides = [1, 1]} : vector<8x512xf32> to vector<8x128xf32>
    %81 = math.tanh %80 : vector<8x128xf32>
    %82 = vector.extract_strided_slice %79 {offsets = [0, 0], sizes = [8, 128], strides = [1, 1]} : vector<8x384xf32> to vector<8x128xf32>
    %83 = vector.extract_strided_slice %79 {offsets = [0, 128], sizes = [8, 128], strides = [1, 1]} : vector<8x384xf32> to vector<8x128xf32>
    %84 = vector.extract_strided_slice %79 {offsets = [0, 256], sizes = [8, 128], strides = [1, 1]} : vector<8x384xf32> to vector<8x128xf32>
    %85 = arith.mulf %83, %66 : vector<8x128xf32>
    %86 = arith.mulf %82, %81 : vector<8x128xf32>
    %87 = arith.addf %85, %86 : vector<8x128xf32>
    %88 = math.tanh %87 : vector<8x128xf32>
    %89 = arith.mulf %84, %88 : vector<8x128xf32>
    %c4_i32 = arith.constant 4 : i32
    %90 = arith.index_cast %c4_i32 : i32 to index
    %c0_22 = arith.constant 0 : index
    %c0_23 = arith.constant 0 : index
    %91 = vector.load %arg2[%90, %c0_22, %c0_23] : memref<8x8x512xf32, #tpu.memory_space<vmem>>, vector<1x8x512xf32>
    %92 = vector.shape_cast %91 : vector<1x8x512xf32> to vector<8x512xf32>
    %cst_24 = arith.constant dense<0.000000e+00> : vector<8x512xf32>
    %93 = tpu.matmul %89, %3, %cst_24 {dimension_numbers = #tpu.dot_dimension_numbers<[1], [0], [0], [1], [0, 0, 1, 1], [], []>} : vector<8x128xf32>, vector<128x512xf32>, vector<8x512xf32> -> vector<8x512xf32>
    %94 = arith.addf %92, %93 : vector<8x512xf32>
    %95 = vector.extract_strided_slice %94 {offsets = [0, 0], sizes = [8, 384], strides = [1, 1]} : vector<8x512xf32> to vector<8x384xf32>
    %96 = arith.negf %95 : vector<8x384xf32>
    %97 = math.exp %96 : vector<8x384xf32>
    %cst_25 = arith.constant 1.000000e+00 : f32
    %98 = vector.broadcast %cst_25 : f32 to vector<8x384xf32>
    %99 = arith.addf %98, %97 : vector<8x384xf32>
    %100 = arith.divf %98, %99 : vector<8x384xf32>
    %101 = vector.extract_strided_slice %94 {offsets = [0, 384], sizes = [8, 128], strides = [1, 1]} : vector<8x512xf32> to vector<8x128xf32>
    %102 = math.tanh %101 : vector<8x128xf32>
    %103 = vector.extract_strided_slice %100 {offsets = [0, 0], sizes = [8, 128], strides = [1, 1]} : vector<8x384xf32> to vector<8x128xf32>
    %104 = vector.extract_strided_slice %100 {offsets = [0, 128], sizes = [8, 128], strides = [1, 1]} : vector<8x384xf32> to vector<8x128xf32>
    %105 = vector.extract_strided_slice %100 {offsets = [0, 256], sizes = [8, 128], strides = [1, 1]} : vector<8x384xf32> to vector<8x128xf32>
    %106 = arith.mulf %104, %87 : vector<8x128xf32>
    %107 = arith.mulf %103, %102 : vector<8x128xf32>
    %108 = arith.addf %106, %107 : vector<8x128xf32>
    %109 = math.tanh %108 : vector<8x128xf32>
    %110 = arith.mulf %105, %109 : vector<8x128xf32>
    %c5_i32 = arith.constant 5 : i32
    %111 = arith.index_cast %c5_i32 : i32 to index
    %c0_26 = arith.constant 0 : index
    %c0_27 = arith.constant 0 : index
    %112 = vector.load %arg2[%111, %c0_26, %c0_27] : memref<8x8x512xf32, #tpu.memory_space<vmem>>, vector<1x8x512xf32>
    %113 = vector.shape_cast %112 : vector<1x8x512xf32> to vector<8x512xf32>
    %cst_28 = arith.constant dense<0.000000e+00> : vector<8x512xf32>
    %114 = tpu.matmul %110, %3, %cst_28 {dimension_numbers = #tpu.dot_dimension_numbers<[1], [0], [0], [1], [0, 0, 1, 1], [], []>} : vector<8x128xf32>, vector<128x512xf32>, vector<8x512xf32> -> vector<8x512xf32>
    %115 = arith.addf %113, %114 : vector<8x512xf32>
    %116 = vector.extract_strided_slice %115 {offsets = [0, 0], sizes = [8, 384], strides = [1, 1]} : vector<8x512xf32> to vector<8x384xf32>
    %117 = arith.negf %116 : vector<8x384xf32>
    %118 = math.exp %117 : vector<8x384xf32>
    %cst_29 = arith.constant 1.000000e+00 : f32
    %119 = vector.broadcast %cst_29 : f32 to vector<8x384xf32>
    %120 = arith.addf %119, %118 : vector<8x384xf32>
    %121 = arith.divf %119, %120 : vector<8x384xf32>
    %122 = vector.extract_strided_slice %115 {offsets = [0, 384], sizes = [8, 128], strides = [1, 1]} : vector<8x512xf32> to vector<8x128xf32>
    %123 = math.tanh %122 : vector<8x128xf32>
    %124 = vector.extract_strided_slice %121 {offsets = [0, 0], sizes = [8, 128], strides = [1, 1]} : vector<8x384xf32> to vector<8x128xf32>
    %125 = vector.extract_strided_slice %121 {offsets = [0, 128], sizes = [8, 128], strides = [1, 1]} : vector<8x384xf32> to vector<8x128xf32>
    %126 = vector.extract_strided_slice %121 {offsets = [0, 256], sizes = [8, 128], strides = [1, 1]} : vector<8x384xf32> to vector<8x128xf32>
    %127 = arith.mulf %125, %108 : vector<8x128xf32>
    %128 = arith.mulf %124, %123 : vector<8x128xf32>
    %129 = arith.addf %127, %128 : vector<8x128xf32>
    %130 = math.tanh %129 : vector<8x128xf32>
    %131 = arith.mulf %126, %130 : vector<8x128xf32>
    %c6_i32 = arith.constant 6 : i32
    %132 = arith.index_cast %c6_i32 : i32 to index
    %c0_30 = arith.constant 0 : index
    %c0_31 = arith.constant 0 : index
    %133 = vector.load %arg2[%132, %c0_30, %c0_31] : memref<8x8x512xf32, #tpu.memory_space<vmem>>, vector<1x8x512xf32>
    %134 = vector.shape_cast %133 : vector<1x8x512xf32> to vector<8x512xf32>
    %cst_32 = arith.constant dense<0.000000e+00> : vector<8x512xf32>
    %135 = tpu.matmul %131, %3, %cst_32 {dimension_numbers = #tpu.dot_dimension_numbers<[1], [0], [0], [1], [0, 0, 1, 1], [], []>} : vector<8x128xf32>, vector<128x512xf32>, vector<8x512xf32> -> vector<8x512xf32>
    %136 = arith.addf %134, %135 : vector<8x512xf32>
    %137 = vector.extract_strided_slice %136 {offsets = [0, 0], sizes = [8, 384], strides = [1, 1]} : vector<8x512xf32> to vector<8x384xf32>
    %138 = arith.negf %137 : vector<8x384xf32>
    %139 = math.exp %138 : vector<8x384xf32>
    %cst_33 = arith.constant 1.000000e+00 : f32
    %140 = vector.broadcast %cst_33 : f32 to vector<8x384xf32>
    %141 = arith.addf %140, %139 : vector<8x384xf32>
    %142 = arith.divf %140, %141 : vector<8x384xf32>
    %143 = vector.extract_strided_slice %136 {offsets = [0, 384], sizes = [8, 128], strides = [1, 1]} : vector<8x512xf32> to vector<8x128xf32>
    %144 = math.tanh %143 : vector<8x128xf32>
    %145 = vector.extract_strided_slice %142 {offsets = [0, 0], sizes = [8, 128], strides = [1, 1]} : vector<8x384xf32> to vector<8x128xf32>
    %146 = vector.extract_strided_slice %142 {offsets = [0, 128], sizes = [8, 128], strides = [1, 1]} : vector<8x384xf32> to vector<8x128xf32>
    %147 = vector.extract_strided_slice %142 {offsets = [0, 256], sizes = [8, 128], strides = [1, 1]} : vector<8x384xf32> to vector<8x128xf32>
    %148 = arith.mulf %146, %129 : vector<8x128xf32>
    %149 = arith.mulf %145, %144 : vector<8x128xf32>
    %150 = arith.addf %148, %149 : vector<8x128xf32>
    %151 = math.tanh %150 : vector<8x128xf32>
    %152 = arith.mulf %147, %151 : vector<8x128xf32>
    %c7_i32 = arith.constant 7 : i32
    %153 = arith.index_cast %c7_i32 : i32 to index
    %c0_34 = arith.constant 0 : index
    %c0_35 = arith.constant 0 : index
    %154 = vector.load %arg2[%153, %c0_34, %c0_35] : memref<8x8x512xf32, #tpu.memory_space<vmem>>, vector<1x8x512xf32>
    %155 = vector.shape_cast %154 : vector<1x8x512xf32> to vector<8x512xf32>
    %cst_36 = arith.constant dense<0.000000e+00> : vector<8x512xf32>
    %156 = tpu.matmul %152, %3, %cst_36 {dimension_numbers = #tpu.dot_dimension_numbers<[1], [0], [0], [1], [0, 0, 1, 1], [], []>} : vector<8x128xf32>, vector<128x512xf32>, vector<8x512xf32> -> vector<8x512xf32>
    %157 = arith.addf %155, %156 : vector<8x512xf32>
    %158 = vector.extract_strided_slice %157 {offsets = [0, 0], sizes = [8, 384], strides = [1, 1]} : vector<8x512xf32> to vector<8x384xf32>
    %159 = arith.negf %158 : vector<8x384xf32>
    %160 = math.exp %159 : vector<8x384xf32>
    %cst_37 = arith.constant 1.000000e+00 : f32
    %161 = vector.broadcast %cst_37 : f32 to vector<8x384xf32>
    %162 = arith.addf %161, %160 : vector<8x384xf32>
    %163 = arith.divf %161, %162 : vector<8x384xf32>
    %164 = vector.extract_strided_slice %157 {offsets = [0, 384], sizes = [8, 128], strides = [1, 1]} : vector<8x512xf32> to vector<8x128xf32>
    %165 = math.tanh %164 : vector<8x128xf32>
    %166 = vector.extract_strided_slice %163 {offsets = [0, 0], sizes = [8, 128], strides = [1, 1]} : vector<8x384xf32> to vector<8x128xf32>
    %167 = vector.extract_strided_slice %163 {offsets = [0, 128], sizes = [8, 128], strides = [1, 1]} : vector<8x384xf32> to vector<8x128xf32>
    %168 = vector.extract_strided_slice %163 {offsets = [0, 256], sizes = [8, 128], strides = [1, 1]} : vector<8x384xf32> to vector<8x128xf32>
    %169 = arith.mulf %167, %150 : vector<8x128xf32>
    %170 = arith.mulf %166, %165 : vector<8x128xf32>
    %171 = arith.addf %169, %170 : vector<8x128xf32>
    %172 = math.tanh %171 : vector<8x128xf32>
    %173 = arith.mulf %168, %172 : vector<8x128xf32>
    %c8_i32 = arith.constant 8 : i32
    %c0_38 = arith.constant 0 : index
    %c0_39 = arith.constant 0 : index
    %174 = vector.load %arg5[%c0_38, %c0_39] : memref<8x128xf32, #tpu.memory_space<vmem>>, vector<8x128xf32>
    tpu.vector_store %arg5[%c0_38, %c0_39], %173 {strides = array<i32>} : memref<8x128xf32, #tpu.memory_space<vmem>>, vector<8x128xf32>,
    %c0_40 = arith.constant 0 : index
    %c0_41 = arith.constant 0 : index
    %175 = vector.load %arg6[%c0_40, %c0_41] : memref<8x128xf32, #tpu.memory_space<vmem>>, vector<8x128xf32>
    tpu.vector_store %arg6[%c0_40, %c0_41], %171 {strides = array<i32>} : memref<8x128xf32, #tpu.memory_space<vmem>>, vector<8x128xf32>,
    %c0_i32_42 = arith.constant 0 : i32
    %176 = arith.cmpi eq, %arg1, %c0_i32_42 : i32
    %177 = arith.extui %176 : i1 to i32
    %c0_i32_43 = arith.constant 0 : i32
    %178 = arith.cmpi ne, %177, %c0_i32_43 : i32
    scf.if %178 {
      %c0_44 = arith.constant 0 : index
      %c0_45 = arith.constant 0 : index
      %179 = vector.load %arg4[%c0_44, %c0_45] : memref<8x128xf32, #tpu.memory_space<vmem>>, vector<8x128xf32>
      tpu.vector_store %arg4[%c0_44, %c0_45], %173 {strides = array<i32>} : memref<8x128xf32, #tpu.memory_space<vmem>>, vector<8x128xf32>,
    } else {
    }
    return
  }
  func.func @transform_0(%arg0: i32, %arg1: i32) -> (i32, i32, i32) {
    %c0_i32 = arith.constant 0 : i32
    %c0_i32_0 = arith.constant 0 : i32
    return %arg1, %arg0, %c0_i32 : i32, i32, i32
  }
  func.func @transform_1(%arg0: i32, %arg1: i32) -> (i32, i32) {
    %c0_i32 = arith.constant 0 : i32
    %c0_i32_0 = arith.constant 0 : i32
    %c0_i32_1 = arith.constant 0 : i32
    return %c0_i32, %c0_i32_0 : i32, i32
  }
  func.func @transform_2(%arg0: i32, %arg1: i32) -> (i32, i32) {
    %c0_i32 = arith.constant 0 : i32
    %c0_i32_0 = arith.constant 0 : i32
    return %arg0, %c0_i32 : i32, i32
  }
}

module attributes {stable_mosaic.version = 11 : i64} {
  func.func @kernel(%arg0: i32, %arg1: i32, %arg2: memref<8x8x512xf32, #tpu.memory_space<vmem>>, %arg3: memref<128x512xf32, #tpu.memory_space<vmem>>, %arg4: memref<8x128xf32, #tpu.memory_space<vmem>>, %arg5: memref<8x128xf32, #tpu.memory_space<vmem>>, %arg6: memref<8x128xf32, #tpu.memory_space<vmem>>) attributes {dimension_semantics = [#tpu.dimension_semantics<parallel>, #tpu.dimension_semantics<arbitrary>], iteration_bounds = array<i64: 1, 1>, scalar_prefetch = 0 : i64, scratch_operands = 2 : i64, tpu.core_type = #tpu.core_type<tc>, window_params = [{transform_indices = @transform_0, window_bounds = array<i64: 8, 8, 512>}, {pipeline_mode = #tpu.pipeline_mode<synchronous>, transform_indices = @transform_1, window_bounds = array<i64: 128, 512>}, {transform_indices = @transform_2, window_bounds = array<i64: 8, 128>}]} {
    %c0_i32 = arith.constant 0 : i32
    %0 = arith.cmpi eq, %arg1, %c0_i32 : i32
    %1 = arith.extui %0 : i1 to i32
    %c0_i32_0 = arith.constant 0 : i32
    %2 = arith.cmpi ne, %1, %c0_i32_0 : i32
    scf.if %2 {
      %cst_44 = arith.constant 0.000000e+00 : f32
      %179 = vector.broadcast %cst_44 : f32 to vector<8x128xf32>
      %c0_45 = arith.constant 0 : index
      %c0_46 = arith.constant 0 : index
      %180 = vector.load %arg5[%c0_45, %c0_46] : memref<8x128xf32, #tpu.memory_space<vmem>>, vector<8x128xf32>
      tpu.vector_store %arg5[%c0_45, %c0_46], %179 {strides = array<i32>} : memref<8x128xf32, #tpu.memory_space<vmem>>, vector<8x128xf32>,
      %cst_47 = arith.constant 0.000000e+00 : f32
      %181 = vector.broadcast %cst_47 : f32 to vector<8x128xf32>
      %c0_48 = arith.constant 0 : index
      %c0_49 = arith.constant 0 : index
      %182 = vector.load %arg6[%c0_48, %c0_49] : memref<8x128xf32, #tpu.memory_space<vmem>>, vector<8x128xf32>
      tpu.vector_store %arg6[%c0_48, %c0_49], %181 {strides = array<i32>} : memref<8x128xf32, #tpu.memory_space<vmem>>, vector<8x128xf32>,
    } else {
    }
    %c0 = arith.constant 0 : index
    %c0_1 = arith.constant 0 : index
    %3 = vector.load %arg3[%c0, %c0_1] : memref<128x512xf32, #tpu.memory_space<vmem>>, vector<128x512xf32>
    %c0_2 = arith.constant 0 : index
    %c0_3 = arith.constant 0 : index
    %4 = vector.load %arg5[%c0_2, %c0_3] : memref<8x128xf32, #tpu.memory_space<vmem>>, vector<8x128xf32>
    %c0_4 = arith.constant 0 : index
    %c0_5 = arith.constant 0 : index
    %5 = vector.load %arg6[%c0_4, %c0_5] : memref<8x128xf32, #tpu.memory_space<vmem>>, vector<8x128xf32>
    %c0_i32_6 = arith.constant 0 : i32
    %6 = arith.index_cast %c0_i32_6 : i32 to index
    %c0_7 = arith.constant 0 : index
    %c0_8 = arith.constant 0 : index
    %7 = vector.load %arg2[%6, %c0_7, %c0_8] : memref<8x8x512xf32, #tpu.memory_space<vmem>>, vector<1x8x512xf32>
    %8 = vector.shape_cast %7 : vector<1x8x512xf32> to vector<8x512xf32>
    %cst = arith.constant dense<0.000000e+00> : vector<8x512xf32>
    %9 = tpu.matmul %4, %3, %cst {dimension_numbers = #tpu.dot_dimension_numbers<[1], [0], [0], [1], [0, 0, 1, 1], [], []>} : vector<8x128xf32>, vector<128x512xf32>, vector<8x512xf32> -> vector<8x512xf32>
    %10 = arith.addf %8, %9 : vector<8x512xf32>
    %11 = vector.extract_strided_slice %10 {offsets = [0, 0], sizes = [8, 384], strides = [1, 1]} : vector<8x512xf32> to vector<8x384xf32>
    %12 = arith.negf %11 : vector<8x384xf32>
    %13 = math.exp %12 : vector<8x384xf32>
    %cst_9 = arith.constant 1.000000e+00 : f32
    %14 = vector.broadcast %cst_9 : f32 to vector<8x384xf32>
    %15 = arith.addf %14, %13 : vector<8x384xf32>
    %16 = arith.divf %14, %15 : vector<8x384xf32>
    %17 = vector.extract_strided_slice %10 {offsets = [0, 384], sizes = [8, 128], strides = [1, 1]} : vector<8x512xf32> to vector<8x128xf32>
    %18 = math.tanh %17 : vector<8x128xf32>
    %19 = vector.extract_strided_slice %16 {offsets = [0, 0], sizes = [8, 128], strides = [1, 1]} : vector<8x384xf32> to vector<8x128xf32>
    %20 = vector.extract_strided_slice %16 {offsets = [0, 128], sizes = [8, 128], strides = [1, 1]} : vector<8x384xf32> to vector<8x128xf32>
    %21 = vector.extract_strided_slice %16 {offsets = [0, 256], sizes = [8, 128], strides = [1, 1]} : vector<8x384xf32> to vector<8x128xf32>
    %22 = arith.mulf %20, %5 : vector<8x128xf32>
    %23 = arith.mulf %19, %18 : vector<8x128xf32>
    %24 = arith.addf %22, %23 : vector<8x128xf32>
    %25 = math.tanh %24 : vector<8x128xf32>
    %26 = arith.mulf %21, %25 : vector<8x128xf32>
    %c1_i32 = arith.constant 1 : i32
    %27 = arith.index_cast %c1_i32 : i32 to index
    %c0_10 = arith.constant 0 : index
    %c0_11 = arith.constant 0 : index
    %28 = vector.load %arg2[%27, %c0_10, %c0_11] : memref<8x8x512xf32, #tpu.memory_space<vmem>>, vector<1x8x512xf32>
    %29 = vector.shape_cast %28 : vector<1x8x512xf32> to vector<8x512xf32>
    %cst_12 = arith.constant dense<0.000000e+00> : vector<8x512xf32>
    %30 = tpu.matmul %26, %3, %cst_12 {dimension_numbers = #tpu.dot_dimension_numbers<[1], [0], [0], [1], [0, 0, 1, 1], [], []>} : vector<8x128xf32>, vector<128x512xf32>, vector<8x512xf32> -> vector<8x512xf32>
    %31 = arith.addf %29, %30 : vector<8x512xf32>
    %32 = vector.extract_strided_slice %31 {offsets = [0, 0], sizes = [8, 384], strides = [1, 1]} : vector<8x512xf32> to vector<8x384xf32>
    %33 = arith.negf %32 : vector<8x384xf32>
    %34 = math.exp %33 : vector<8x384xf32>
    %cst_13 = arith.constant 1.000000e+00 : f32
    %35 = vector.broadcast %cst_13 : f32 to vector<8x384xf32>
    %36 = arith.addf %35, %34 : vector<8x384xf32>
    %37 = arith.divf %35, %36 : vector<8x384xf32>
    %38 = vector.extract_strided_slice %31 {offsets = [0, 384], sizes = [8, 128], strides = [1, 1]} : vector<8x512xf32> to vector<8x128xf32>
    %39 = math.tanh %38 : vector<8x128xf32>
    %40 = vector.extract_strided_slice %37 {offsets = [0, 0], sizes = [8, 128], strides = [1, 1]} : vector<8x384xf32> to vector<8x128xf32>
    %41 = vector.extract_strided_slice %37 {offsets = [0, 128], sizes = [8, 128], strides = [1, 1]} : vector<8x384xf32> to vector<8x128xf32>
    %42 = vector.extract_strided_slice %37 {offsets = [0, 256], sizes = [8, 128], strides = [1, 1]} : vector<8x384xf32> to vector<8x128xf32>
    %43 = arith.mulf %41, %24 : vector<8x128xf32>
    %44 = arith.mulf %40, %39 : vector<8x128xf32>
    %45 = arith.addf %43, %44 : vector<8x128xf32>
    %46 = math.tanh %45 : vector<8x128xf32>
    %47 = arith.mulf %42, %46 : vector<8x128xf32>
    %c2_i32 = arith.constant 2 : i32
    %48 = arith.index_cast %c2_i32 : i32 to index
    %c0_14 = arith.constant 0 : index
    %c0_15 = arith.constant 0 : index
    %49 = vector.load %arg2[%48, %c0_14, %c0_15] : memref<8x8x512xf32, #tpu.memory_space<vmem>>, vector<1x8x512xf32>
    %50 = vector.shape_cast %49 : vector<1x8x512xf32> to vector<8x512xf32>
    %cst_16 = arith.constant dense<0.000000e+00> : vector<8x512xf32>
    %51 = tpu.matmul %47, %3, %cst_16 {dimension_numbers = #tpu.dot_dimension_numbers<[1], [0], [0], [1], [0, 0, 1, 1], [], []>} : vector<8x128xf32>, vector<128x512xf32>, vector<8x512xf32> -> vector<8x512xf32>
    %52 = arith.addf %50, %51 : vector<8x512xf32>
    %53 = vector.extract_strided_slice %52 {offsets = [0, 0], sizes = [8, 384], strides = [1, 1]} : vector<8x512xf32> to vector<8x384xf32>
    %54 = arith.negf %53 : vector<8x384xf32>
    %55 = math.exp %54 : vector<8x384xf32>
    %cst_17 = arith.constant 1.000000e+00 : f32
    %56 = vector.broadcast %cst_17 : f32 to vector<8x384xf32>
    %57 = arith.addf %56, %55 : vector<8x384xf32>
    %58 = arith.divf %56, %57 : vector<8x384xf32>
    %59 = vector.extract_strided_slice %52 {offsets = [0, 384], sizes = [8, 128], strides = [1, 1]} : vector<8x512xf32> to vector<8x128xf32>
    %60 = math.tanh %59 : vector<8x128xf32>
    %61 = vector.extract_strided_slice %58 {offsets = [0, 0], sizes = [8, 128], strides = [1, 1]} : vector<8x384xf32> to vector<8x128xf32>
    %62 = vector.extract_strided_slice %58 {offsets = [0, 128], sizes = [8, 128], strides = [1, 1]} : vector<8x384xf32> to vector<8x128xf32>
    %63 = vector.extract_strided_slice %58 {offsets = [0, 256], sizes = [8, 128], strides = [1, 1]} : vector<8x384xf32> to vector<8x128xf32>
    %64 = arith.mulf %62, %45 : vector<8x128xf32>
    %65 = arith.mulf %61, %60 : vector<8x128xf32>
    %66 = arith.addf %64, %65 : vector<8x128xf32>
    %67 = math.tanh %66 : vector<8x128xf32>
    %68 = arith.mulf %63, %67 : vector<8x128xf32>
    %c3_i32 = arith.constant 3 : i32
    %69 = arith.index_cast %c3_i32 : i32 to index
    %c0_18 = arith.constant 0 : index
    %c0_19 = arith.constant 0 : index
    %70 = vector.load %arg2[%69, %c0_18, %c0_19] : memref<8x8x512xf32, #tpu.memory_space<vmem>>, vector<1x8x512xf32>
    %71 = vector.shape_cast %70 : vector<1x8x512xf32> to vector<8x512xf32>
    %cst_20 = arith.constant dense<0.000000e+00> : vector<8x512xf32>
    %72 = tpu.matmul %68, %3, %cst_20 {dimension_numbers = #tpu.dot_dimension_numbers<[1], [0], [0], [1], [0, 0, 1, 1], [], []>} : vector<8x128xf32>, vector<128x512xf32>, vector<8x512xf32> -> vector<8x512xf32>
    %73 = arith.addf %71, %72 : vector<8x512xf32>
    %74 = vector.extract_strided_slice %73 {offsets = [0, 0], sizes = [8, 384], strides = [1, 1]} : vector<8x512xf32> to vector<8x384xf32>
    %75 = arith.negf %74 : vector<8x384xf32>
    %76 = math.exp %75 : vector<8x384xf32>
    %cst_21 = arith.constant 1.000000e+00 : f32
    %77 = vector.broadcast %cst_21 : f32 to vector<8x384xf32>
    %78 = arith.addf %77, %76 : vector<8x384xf32>
    %79 = arith.divf %77, %78 : vector<8x384xf32>
    %80 = vector.extract_strided_slice %73 {offsets = [0, 384], sizes = [8, 128], strides = [1, 1]} : vector<8x512xf32> to vector<8x128xf32>
    %81 = math.tanh %80 : vector<8x128xf32>
    %82 = vector.extract_strided_slice %79 {offsets = [0, 0], sizes = [8, 128], strides = [1, 1]} : vector<8x384xf32> to vector<8x128xf32>
    %83 = vector.extract_strided_slice %79 {offsets = [0, 128], sizes = [8, 128], strides = [1, 1]} : vector<8x384xf32> to vector<8x128xf32>
    %84 = vector.extract_strided_slice %79 {offsets = [0, 256], sizes = [8, 128], strides = [1, 1]} : vector<8x384xf32> to vector<8x128xf32>
    %85 = arith.mulf %83, %66 : vector<8x128xf32>
    %86 = arith.mulf %82, %81 : vector<8x128xf32>
    %87 = arith.addf %85, %86 : vector<8x128xf32>
    %88 = math.tanh %87 : vector<8x128xf32>
    %89 = arith.mulf %84, %88 : vector<8x128xf32>
    %c4_i32 = arith.constant 4 : i32
    %90 = arith.index_cast %c4_i32 : i32 to index
    %c0_22 = arith.constant 0 : index
    %c0_23 = arith.constant 0 : index
    %91 = vector.load %arg2[%90, %c0_22, %c0_23] : memref<8x8x512xf32, #tpu.memory_space<vmem>>, vector<1x8x512xf32>
    %92 = vector.shape_cast %91 : vector<1x8x512xf32> to vector<8x512xf32>
    %cst_24 = arith.constant dense<0.000000e+00> : vector<8x512xf32>
    %93 = tpu.matmul %89, %3, %cst_24 {dimension_numbers = #tpu.dot_dimension_numbers<[1], [0], [0], [1], [0, 0, 1, 1], [], []>} : vector<8x128xf32>, vector<128x512xf32>, vector<8x512xf32> -> vector<8x512xf32>
    %94 = arith.addf %92, %93 : vector<8x512xf32>
    %95 = vector.extract_strided_slice %94 {offsets = [0, 0], sizes = [8, 384], strides = [1, 1]} : vector<8x512xf32> to vector<8x384xf32>
    %96 = arith.negf %95 : vector<8x384xf32>
    %97 = math.exp %96 : vector<8x384xf32>
    %cst_25 = arith.constant 1.000000e+00 : f32
    %98 = vector.broadcast %cst_25 : f32 to vector<8x384xf32>
    %99 = arith.addf %98, %97 : vector<8x384xf32>
    %100 = arith.divf %98, %99 : vector<8x384xf32>
    %101 = vector.extract_strided_slice %94 {offsets = [0, 384], sizes = [8, 128], strides = [1, 1]} : vector<8x512xf32> to vector<8x128xf32>
    %102 = math.tanh %101 : vector<8x128xf32>
    %103 = vector.extract_strided_slice %100 {offsets = [0, 0], sizes = [8, 128], strides = [1, 1]} : vector<8x384xf32> to vector<8x128xf32>
    %104 = vector.extract_strided_slice %100 {offsets = [0, 128], sizes = [8, 128], strides = [1, 1]} : vector<8x384xf32> to vector<8x128xf32>
    %105 = vector.extract_strided_slice %100 {offsets = [0, 256], sizes = [8, 128], strides = [1, 1]} : vector<8x384xf32> to vector<8x128xf32>
    %106 = arith.mulf %104, %87 : vector<8x128xf32>
    %107 = arith.mulf %103, %102 : vector<8x128xf32>
    %108 = arith.addf %106, %107 : vector<8x128xf32>
    %109 = math.tanh %108 : vector<8x128xf32>
    %110 = arith.mulf %105, %109 : vector<8x128xf32>
    %c5_i32 = arith.constant 5 : i32
    %111 = arith.index_cast %c5_i32 : i32 to index
    %c0_26 = arith.constant 0 : index
    %c0_27 = arith.constant 0 : index
    %112 = vector.load %arg2[%111, %c0_26, %c0_27] : memref<8x8x512xf32, #tpu.memory_space<vmem>>, vector<1x8x512xf32>
    %113 = vector.shape_cast %112 : vector<1x8x512xf32> to vector<8x512xf32>
    %cst_28 = arith.constant dense<0.000000e+00> : vector<8x512xf32>
    %114 = tpu.matmul %110, %3, %cst_28 {dimension_numbers = #tpu.dot_dimension_numbers<[1], [0], [0], [1], [0, 0, 1, 1], [], []>} : vector<8x128xf32>, vector<128x512xf32>, vector<8x512xf32> -> vector<8x512xf32>
    %115 = arith.addf %113, %114 : vector<8x512xf32>
    %116 = vector.extract_strided_slice %115 {offsets = [0, 0], sizes = [8, 384], strides = [1, 1]} : vector<8x512xf32> to vector<8x384xf32>
    %117 = arith.negf %116 : vector<8x384xf32>
    %118 = math.exp %117 : vector<8x384xf32>
    %cst_29 = arith.constant 1.000000e+00 : f32
    %119 = vector.broadcast %cst_29 : f32 to vector<8x384xf32>
    %120 = arith.addf %119, %118 : vector<8x384xf32>
    %121 = arith.divf %119, %120 : vector<8x384xf32>
    %122 = vector.extract_strided_slice %115 {offsets = [0, 384], sizes = [8, 128], strides = [1, 1]} : vector<8x512xf32> to vector<8x128xf32>
    %123 = math.tanh %122 : vector<8x128xf32>
    %124 = vector.extract_strided_slice %121 {offsets = [0, 0], sizes = [8, 128], strides = [1, 1]} : vector<8x384xf32> to vector<8x128xf32>
    %125 = vector.extract_strided_slice %121 {offsets = [0, 128], sizes = [8, 128], strides = [1, 1]} : vector<8x384xf32> to vector<8x128xf32>
    %126 = vector.extract_strided_slice %121 {offsets = [0, 256], sizes = [8, 128], strides = [1, 1]} : vector<8x384xf32> to vector<8x128xf32>
    %127 = arith.mulf %125, %108 : vector<8x128xf32>
    %128 = arith.mulf %124, %123 : vector<8x128xf32>
    %129 = arith.addf %127, %128 : vector<8x128xf32>
    %130 = math.tanh %129 : vector<8x128xf32>
    %131 = arith.mulf %126, %130 : vector<8x128xf32>
    %c6_i32 = arith.constant 6 : i32
    %132 = arith.index_cast %c6_i32 : i32 to index
    %c0_30 = arith.constant 0 : index
    %c0_31 = arith.constant 0 : index
    %133 = vector.load %arg2[%132, %c0_30, %c0_31] : memref<8x8x512xf32, #tpu.memory_space<vmem>>, vector<1x8x512xf32>
    %134 = vector.shape_cast %133 : vector<1x8x512xf32> to vector<8x512xf32>
    %cst_32 = arith.constant dense<0.000000e+00> : vector<8x512xf32>
    %135 = tpu.matmul %131, %3, %cst_32 {dimension_numbers = #tpu.dot_dimension_numbers<[1], [0], [0], [1], [0, 0, 1, 1], [], []>} : vector<8x128xf32>, vector<128x512xf32>, vector<8x512xf32> -> vector<8x512xf32>
    %136 = arith.addf %134, %135 : vector<8x512xf32>
    %137 = vector.extract_strided_slice %136 {offsets = [0, 0], sizes = [8, 384], strides = [1, 1]} : vector<8x512xf32> to vector<8x384xf32>
    %138 = arith.negf %137 : vector<8x384xf32>
    %139 = math.exp %138 : vector<8x384xf32>
    %cst_33 = arith.constant 1.000000e+00 : f32
    %140 = vector.broadcast %cst_33 : f32 to vector<8x384xf32>
    %141 = arith.addf %140, %139 : vector<8x384xf32>
    %142 = arith.divf %140, %141 : vector<8x384xf32>
    %143 = vector.extract_strided_slice %136 {offsets = [0, 384], sizes = [8, 128], strides = [1, 1]} : vector<8x512xf32> to vector<8x128xf32>
    %144 = math.tanh %143 : vector<8x128xf32>
    %145 = vector.extract_strided_slice %142 {offsets = [0, 0], sizes = [8, 128], strides = [1, 1]} : vector<8x384xf32> to vector<8x128xf32>
    %146 = vector.extract_strided_slice %142 {offsets = [0, 128], sizes = [8, 128], strides = [1, 1]} : vector<8x384xf32> to vector<8x128xf32>
    %147 = vector.extract_strided_slice %142 {offsets = [0, 256], sizes = [8, 128], strides = [1, 1]} : vector<8x384xf32> to vector<8x128xf32>
    %148 = arith.mulf %146, %129 : vector<8x128xf32>
    %149 = arith.mulf %145, %144 : vector<8x128xf32>
    %150 = arith.addf %148, %149 : vector<8x128xf32>
    %151 = math.tanh %150 : vector<8x128xf32>
    %152 = arith.mulf %147, %151 : vector<8x128xf32>
    %c7_i32 = arith.constant 7 : i32
    %153 = arith.index_cast %c7_i32 : i32 to index
    %c0_34 = arith.constant 0 : index
    %c0_35 = arith.constant 0 : index
    %154 = vector.load %arg2[%153, %c0_34, %c0_35] : memref<8x8x512xf32, #tpu.memory_space<vmem>>, vector<1x8x512xf32>
    %155 = vector.shape_cast %154 : vector<1x8x512xf32> to vector<8x512xf32>
    %cst_36 = arith.constant dense<0.000000e+00> : vector<8x512xf32>
    %156 = tpu.matmul %152, %3, %cst_36 {dimension_numbers = #tpu.dot_dimension_numbers<[1], [0], [0], [1], [0, 0, 1, 1], [], []>} : vector<8x128xf32>, vector<128x512xf32>, vector<8x512xf32> -> vector<8x512xf32>
    %157 = arith.addf %155, %156 : vector<8x512xf32>
    %158 = vector.extract_strided_slice %157 {offsets = [0, 0], sizes = [8, 384], strides = [1, 1]} : vector<8x512xf32> to vector<8x384xf32>
    %159 = arith.negf %158 : vector<8x384xf32>
    %160 = math.exp %159 : vector<8x384xf32>
    %cst_37 = arith.constant 1.000000e+00 : f32
    %161 = vector.broadcast %cst_37 : f32 to vector<8x384xf32>
    %162 = arith.addf %161, %160 : vector<8x384xf32>
    %163 = arith.divf %161, %162 : vector<8x384xf32>
    %164 = vector.extract_strided_slice %157 {offsets = [0, 384], sizes = [8, 128], strides = [1, 1]} : vector<8x512xf32> to vector<8x128xf32>
    %165 = math.tanh %164 : vector<8x128xf32>
    %166 = vector.extract_strided_slice %163 {offsets = [0, 0], sizes = [8, 128], strides = [1, 1]} : vector<8x384xf32> to vector<8x128xf32>
    %167 = vector.extract_strided_slice %163 {offsets = [0, 128], sizes = [8, 128], strides = [1, 1]} : vector<8x384xf32> to vector<8x128xf32>
    %168 = vector.extract_strided_slice %163 {offsets = [0, 256], sizes = [8, 128], strides = [1, 1]} : vector<8x384xf32> to vector<8x128xf32>
    %169 = arith.mulf %167, %150 : vector<8x128xf32>
    %170 = arith.mulf %166, %165 : vector<8x128xf32>
    %171 = arith.addf %169, %170 : vector<8x128xf32>
    %172 = math.tanh %171 : vector<8x128xf32>
    %173 = arith.mulf %168, %172 : vector<8x128xf32>
    %c8_i32 = arith.constant 8 : i32
    %c0_38 = arith.constant 0 : index
    %c0_39 = arith.constant 0 : index
    %174 = vector.load %arg5[%c0_38, %c0_39] : memref<8x128xf32, #tpu.memory_space<vmem>>, vector<8x128xf32>
    tpu.vector_store %arg5[%c0_38, %c0_39], %173 {strides = array<i32>} : memref<8x128xf32, #tpu.memory_space<vmem>>, vector<8x128xf32>,
    %c0_40 = arith.constant 0 : index
    %c0_41 = arith.constant 0 : index
    %175 = vector.load %arg6[%c0_40, %c0_41] : memref<8x128xf32, #tpu.memory_space<vmem>>, vector<8x128xf32>
    tpu.vector_store %arg6[%c0_40, %c0_41], %171 {strides = array<i32>} : memref<8x128xf32, #tpu.memory_space<vmem>>, vector<8x128xf32>,
    %c0_i32_42 = arith.constant 0 : i32
    %176 = arith.cmpi eq, %arg1, %c0_i32_42 : i32
    %177 = arith.extui %176 : i1 to i32
    %c0_i32_43 = arith.constant 0 : i32
    %178 = arith.cmpi ne, %177, %c0_i32_43 : i32
    scf.if %178 {
      %c0_44 = arith.constant 0 : index
      %c0_45 = arith.constant 0 : index
      %179 = vector.load %arg4[%c0_44, %c0_45] : memref<8x128xf32, #tpu.memory_space<vmem>>, vector<8x128xf32>
      tpu.vector_store %arg4[%c0_44, %c0_45], %173 {strides = array<i32>} : memref<8x128xf32, #tpu.memory_space<vmem>>, vector<8x128xf32>,
    } else {
    }
    return
  }
  func.func @transform_0(%arg0: i32, %arg1: i32) -> (i32, i32, i32) {
    %c0_i32 = arith.constant 0 : i32
    %c0_i32_0 = arith.constant 0 : i32
    return %arg1, %arg0, %c0_i32 : i32, i32, i32
  }
  func.func @transform_1(%arg0: i32, %arg1: i32) -> (i32, i32) {
    %c0_i32 = arith.constant 0 : i32
    %c0_i32_0 = arith.constant 0 : i32
    %c0_i32_1 = arith.constant 0 : i32
    return %c0_i32, %c0_i32_0 : i32, i32
  }
  func.func @transform_2(%arg0: i32, %arg1: i32) -> (i32, i32) {
    %c0_i32 = arith.constant 0 : i32
    %c0_i32_0 = arith.constant 0 : i32
    return %arg0, %c0_i32 : i32, i32
  }
}

</mosaic_0001>

<llo_original>
// kernel: tpu_custom_call.1
$region0: #{tpu_custom_call.1}
  #allocation0 [shape = 'u32[]', space=smem, size = 0x4, offset = 0x4, fixed_abs, tag = 'smem constant byte address 0x4 - core index']
  #allocation1 [shape = 'u32[144,128]{1,0:T(1,128)}', space=vmem, size = 0x12000, scoped, tag = 'internal scratch']
  #allocation2 [shape = 'f32[8,128]{1,0:T(8,128)}', space=vmem, size = 0x1000, scoped, tag = 'scratch operand']
  #allocation3 [shape = 'f32[8,128]{1,0:T(8,128)}', space=vmem, size = 0x1000, scoped, tag = 'scratch operand']
  %s0 = inlined_call_operand.hbm [shape: f32[8,8,512], index: 0, kind: input, shape index: {}]
  %s1 = inlined_call_operand.hbm [shape: f32[128,512], index: 1, kind: input, shape index: {}]
  %s2 = inlined_call_operand.hbm [shape: f32[8,128], index: 2, kind: output, shape index: {}]
  %s3 = sld [smem:[#allocation0]]
  $region34: #{tpu_custom_call.1} parent=0
    _
  %s5 = ssub.s32 1, %s3
  %s6 = scalar_select 0, %s5, %s3
  $region1: #{tpu_custom_call.1} parent=0
    #allocation4 [shape = 'u8[131072]{0}', space=vmem, size = 0x20000, scoped, tag = 'input window, operand 0, single buffered']
    #allocation5 [shape = 's32[1]{0}', space=sflag, size = 0x4, scoped, tag = 'scoped memory for tpu_custom_call.1']
    #allocation6 [shape = 's32[1]{0}', space=sflag, size = 0x4, scoped, tag = 'scoped memory for tpu_custom_call.1']
    #allocation7 [shape = 'u8[262144]{0}', space=vmem, size = 0x40000, scoped, tag = 'input window, operand 1, single buffered']
    #allocation8 [shape = 's32[1]{0}', space=sflag, size = 0x4, scoped, tag = 'scoped memory for tpu_custom_call.1']
    #allocation9 [shape = 'u8[4096]{0}', space=vmem, size = 0x1000, scoped, tag = 'output window, operand 0, single buffered']
    %7 = vsyncpa [#allocation5], 0
    %8 = vsyncpa [#allocation8], 0
    %9 = vsyncpa [#allocation6], 0
    // Predicated region
    $region2: #{tpu_custom_call.1} parent=1 // pred_check
      _
    $region3: #{tpu_custom_call.1} parent=1 // pred_check_branch
      %11 = sbr.rel (0) target = $region5
    $region4: #{tpu_custom_call.1} parent=1 // pred_region
      %s13 = ssub.s32 4096, 4096
      %14 = vsyncadd [#allocation5], %s13
      %s15 = sshll.u32 [#allocation4], 4
      %s16 = int_to_ptr.vmem [resolvable:$true] %s15
      %21 = dma.hbm_to_vmem [thread:$0]  %s0, 4096, %s16, [#allocation5], 512, 512, 32
    $region5: #{tpu_custom_call.1} parent=1 // pred_fallthru
      _
    // Predicated region
    $region6: #{tpu_custom_call.1} parent=1 // pred_check
      _
    $region7: #{tpu_custom_call.1} parent=1 // pred_check_branch
      %23 = sbr.rel (0) target = $region9
    $region8: #{tpu_custom_call.1} parent=1 // pred_region
      %s25 = ssub.s32 8192, 8192
      %26 = vsyncadd [#allocation8], %s25
      %s27 = sshll.u32 [#allocation7], 4
      %s28 = int_to_ptr.vmem [resolvable:$true] %s27
      %33 = dma.hbm_to_vmem [thread:$0]  %s1, 8192, %s28, [#allocation8], 512, 512, 32
    $region9: #{tpu_custom_call.1} parent=1 // pred_fallthru
      _
    // Predicated region
    $region10: #{tpu_custom_call.1} parent=1 // pred_check
      _
    $region11: #{tpu_custom_call.1} parent=1 // pred_check_branch
      %35 = sbr.rel (0) target = $region13
    $region12: #{tpu_custom_call.1} parent=1 // pred_region
      %36 = dma.done [#allocation5], 4096
    $region13: #{tpu_custom_call.1} parent=1 // pred_fallthru
      _
    // Predicated region
    $region14: #{tpu_custom_call.1} parent=1 // pred_check
      _
    $region15: #{tpu_custom_call.1} parent=1 // pred_check_branch
      %38 = sbr.rel (0) target = $region17
    $region16: #{tpu_custom_call.1} parent=1 // pred_region
      %39 = dma.done [#allocation8], 8192
    $region17: #{tpu_custom_call.1} parent=1 // pred_fallthru
      _
    %p40 = scmp.eq.s32.totalorder 0, 0
    // Predicated region
    $region18: #{tpu_custom_call.1} parent=1 // pred_check
      %p41 = pneg %p40
    $region19: #{tpu_custom_call.1} parent=1 // pred_check_branch
      %43 = sbr.rel (%p41) target = $region21
    $region20: #{tpu_custom_call.1} parent=1 // pred_region
      %44 = vst [vmem:[#allocation2] sm:$0xff] 0.0
      %45 = vst [vmem:[#allocation3] sm:$0xff] 0.0
    $region21: #{tpu_custom_call.1} parent=1 // pred_fallthru
      _
    %v46 = vld [vmem:[#allocation7] sm:$0xff]
    %v47 = vld [vmem:[#allocation7 + $0x8] sm:$0xff]
    %v48 = vld [vmem:[#allocation7 + $0x10] sm:$0xff]
    %v49 = vld [vmem:[#allocation7 + $0x18] sm:$0xff]
    %v50 = vld [vmem:[#allocation7 + $0x20] sm:$0xff]
    %v51 = vld [vmem:[#allocation7 + $0x28] sm:$0xff]
    %v52 = vld [vmem:[#allocation7 + $0x30] sm:$0xff]
    %v53 = vld [vmem:[#allocation7 + $0x38] sm:$0xff]
    %v54 = vld [vmem:[#allocation7 + $0x40] sm:$0xff]
    %v55 = vld [vmem:[#allocation7 + $0x48] sm:$0xff]
    %v56 = vld [vmem:[#allocation7 + $0x50] sm:$0xff]
    %v57 = vld [vmem:[#allocation7 + $0x58] sm:$0xff]
    %v58 = vld [vmem:[#allocation7 + $0x60] sm:$0xff]
    %v59 = vld [vmem:[#allocation7 + $0x68] sm:$0xff]
    %v60 = vld [vmem:[#allocation7 + $0x70] sm:$0xff]
    %v61 = vld [vmem:[#allocation7 + $0x78] sm:$0xff]
    %v62 = vld [vmem:[#allocation7 + $0x80] sm:$0xff]
    %v63 = vld [vmem:[#allocation7 + $0x88] sm:$0xff]
    %v64 = vld [vmem:[#allocation7 + $0x90] sm:$0xff]
    %v65 = vld [vmem:[#allocation7 + $0x98] sm:$0xff]
    %v66 = vld [vmem:[#allocation7 + $0xa0] sm:$0xff]
    %v67 = vld [vmem:[#allocation7 + $0xa8] sm:$0xff]
    %v68 = vld [vmem:[#allocation7 + $0xb0] sm:$0xff]
    %v69 = vld [vmem:[#allocation7 + $0xb8] sm:$0xff]
    %v70 = vld [vmem:[#allocation7 + $0xc0] sm:$0xff]
    %v71 = vld [vmem:[#allocation7 + $0xc8] sm:$0xff]
    %v72 = vld [vmem:[#allocation7 + $0xd0] sm:$0xff]
    %v73 = vld [vmem:[#allocation7 + $0xd8] sm:$0xff]
    %v74 = vld [vmem:[#allocation7 + $0xe0] sm:$0xff]
    %v75 = vld [vmem:[#allocation7 + $0xe8] sm:$0xff]
    %v76 = vld [vmem:[#allocation7 + $0xf0] sm:$0xff]
    %v77 = vld [vmem:[#allocation7 + $0xf8] sm:$0xff]
    %v78 = vld [vmem:[#allocation7 + $0x100] sm:$0xff]
    %v79 = vld [vmem:[#allocation7 + $0x108] sm:$0xff]
    %v80 = vld [vmem:[#allocation7 + $0x110] sm:$0xff]
    %v81 = vld [vmem:[#allocation7 + $0x118] sm:$0xff]
    %v82 = vld [vmem:[#allocation7 + $0x120] sm:$0xff]
    %v83 = vld [vmem:[#allocation7 + $0x128] sm:$0xff]
    %v84 = vld [vmem:[#allocation7 + $0x130] sm:$0xff]
    %v85 = vld [vmem:[#allocation7 + $0x138] sm:$0xff]
    %v86 = vld [vmem:[#allocation7 + $0x140] sm:$0xff]
    %v87 = vld [vmem:[#allocation7 + $0x148] sm:$0xff]
    %v88 = vld [vmem:[#allocation7 + $0x150] sm:$0xff]
    %v89 = vld [vmem:[#allocation7 + $0x158] sm:$0xff]
    %v90 = vld [vmem:[#allocation7 + $0x160] sm:$0xff]
    %v91 = vld [vmem:[#allocation7 + $0x168] sm:$0xff]
    %v92 = vld [vmem:[#allocation7 + $0x170] sm:$0xff]
    %v93 = vld [vmem:[#allocation7 + $0x178] sm:$0xff]
    %v94 = vld [vmem:[#allocation7 + $0x180] sm:$0xff]
    %v95 = vld [vmem:[#allocation7 + $0x188] sm:$0xff]
    %v96 = vld [vmem:[#allocation7 + $0x190] sm:$0xff]
    %v97 = vld [vmem:[#allocation7 + $0x198] sm:$0xff]
    %v98 = vld [vmem:[#allocation7 + $0x1a0] sm:$0xff]
    %v99 = vld [vmem:[#allocation7 + $0x1a8] sm:$0xff]
    %v100 = vld [vmem:[#allocation7 + $0x1b0] sm:$0xff]
    %v101 = vld [vmem:[#allocation7 + $0x1b8] sm:$0xff]
    %v102 = vld [vmem:[#allocation7 + $0x1c0] sm:$0xff]
    %v103 = vld [vmem:[#allocation7 + $0x1c8] sm:$0xff]
    %v104 = vld [vmem:[#allocation7 + $0x1d0] sm:$0xff]
    %v105 = vld [vmem:[#allocation7 + $0x1d8] sm:$0xff]
    %v106 = vld [vmem:[#allocation7 + $0x1e0] sm:$0xff]
    %v107 = vld [vmem:[#allocation7 + $0x1e8] sm:$0xff]
    %v108 = vld [vmem:[#allocation7 + $0x1f0] sm:$0xff]
    %v109 = vld [vmem:[#allocation7 + $0x1f8] sm:$0xff]
    %v110 = vld [vmem:[#allocation2] sm:$0xff]
    %v111 = vld [vmem:[#allocation3] sm:$0xff]
    %v112 = vld [vmem:[#allocation4] sm:$0xff]
    %v113 = vld [vmem:[#allocation4 + $0x8] sm:$0xff]
    %v114 = vld [vmem:[#allocation4 + $0x10] sm:$0xff]
    %v115 = vld [vmem:[#allocation4 + $0x18] sm:$0xff]
    %116 = vmatprep.subr.mxu0 %v47
    %117 = vmatpush1.msra.mxu0 %v46
    %118 = vmatprep.subr.mxu0 %v51
    %119 = vmatpush1.msra.mxu0 %v50
    %120 = vmatprep.subr.mxu0 %v55
    %121 = vmatpush1.msra.mxu0 %v54
    %122 = vmatprep.subr.mxu0 %v59
    %123 = vmatpush1.msra.mxu0 %v58
    %124 = vmatprep.subr.mxu0 %v63
    %125 = vmatpush1.msra.mxu0 %v62
    %126 = vmatprep.subr.mxu0 %v67
    %127 = vmatpush1.msra.mxu0 %v66
    %128 = vmatprep.subr.mxu0 %v71
    %129 = vmatpush1.msra.mxu0 %v70
    %130 = vmatprep.subr.mxu0 %v75
    %131 = vmatpush1.msra.mxu0 %v74
    %132 = vmatprep.subr.mxu0 %v79
    %133 = vmatpush1.msra.mxu0 %v78
    %134 = vmatprep.subr.mxu0 %v83
    %135 = vmatpush1.msra.mxu0 %v82
    %136 = vmatprep.subr.mxu0 %v87
    %137 = vmatpush1.msra.mxu0 %v86
    %138 = vmatprep.subr.mxu0 %v91
    %139 = vmatpush1.msra.mxu0 %v90
    %140 = vmatprep.subr.mxu0 %v95
    %141 = vmatpush1.msra.mxu0 %v94
    %142 = vmatprep.subr.mxu0 %v99
    %143 = vmatpush1.msra.mxu0 %v98
    %144 = vmatprep.subr.mxu0 %v103
    %145 = vmatpush1.msra.mxu0 %v102
    %146 = vmatprep.subr.mxu0 %v107
    %147 = vmatpush1.msra.mxu0 %v106
    %148 = vmatprep.subr.mxu0 0.0
    %149 = vmatpush1.msra.mxu0 0.0
    %150 = vmatprep.subr.mxu0 0.0
    %151 = vmatpush1.msra.mxu0 0.0
    %152 = vmatprep.subr.mxu0 0.0
    %153 = vmatpush1.msra.mxu0 0.0
    %154 = vmatprep.subr.mxu0 0.0
    %155 = vmatpush1.msra.mxu0 0.0
    %156 = vmatprep.subr.mxu0 0.0
    %157 = vmatpush1.msra.mxu0 0.0
    %158 = vmatprep.subr.mxu0 0.0
    %159 = vmatpush1.msra.mxu0 0.0
    %160 = vmatprep.subr.mxu0 0.0
    %161 = vmatpush1.msra.mxu0 0.0
    %162 = vmatprep.subr.mxu0 0.0
    %163 = vmatpush1.msra.mxu0 0.0
    %164 = vmatprep.subr.mxu0 0.0
    %165 = vmatpush1.msra.mxu0 0.0
    %166 = vmatprep.subr.mxu0 0.0
    %167 = vmatpush1.msra.mxu0 0.0
    %168 = vmatprep.subr.mxu0 0.0
    %169 = vmatpush1.msra.mxu0 0.0
    %170 = vmatprep.subr.mxu0 0.0
    %171 = vmatpush1.msra.mxu0 0.0
    %172 = vmatprep.subr.mxu0 0.0
    %173 = vmatpush1.msra.mxu0 0.0
    %174 = vmatprep.subr.mxu0 0.0
    %175 = vmatpush1.msra.mxu0 0.0
    %176 = vmatprep.subr.mxu0 0.0
    %177 = vmatpush1.msra.mxu0 0.0
    %178 = vmatprep.subr.mxu0 0.0
    %179 = vmatpush1.msra.mxu0 0.0
    %180 = vmatprep.mubr.f32.mxu0 0.0
    %181 = vmatmul.mubr.f32.gmra.mrb[0].mxu0 %v110
    %v182 = vpop.f32.mrb[0].mxu0
    %v183 = vadd.f32 0.0, %v182
    %v184 = vpop.f32.mrb[0].mxu0
    %v185 = vadd.f32 0.0, %v184
    %186 = vdwg.mxu0
    %187 = vmatprep.subr.mxu0 %v49
    %188 = vmatpush1.msra.mxu0 %v48
    %189 = vmatprep.subr.mxu0 %v53
    %190 = vmatpush1.msra.mxu0 %v52
    %191 = vmatprep.subr.mxu0 %v57
    %192 = vmatpush1.msra.mxu0 %v56
    %193 = vmatprep.subr.mxu0 %v61
    %194 = vmatpush1.msra.mxu0 %v60
    %195 = vmatprep.subr.mxu0 %v65
    %196 = vmatpush1.msra.mxu0 %v64
    %197 = vmatprep.subr.mxu0 %v69
    %198 = vmatpush1.msra.mxu0 %v68
    %199 = vmatprep.subr.mxu0 %v73
    %200 = vmatpush1.msra.mxu0 %v72
    %201 = vmatprep.subr.mxu0 %v77
    %202 = vmatpush1.msra.mxu0 %v76
    %203 = vmatprep.subr.mxu0 %v81
    %204 = vmatpush1.msra.mxu0 %v80
    %205 = vmatprep.subr.mxu0 %v85
    %206 = vmatpush1.msra.mxu0 %v84
    %207 = vmatprep.subr.mxu0 %v89
    %208 = vmatpush1.msra.mxu0 %v88
    %209 = vmatprep.subr.mxu0 %v93
    %210 = vmatpush1.msra.mxu0 %v92
    %211 = vmatprep.subr.mxu0 %v97
    %212 = vmatpush1.msra.mxu0 %v96
    %213 = vmatprep.subr.mxu0 %v101
    %214 = vmatpush1.msra.mxu0 %v100
    %215 = vmatprep.subr.mxu0 %v105
    %216 = vmatpush1.msra.mxu0 %v104
    %217 = vmatprep.subr.mxu0 %v109
    %218 = vmatpush1.msra.mxu0 %v108
    %219 = vmatprep.subr.mxu0 0.0
    %220 = vmatpush1.msra.mxu0 0.0
    %221 = vmatprep.subr.mxu0 0.0
    %222 = vmatpush1.msra.mxu0 0.0
    %223 = vmatprep.subr.mxu0 0.0
    %224 = vmatpush1.msra.mxu0 0.0
    %225 = vmatprep.subr.mxu0 0.0
    %226 = vmatpush1.msra.mxu0 0.0
    %227 = vmatprep.subr.mxu0 0.0
    %228 = vmatpush1.msra.mxu0 0.0
    %229 = vmatprep.subr.mxu0 0.0
    %230 = vmatpush1.msra.mxu0 0.0
    %231 = vmatprep.subr.mxu0 0.0
    %232 = vmatpush1.msra.mxu0 0.0
    %233 = vmatprep.subr.mxu0 0.0
    %234 = vmatpush1.msra.mxu0 0.0
    %235 = vmatprep.subr.mxu0 0.0
    %236 = vmatpush1.msra.mxu0 0.0
    %237 = vmatprep.subr.mxu0 0.0
    %238 = vmatpush1.msra.mxu0 0.0
    %239 = vmatprep.subr.mxu0 0.0
    %240 = vmatpush1.msra.mxu0 0.0
    %241 = vmatprep.subr.mxu0 0.0
    %242 = vmatpush1.msra.mxu0 0.0
    %243 = vmatprep.subr.mxu0 0.0
    %244 = vmatpush1.msra.mxu0 0.0
    %245 = vmatprep.subr.mxu0 0.0
    %246 = vmatpush1.msra.mxu0 0.0
    %247 = vmatprep.subr.mxu0 0.0
    %248 = vmatpush1.msra.mxu0 0.0
    %249 = vmatprep.subr.mxu0 0.0
    %250 = vmatpush1.msra.mxu0 0.0
    %251 = vmatprep.mubr.f32.mxu0 0.0
    %252 = vmatmul.mubr.f32.gmra.mrb[0].mxu0 %v110
    %v253 = vpop.f32.mrb[0].mxu0
    %v254 = vadd.f32 0.0, %v253
    %v255 = vpop.f32.mrb[0].mxu0
    %v256 = vadd.f32 0.0, %v255
    %257 = vdwg.mxu0
    %v258 = vadd.f32 %v112, %v183
    %v259 = vadd.f32 %v113, %v185
    %v260 = vadd.f32 %v114, %v254
    %v261 = vadd.f32 %v115, %v256
    %v262 = vxor.u32 %v258, 2147483648
    %v263 = vxor.u32 %v259, 2147483648
    %v264 = vxor.u32 %v260, 2147483648
    %v265 = vmul.f32 %v262, 1.442695
    %v266 = vpow.pop %v265
    %v267 = vmul.f32 %v263, 1.442695
    %v268 = vpow.pop %v267
    %v269 = vmul.f32 %v264, 1.442695
    %v270 = vpow.pop %v269
    %v271 = vadd.f32 %v266, 1.0
    %v272 = vadd.f32 %v268, 1.0
    %v273 = vadd.f32 %v270, 1.0
    %v274 = vrcp.pop %v271
    %v275 = vmul.f32 1.0, %v274
    %v276 = vrcp.pop %v272
    %v277 = vmul.f32 1.0, %v276
    %v278 = vrcp.pop %v273
    %v279 = vmul.f32 1.0, %v278
    %v280 = vtanh.pop %v261
    %v281 = vmul.f32 %v277, %v111
    %v282 = vmul.f32 %v275, %v280
    %v283 = vadd.f32 %v281, %v282
    %v284 = vtanh.pop %v283
    %v285 = vmul.f32 %v279, %v284
    %s286 = scalar_lea.vmem [#allocation4], 32
    %v287 = vld [vmem:[%s286] sm:$0xff]
    %v288 = vld [vmem:[%s286 + $0x8] sm:$0xff]
    %v289 = vld [vmem:[%s286 + $0x10] sm:$0xff]
    %v290 = vld [vmem:[%s286 + $0x18] sm:$0xff]
    %291 = vmatprep.subr.mxu0 %v47
    %292 = vmatpush1.msra.mxu0 %v46
    %293 = vmatprep.subr.mxu0 %v51
    %294 = vmatpush1.msra.mxu0 %v50
    %295 = vmatprep.subr.mxu0 %v55
    %296 = vmatpush1.msra.mxu0 %v54
    %297 = vmatprep.subr.mxu0 %v59
    %298 = vmatpush1.msra.mxu0 %v58
    %299 = vmatprep.subr.mxu0 %v63
    %300 = vmatpush1.msra.mxu0 %v62
    %301 = vmatprep.subr.mxu0 %v67
    %302 = vmatpush1.msra.mxu0 %v66
    %303 = vmatprep.subr.mxu0 %v71
    %304 = vmatpush1.msra.mxu0 %v70
    %305 = vmatprep.subr.mxu0 %v75
    %306 = vmatpush1.msra.mxu0 %v74
    %307 = vmatprep.subr.mxu0 %v79
    %308 = vmatpush1.msra.mxu0 %v78
    %309 = vmatprep.subr.mxu0 %v83
    %310 = vmatpush1.msra.mxu0 %v82
    %311 = vmatprep.subr.mxu0 %v87
    %312 = vmatpush1.msra.mxu0 %v86
    %313 = vmatprep.subr.mxu0 %v91
    %314 = vmatpush1.msra.mxu0 %v90
    %315 = vmatprep.subr.mxu0 %v95
    %316 = vmatpush1.msra.mxu0 %v94
    %317 = vmatprep.subr.mxu0 %v99
    %318 = vmatpush1.msra.mxu0 %v98
    %319 = vmatprep.subr.mxu0 %v103
    %320 = vmatpush1.msra.mxu0 %v102
    %321 = vmatprep.subr.mxu0 %v107
    %322 = vmatpush1.msra.mxu0 %v106
    %323 = vmatprep.subr.mxu0 0.0
    %324 = vmatpush1.msra.mxu0 0.0
    %325 = vmatprep.subr.mxu0 0.0
    %326 = vmatpush1.msra.mxu0 0.0
    %327 = vmatprep.subr.mxu0 0.0
    %328 = vmatpush1.msra.mxu0 0.0
    %329 = vmatprep.subr.mxu0 0.0
    %330 = vmatpush1.msra.mxu0 0.0
    %331 = vmatprep.subr.mxu0 0.0
    %332 = vmatpush1.msra.mxu0 0.0
    %333 = vmatprep.subr.mxu0 0.0
    %334 = vmatpush1.msra.mxu0 0.0
    %335 = vmatprep.subr.mxu0 0.0
    %336 = vmatpush1.msra.mxu0 0.0
    %337 = vmatprep.subr.mxu0 0.0
    %338 = vmatpush1.msra.mxu0 0.0
    %339 = vmatprep.subr.mxu0 0.0
    %340 = vmatpush1.msra.mxu0 0.0
    %341 = vmatprep.subr.mxu0 0.0
    %342 = vmatpush1.msra.mxu0 0.0
    %343 = vmatprep.subr.mxu0 0.0
    %344 = vmatpush1.msra.mxu0 0.0
    %345 = vmatprep.subr.mxu0 0.0
    %346 = vmatpush1.msra.mxu0 0.0
    %347 = vmatprep.subr.mxu0 0.0
    %348 = vmatpush1.msra.mxu0 0.0
    %349 = vmatprep.subr.mxu0 0.0
    %350 = vmatpush1.msra.mxu0 0.0
    %351 = vmatprep.subr.mxu0 0.0
    %352 = vmatpush1.msra.mxu0 0.0
    %353 = vmatprep.subr.mxu0 0.0
    %354 = vmatpush1.msra.mxu0 0.0
    %355 = vmatprep.mubr.f32.mxu0 0.0
    %356 = vmatmul.mubr.f32.gmra.mrb[0].mxu0 %v285
    %v357 = vpop.f32.mrb[0].mxu0
    %v358 = vadd.f32 0.0, %v357
    %v359 = vpop.f32.mrb[0].mxu0
    %v360 = vadd.f32 0.0, %v359
    %361 = vdwg.mxu0
    %362 = vmatprep.subr.mxu0 %v49
    %363 = vmatpush1.msra.mxu0 %v48
    %364 = vmatprep.subr.mxu0 %v53
    %365 = vmatpush1.msra.mxu0 %v52
    %366 = vmatprep.subr.mxu0 %v57
    %367 = vmatpush1.msra.mxu0 %v56
    %368 = vmatprep.subr.mxu0 %v61
    %369 = vmatpush1.msra.mxu0 %v60
    %370 = vmatprep.subr.mxu0 %v65
    %371 = vmatpush1.msra.mxu0 %v64
    %372 = vmatprep.subr.mxu0 %v69
    %373 = vmatpush1.msra.mxu0 %v68
    %374 = vmatprep.subr.mxu0 %v73
    %375 = vmatpush1.msra.mxu0 %v72
    %376 = vmatprep.subr.mxu0 %v77
    %377 = vmatpush1.msra.mxu0 %v76
    %378 = vmatprep.subr.mxu0 %v81
    %379 = vmatpush1.msra.mxu0 %v80
    %380 = vmatprep.subr.mxu0 %v85
    %381 = vmatpush1.msra.mxu0 %v84
    %382 = vmatprep.subr.mxu0 %v89
    %383 = vmatpush1.msra.mxu0 %v88
    %384 = vmatprep.subr.mxu0 %v93
    %385 = vmatpush1.msra.mxu0 %v92
    %386 = vmatprep.subr.mxu0 %v97
    %387 = vmatpush1.msra.mxu0 %v96
    %388 = vmatprep.subr.mxu0 %v101
    %389 = vmatpush1.msra.mxu0 %v100
    %390 = vmatprep.subr.mxu0 %v105
    %391 = vmatpush1.msra.mxu0 %v104
    %392 = vmatprep.subr.mxu0 %v109
    %393 = vmatpush1.msra.mxu0 %v108
    %394 = vmatprep.subr.mxu0 0.0
    %395 = vmatpush1.msra.mxu0 0.0
    %396 = vmatprep.subr.mxu0 0.0
    %397 = vmatpush1.msra.mxu0 0.0
    %398 = vmatprep.subr.mxu0 0.0
    %399 = vmatpush1.msra.mxu0 0.0
    %400 = vmatprep.subr.mxu0 0.0
    %401 = vmatpush1.msra.mxu0 0.0
    %402 = vmatprep.subr.mxu0 0.0
    %403 = vmatpush1.msra.mxu0 0.0
    %404 = vmatprep.subr.mxu0 0.0
    %405 = vmatpush1.msra.mxu0 0.0
    %406 = vmatprep.subr.mxu0 0.0
    %407 = vmatpush1.msra.mxu0 0.0
    %408 = vmatprep.subr.mxu0 0.0
    %409 = vmatpush1.msra.mxu0 0.0
    %410 = vmatprep.subr.mxu0 0.0
    %411 = vmatpush1.msra.mxu0 0.0
    %412 = vmatprep.subr.mxu0 0.0
    %413 = vmatpush1.msra.mxu0 0.0
    %414 = vmatprep.subr.mxu0 0.0
    %415 = vmatpush1.msra.mxu0 0.0
    %416 = vmatprep.subr.mxu0 0.0
    %417 = vmatpush1.msra.mxu0 0.0
    %418 = vmatprep.subr.mxu0 0.0
    %419 = vmatpush1.msra.mxu0 0.0
    %420 = vmatprep.subr.mxu0 0.0
    %421 = vmatpush1.msra.mxu0 0.0
    %422 = vmatprep.subr.mxu0 0.0
    %423 = vmatpush1.msra.mxu0 0.0
    %424 = vmatprep.subr.mxu0 0.0
    %425 = vmatpush1.msra.mxu0 0.0
    %426 = vmatprep.mubr.f32.mxu0 0.0
    %427 = vmatmul.mubr.f32.gmra.mrb[0].mxu0 %v285
    %v428 = vpop.f32.mrb[0].mxu0
    %v429 = vadd.f32 0.0, %v428
    %v430 = vpop.f32.mrb[0].mxu0
    %v431 = vadd.f32 0.0, %v430
    %432 = vdwg.mxu0
    %v433 = vadd.f32 %v287, %v358
    %v434 = vadd.f32 %v288, %v360
    %v435 = vadd.f32 %v289, %v429
    %v436 = vadd.f32 %v290, %v431
    %v437 = vxor.u32 %v433, 2147483648
    %v438 = vxor.u32 %v434, 2147483648
    %v439 = vxor.u32 %v435, 2147483648
    %v440 = vmul.f32 %v437, 1.442695
    %v441 = vpow.pop %v440
    %v442 = vmul.f32 %v438, 1.442695
    %v443 = vpow.pop %v442
    %v444 = vmul.f32 %v439, 1.442695
    %v445 = vpow.pop %v444
    %v446 = vadd.f32 %v441, 1.0
    %v447 = vadd.f32 %v443, 1.0
    %v448 = vadd.f32 %v445, 1.0
    %v449 = vrcp.pop %v446
    %v450 = vmul.f32 1.0, %v449
    %v451 = vrcp.pop %v447
    %v452 = vmul.f32 1.0, %v451
    %v453 = vrcp.pop %v448
    %v454 = vmul.f32 1.0, %v453
    %v455 = vtanh.pop %v436
    %v456 = vmul.f32 %v452, %v283
    %v457 = vmul.f32 %v450, %v455
    %v458 = vadd.f32 %v456, %v457
    %v459 = vtanh.pop %v458
    %v460 = vmul.f32 %v454, %v459
    %s461 = scalar_lea.vmem [#allocation4], 64
    %v462 = vld [vmem:[%s461] sm:$0xff]
    %v463 = vld [vmem:[%s461 + $0x8] sm:$0xff]
    %v464 = vld [vmem:[%s461 + $0x10] sm:$0xff]
    %v465 = vld [vmem:[%s461 + $0x18] sm:$0xff]
    %466 = vmatprep.subr.mxu0 %v47
    %467 = vmatpush1.msra.mxu0 %v46
    %468 = vmatprep.subr.mxu0 %v51
    %469 = vmatpush1.msra.mxu0 %v50
    %470 = vmatprep.subr.mxu0 %v55
    %471 = vmatpush1.msra.mxu0 %v54
    %472 = vmatprep.subr.mxu0 %v59
    %473 = vmatpush1.msra.mxu0 %v58
    %474 = vmatprep.subr.mxu0 %v63
    %475 = vmatpush1.msra.mxu0 %v62
    %476 = vmatprep.subr.mxu0 %v67
    %477 = vmatpush1.msra.mxu0 %v66
    %478 = vmatprep.subr.mxu0 %v71
    %479 = vmatpush1.msra.mxu0 %v70
    %480 = vmatprep.subr.mxu0 %v75
    %481 = vmatpush1.msra.mxu0 %v74
    %482 = vmatprep.subr.mxu0 %v79
    %483 = vmatpush1.msra.mxu0 %v78
    %484 = vmatprep.subr.mxu0 %v83
    %485 = vmatpush1.msra.mxu0 %v82
    %486 = vmatprep.subr.mxu0 %v87
    %487 = vmatpush1.msra.mxu0 %v86
    %488 = vmatprep.subr.mxu0 %v91
    %489 = vmatpush1.msra.mxu0 %v90
    %490 = vmatprep.subr.mxu0 %v95
    %491 = vmatpush1.msra.mxu0 %v94
    %492 = vmatprep.subr.mxu0 %v99
    %493 = vmatpush1.msra.mxu0 %v98
    %494 = vmatprep.subr.mxu0 %v103
    %495 = vmatpush1.msra.mxu0 %v102
    %496 = vmatprep.subr.mxu0 %v107
    %497 = vmatpush1.msra.mxu0 %v106
    %498 = vmatprep.subr.mxu0 0.0
    %499 = vmatpush1.msra.mxu0 0.0
    %500 = vmatprep.subr.mxu0 0.0
    %501 = vmatpush1.msra.mxu0 0.0
    %502 = vmatprep.subr.mxu0 0.0
    %503 = vmatpush1.msra.mxu0 0.0
    %504 = vmatprep.subr.mxu0 0.0
    %505 = vmatpush1.msra.mxu0 0.0
    %506 = vmatprep.subr.mxu0 0.0
    %507 = vmatpush1.msra.mxu0 0.0
    %508 = vmatprep.subr.mxu0 0.0
    %509 = vmatpush1.msra.mxu0 0.0
    %510 = vmatprep.subr.mxu0 0.0
    %511 = vmatpush1.msra.mxu0 0.0
    %512 = vmatprep.subr.mxu0 0.0
    %513 = vmatpush1.msra.mxu0 0.0
    %514 = vmatprep.subr.mxu0 0.0
    %515 = vmatpush1.msra.mxu0 0.0
    %516 = vmatprep.subr.mxu0 0.0
    %517 = vmatpush1.msra.mxu0 0.0
    %518 = vmatprep.subr.mxu0 0.0
    %519 = vmatpush1.msra.mxu0 0.0
    %520 = vmatprep.subr.mxu0 0.0
    %521 = vmatpush1.msra.mxu0 0.0
    %522 = vmatprep.subr.mxu0 0.0
    %523 = vmatpush1.msra.mxu0 0.0
    %524 = vmatprep.subr.mxu0 0.0
    %525 = vmatpush1.msra.mxu0 0.0
    %526 = vmatprep.subr.mxu0 0.0
    %527 = vmatpush1.msra.mxu0 0.0
    %528 = vmatprep.subr.mxu0 0.0
    %529 = vmatpush1.msra.mxu0 0.0
    %530 = vmatprep.mubr.f32.mxu0 0.0
    %531 = vmatmul.mubr.f32.gmra.mrb[0].mxu0 %v460
    %v532 = vpop.f32.mrb[0].mxu0
    %v533 = vadd.f32 0.0, %v532
    %v534 = vpop.f32.mrb[0].mxu0
    %v535 = vadd.f32 0.0, %v534
    %536 = vdwg.mxu0
    %537 = vmatprep.subr.mxu0 %v49
    %538 = vmatpush1.msra.mxu0 %v48
    %539 = vmatprep.subr.mxu0 %v53
    %540 = vmatpush1.msra.mxu0 %v52
    %541 = vmatprep.subr.mxu0 %v57
    %542 = vmatpush1.msra.mxu0 %v56
    %543 = vmatprep.subr.mxu0 %v61
    %544 = vmatpush1.msra.mxu0 %v60
    %545 = vmatprep.subr.mxu0 %v65
    %546 = vmatpush1.msra.mxu0 %v64
    %547 = vmatprep.subr.mxu0 %v69
    %548 = vmatpush1.msra.mxu0 %v68
    %549 = vmatprep.subr.mxu0 %v73
    %550 = vmatpush1.msra.mxu0 %v72
    %551 = vmatprep.subr.mxu0 %v77
    %552 = vmatpush1.msra.mxu0 %v76
    %553 = vmatprep.subr.mxu0 %v81
    %554 = vmatpush1.msra.mxu0 %v80
    %555 = vmatprep.subr.mxu0 %v85
    %556 = vmatpush1.msra.mxu0 %v84
    %557 = vmatprep.subr.mxu0 %v89
    %558 = vmatpush1.msra.mxu0 %v88
    %559 = vmatprep.subr.mxu0 %v93
    %560 = vmatpush1.msra.mxu0 %v92
    %561 = vmatprep.subr.mxu0 %v97
    %562 = vmatpush1.msra.mxu0 %v96
    %563 = vmatprep.subr.mxu0 %v101
    %564 = vmatpush1.msra.mxu0 %v100
    %565 = vmatprep.subr.mxu0 %v105
    %566 = vmatpush1.msra.mxu0 %v104
    %567 = vmatprep.subr.mxu0 %v109
    %568 = vmatpush1.msra.mxu0 %v108
    %569 = vmatprep.subr.mxu0 0.0
    %570 = vmatpush1.msra.mxu0 0.0
    %571 = vmatprep.subr.mxu0 0.0
    %572 = vmatpush1.msra.mxu0 0.0
    %573 = vmatprep.subr.mxu0 0.0
    %574 = vmatpush1.msra.mxu0 0.0
    %575 = vmatprep.subr.mxu0 0.0
    %576 = vmatpush1.msra.mxu0 0.0
    %577 = vmatprep.subr.mxu0 0.0
    %578 = vmatpush1.msra.mxu0 0.0
    %579 = vmatprep.subr.mxu0 0.0
    %580 = vmatpush1.msra.mxu0 0.0
    %581 = vmatprep.subr.mxu0 0.0
    %582 = vmatpush1.msra.mxu0 0.0
    %583 = vmatprep.subr.mxu0 0.0
    %584 = vmatpush1.msra.mxu0 0.0
    %585 = vmatprep.subr.mxu0 0.0
    %586 = vmatpush1.msra.mxu0 0.0
    %587 = vmatprep.subr.mxu0 0.0
    %588 = vmatpush1.msra.mxu0 0.0
    %589 = vmatprep.subr.mxu0 0.0
    %590 = vmatpush1.msra.mxu0 0.0
    %591 = vmatprep.subr.mxu0 0.0
    %592 = vmatpush1.msra.mxu0 0.0
    %593 = vmatprep.subr.mxu0 0.0
    %594 = vmatpush1.msra.mxu0 0.0
    %595 = vmatprep.subr.mxu0 0.0
    %596 = vmatpush1.msra.mxu0 0.0
    %597 = vmatprep.subr.mxu0 0.0
    %598 = vmatpush1.msra.mxu0 0.0
    %599 = vmatprep.subr.mxu0 0.0
    %600 = vmatpush1.msra.mxu0 0.0
    %601 = vmatprep.mubr.f32.mxu0 0.0
    %602 = vmatmul.mubr.f32.gmra.mrb[0].mxu0 %v460
    %v603 = vpop.f32.mrb[0].mxu0
    %v604 = vadd.f32 0.0, %v603
    %v605 = vpop.f32.mrb[0].mxu0
    %v606 = vadd.f32 0.0, %v605
    %607 = vdwg.mxu0
    %v608 = vadd.f32 %v462, %v533
    %v609 = vadd.f32 %v463, %v535
    %v610 = vadd.f32 %v464, %v604
    %v611 = vadd.f32 %v465, %v606
    %v612 = vxor.u32 %v608, 2147483648
    %v613 = vxor.u32 %v609, 2147483648
    %v614 = vxor.u32 %v610, 2147483648
    %v615 = vmul.f32 %v612, 1.442695
    %v616 = vpow.pop %v615
    %v617 = vmul.f32 %v613, 1.442695
    %v618 = vpow.pop %v617
    %v619 = vmul.f32 %v614, 1.442695
    %v620 = vpow.pop %v619
    %v621 = vadd.f32 %v616, 1.0
    %v622 = vadd.f32 %v618, 1.0
    %v623 = vadd.f32 %v620, 1.0
    %v624 = vrcp.pop %v621
    %v625 = vmul.f32 1.0, %v624
    %v626 = vrcp.pop %v622
    %v627 = vmul.f32 1.0, %v626
    %v628 = vrcp.pop %v623
    %v629 = vmul.f32 1.0, %v628
    %v630 = vtanh.pop %v611
    %v631 = vmul.f32 %v627, %v458
    %v632 = vmul.f32 %v625, %v630
    %v633 = vadd.f32 %v631, %v632
    %v634 = vtanh.pop %v633
    %v635 = vmul.f32 %v629, %v634
    %s636 = scalar_lea.vmem [#allocation4], 96
    %v637 = vld [vmem:[%s636] sm:$0xff]
    %v638 = vld [vmem:[%s636 + $0x8] sm:$0xff]
    %v639 = vld [vmem:[%s636 + $0x10] sm:$0xff]
    %v640 = vld [vmem:[%s636 + $0x18] sm:$0xff]
    %641 = vmatprep.subr.mxu0 %v47
    %642 = vmatpush1.msra.mxu0 %v46
    %643 = vmatprep.subr.mxu0 %v51
    %644 = vmatpush1.msra.mxu0 %v50
    %645 = vmatprep.subr.mxu0 %v55
    %646 = vmatpush1.msra.mxu0 %v54
    %647 = vmatprep.subr.mxu0 %v59
    %648 = vmatpush1.msra.mxu0 %v58
    %649 = vmatprep.subr.mxu0 %v63
    %650 = vmatpush1.msra.mxu0 %v62
    %651 = vmatprep.subr.mxu0 %v67
    %652 = vmatpush1.msra.mxu0 %v66
    %653 = vmatprep.subr.mxu0 %v71
    %654 = vmatpush1.msra.mxu0 %v70
    %655 = vmatprep.subr.mxu0 %v75
    %656 = vmatpush1.msra.mxu0 %v74
    %657 = vmatprep.subr.mxu0 %v79
    %658 = vmatpush1.msra.mxu0 %v78
    %659 = vmatprep.subr.mxu0 %v83
    %660 = vmatpush1.msra.mxu0 %v82
    %661 = vmatprep.subr.mxu0 %v87
    %662 = vmatpush1.msra.mxu0 %v86
    %663 = vmatprep.subr.mxu0 %v91
    %664 = vmatpush1.msra.mxu0 %v90
    %665 = vmatprep.subr.mxu0 %v95
    %666 = vmatpush1.msra.mxu0 %v94
    %667 = vmatprep.subr.mxu0 %v99
    %668 = vmatpush1.msra.mxu0 %v98
    %669 = vmatprep.subr.mxu0 %v103
    %670 = vmatpush1.msra.mxu0 %v102
    %671 = vmatprep.subr.mxu0 %v107
    %672 = vmatpush1.msra.mxu0 %v106
    %673 = vmatprep.subr.mxu0 0.0
    %674 = vmatpush1.msra.mxu0 0.0
    %675 = vmatprep.subr.mxu0 0.0
    %676 = vmatpush1.msra.mxu0 0.0
    %677 = vmatprep.subr.mxu0 0.0
    %678 = vmatpush1.msra.mxu0 0.0
    %679 = vmatprep.subr.mxu0 0.0
    %680 = vmatpush1.msra.mxu0 0.0
    %681 = vmatprep.subr.mxu0 0.0
    %682 = vmatpush1.msra.mxu0 0.0
    %683 = vmatprep.subr.mxu0 0.0
    %684 = vmatpush1.msra.mxu0 0.0
    %685 = vmatprep.subr.mxu0 0.0
    %686 = vmatpush1.msra.mxu0 0.0
    %687 = vmatprep.subr.mxu0 0.0
    %688 = vmatpush1.msra.mxu0 0.0
    %689 = vmatprep.subr.mxu0 0.0
    %690 = vmatpush1.msra.mxu0 0.0
    %691 = vmatprep.subr.mxu0 0.0
    %692 = vmatpush1.msra.mxu0 0.0
    %693 = vmatprep.subr.mxu0 0.0
    %694 = vmatpush1.msra.mxu0 0.0
    %695 = vmatprep.subr.mxu0 0.0
    %696 = vmatpush1.msra.mxu0 0.0
    %697 = vmatprep.subr.mxu0 0.0
    %698 = vmatpush1.msra.mxu0 0.0
    %699 = vmatprep.subr.mxu0 0.0
    %700 = vmatpush1.msra.mxu0 0.0
    %701 = vmatprep.subr.mxu0 0.0
    %702 = vmatpush1.msra.mxu0 0.0
    %703 = vmatprep.subr.mxu0 0.0
    %704 = vmatpush1.msra.mxu0 0.0
    %705 = vmatprep.mubr.f32.mxu0 0.0
    %706 = vmatmul.mubr.f32.gmra.mrb[0].mxu0 %v635
    %v707 = vpop.f32.mrb[0].mxu0
    %v708 = vadd.f32 0.0, %v707
    %v709 = vpop.f32.mrb[0].mxu0
    %v710 = vadd.f32 0.0, %v709
    %711 = vdwg.mxu0
    %712 = vmatprep.subr.mxu0 %v49
    %713 = vmatpush1.msra.mxu0 %v48
    %714 = vmatprep.subr.mxu0 %v53
    %715 = vmatpush1.msra.mxu0 %v52
    %716 = vmatprep.subr.mxu0 %v57
    %717 = vmatpush1.msra.mxu0 %v56
    %718 = vmatprep.subr.mxu0 %v61
    %719 = vmatpush1.msra.mxu0 %v60
    %720 = vmatprep.subr.mxu0 %v65
    %721 = vmatpush1.msra.mxu0 %v64
    %722 = vmatprep.subr.mxu0 %v69
    %723 = vmatpush1.msra.mxu0 %v68
    %724 = vmatprep.subr.mxu0 %v73
    %725 = vmatpush1.msra.mxu0 %v72
    %726 = vmatprep.subr.mxu0 %v77
    %727 = vmatpush1.msra.mxu0 %v76
    %728 = vmatprep.subr.mxu0 %v81
    %729 = vmatpush1.msra.mxu0 %v80
    %730 = vmatprep.subr.mxu0 %v85
    %731 = vmatpush1.msra.mxu0 %v84
    %732 = vmatprep.subr.mxu0 %v89
    %733 = vmatpush1.msra.mxu0 %v88
    %734 = vmatprep.subr.mxu0 %v93
    %735 = vmatpush1.msra.mxu0 %v92
    %736 = vmatprep.subr.mxu0 %v97
    %737 = vmatpush1.msra.mxu0 %v96
    %738 = vmatprep.subr.mxu0 %v101
    %739 = vmatpush1.msra.mxu0 %v100
    %740 = vmatprep.subr.mxu0 %v105
    %741 = vmatpush1.msra.mxu0 %v104
    %742 = vmatprep.subr.mxu0 %v109
    %743 = vmatpush1.msra.mxu0 %v108
    %744 = vmatprep.subr.mxu0 0.0
    %745 = vmatpush1.msra.mxu0 0.0
    %746 = vmatprep.subr.mxu0 0.0
    %747 = vmatpush1.msra.mxu0 0.0
    %748 = vmatprep.subr.mxu0 0.0
    %749 = vmatpush1.msra.mxu0 0.0
    %750 = vmatprep.subr.mxu0 0.0
    %751 = vmatpush1.msra.mxu0 0.0
    %752 = vmatprep.subr.mxu0 0.0
    %753 = vmatpush1.msra.mxu0 0.0
    %754 = vmatprep.subr.mxu0 0.0
    %755 = vmatpush1.msra.mxu0 0.0
    %756 = vmatprep.subr.mxu0 0.0
    %757 = vmatpush1.msra.mxu0 0.0
    %758 = vmatprep.subr.mxu0 0.0
    %759 = vmatpush1.msra.mxu0 0.0
    %760 = vmatprep.subr.mxu0 0.0
    %761 = vmatpush1.msra.mxu0 0.0
    %762 = vmatprep.subr.mxu0 0.0
    %763 = vmatpush1.msra.mxu0 0.0
    %764 = vmatprep.subr.mxu0 0.0
    %765 = vmatpush1.msra.mxu0 0.0
    %766 = vmatprep.subr.mxu0 0.0
    %767 = vmatpush1.msra.mxu0 0.0
    %768 = vmatprep.subr.mxu0 0.0
    %769 = vmatpush1.msra.mxu0 0.0
    %770 = vmatprep.subr.mxu0 0.0
    %771 = vmatpush1.msra.mxu0 0.0
    %772 = vmatprep.subr.mxu0 0.0
    %773 = vmatpush1.msra.mxu0 0.0
    %774 = vmatprep.subr.mxu0 0.0
    %775 = vmatpush1.msra.mxu0 0.0
    %776 = vmatprep.mubr.f32.mxu0 0.0
    %777 = vmatmul.mubr.f32.gmra.mrb[0].mxu0 %v635
    %v778 = vpop.f32.mrb[0].mxu0
    %v779 = vadd.f32 0.0, %v778
    %v780 = vpop.f32.mrb[0].mxu0
    %v781 = vadd.f32 0.0, %v780
    %782 = vdwg.mxu0
    %v783 = vadd.f32 %v637, %v708
    %v784 = vadd.f32 %v638, %v710
    %v785 = vadd.f32 %v639, %v779
    %v786 = vadd.f32 %v640, %v781
    %v787 = vxor.u32 %v783, 2147483648
    %v788 = vxor.u32 %v784, 2147483648
    %v789 = vxor.u32 %v785, 2147483648
    %v790 = vmul.f32 %v787, 1.442695
    %v791 = vpow.pop %v790
    %v792 = vmul.f32 %v788, 1.442695
    %v793 = vpow.pop %v792
    %v794 = vmul.f32 %v789, 1.442695
    %v795 = vpow.pop %v794
    %v796 = vadd.f32 %v791, 1.0
    %v797 = vadd.f32 %v793, 1.0
    %v798 = vadd.f32 %v795, 1.0
    %v799 = vrcp.pop %v796
    %v800 = vmul.f32 1.0, %v799
    %v801 = vrcp.pop %v797
    %v802 = vmul.f32 1.0, %v801
    %v803 = vrcp.pop %v798
    %v804 = vmul.f32 1.0, %v803
    %v805 = vtanh.pop %v786
    %v806 = vmul.f32 %v802, %v633
    %v807 = vmul.f32 %v800, %v805
    %v808 = vadd.f32 %v806, %v807
    %v809 = vtanh.pop %v808
    %v810 = vmul.f32 %v804, %v809
    %s811 = scalar_lea.vmem [#allocation4], 128
    %v812 = vld [vmem:[%s811] sm:$0xff]
    %v813 = vld [vmem:[%s811 + $0x8] sm:$0xff]
    %v814 = vld [vmem:[%s811 + $0x10] sm:$0xff]
    %v815 = vld [vmem:[%s811 + $0x18] sm:$0xff]
    %816 = vmatprep.subr.mxu0 %v47
    %817 = vmatpush1.msra.mxu0 %v46
    %818 = vmatprep.subr.mxu0 %v51
    %819 = vmatpush1.msra.mxu0 %v50
    %820 = vmatprep.subr.mxu0 %v55
    %821 = vmatpush1.msra.mxu0 %v54
    %822 = vmatprep.subr.mxu0 %v59
    %823 = vmatpush1.msra.mxu0 %v58
    %824 = vmatprep.subr.mxu0 %v63
    %825 = vmatpush1.msra.mxu0 %v62
    %826 = vmatprep.subr.mxu0 %v67
    %827 = vmatpush1.msra.mxu0 %v66
    %828 = vmatprep.subr.mxu0 %v71
    %829 = vmatpush1.msra.mxu0 %v70
    %830 = vmatprep.subr.mxu0 %v75
    %831 = vmatpush1.msra.mxu0 %v74
    %832 = vmatprep.subr.mxu0 %v79
    %833 = vmatpush1.msra.mxu0 %v78
    %834 = vmatprep.subr.mxu0 %v83
    %835 = vmatpush1.msra.mxu0 %v82
    %836 = vmatprep.subr.mxu0 %v87
    %837 = vmatpush1.msra.mxu0 %v86
    %838 = vmatprep.subr.mxu0 %v91
    %839 = vmatpush1.msra.mxu0 %v90
    %840 = vmatprep.subr.mxu0 %v95
    %841 = vmatpush1.msra.mxu0 %v94
    %842 = vmatprep.subr.mxu0 %v99
    %843 = vmatpush1.msra.mxu0 %v98
    %844 = vmatprep.subr.mxu0 %v103
    %845 = vmatpush1.msra.mxu0 %v102
    %846 = vmatprep.subr.mxu0 %v107
    %847 = vmatpush1.msra.mxu0 %v106
    %848 = vmatprep.subr.mxu0 0.0
    %849 = vmatpush1.msra.mxu0 0.0
    %850 = vmatprep.subr.mxu0 0.0
    %851 = vmatpush1.msra.mxu0 0.0
    %852 = vmatprep.subr.mxu0 0.0
    %853 = vmatpush1.msra.mxu0 0.0
    %854 = vmatprep.subr.mxu0 0.0
    %855 = vmatpush1.msra.mxu0 0.0
    %856 = vmatprep.subr.mxu0 0.0
    %857 = vmatpush1.msra.mxu0 0.0
    %858 = vmatprep.subr.mxu0 0.0
    %859 = vmatpush1.msra.mxu0 0.0
    %860 = vmatprep.subr.mxu0 0.0
    %861 = vmatpush1.msra.mxu0 0.0
    %862 = vmatprep.subr.mxu0 0.0
    %863 = vmatpush1.msra.mxu0 0.0
    %864 = vmatprep.subr.mxu0 0.0
    %865 = vmatpush1.msra.mxu0 0.0
    %866 = vmatprep.subr.mxu0 0.0
    %867 = vmatpush1.msra.mxu0 0.0
    %868 = vmatprep.subr.mxu0 0.0
    %869 = vmatpush1.msra.mxu0 0.0
    %870 = vmatprep.subr.mxu0 0.0
    %871 = vmatpush1.msra.mxu0 0.0
    %872 = vmatprep.subr.mxu0 0.0
    %873 = vmatpush1.msra.mxu0 0.0
    %874 = vmatprep.subr.mxu0 0.0
    %875 = vmatpush1.msra.mxu0 0.0
    %876 = vmatprep.subr.mxu0 0.0
    %877 = vmatpush1.msra.mxu0 0.0
    %878 = vmatprep.subr.mxu0 0.0
    %879 = vmatpush1.msra.mxu0 0.0
    %880 = vmatprep.mubr.f32.mxu0 0.0
    %881 = vmatmul.mubr.f32.gmra.mrb[0].mxu0 %v810
    %v882 = vpop.f32.mrb[0].mxu0
    %v883 = vadd.f32 0.0, %v882
    %v884 = vpop.f32.mrb[0].mxu0
    %v885 = vadd.f32 0.0, %v884
    %886 = vdwg.mxu0
    %887 = vmatprep.subr.mxu0 %v49
    %888 = vmatpush1.msra.mxu0 %v48
    %889 = vmatprep.subr.mxu0 %v53
    %890 = vmatpush1.msra.mxu0 %v52
    %891 = vmatprep.subr.mxu0 %v57
    %892 = vmatpush1.msra.mxu0 %v56
    %893 = vmatprep.subr.mxu0 %v61
    %894 = vmatpush1.msra.mxu0 %v60
    %895 = vmatprep.subr.mxu0 %v65
    %896 = vmatpush1.msra.mxu0 %v64
    %897 = vmatprep.subr.mxu0 %v69
    %898 = vmatpush1.msra.mxu0 %v68
    %899 = vmatprep.subr.mxu0 %v73
    %900 = vmatpush1.msra.mxu0 %v72
    %901 = vmatprep.subr.mxu0 %v77
    %902 = vmatpush1.msra.mxu0 %v76
    %903 = vmatprep.subr.mxu0 %v81
    %904 = vmatpush1.msra.mxu0 %v80
    %905 = vmatprep.subr.mxu0 %v85
    %906 = vmatpush1.msra.mxu0 %v84
    %907 = vmatprep.subr.mxu0 %v89
    %908 = vmatpush1.msra.mxu0 %v88
    %909 = vmatprep.subr.mxu0 %v93
    %910 = vmatpush1.msra.mxu0 %v92
    %911 = vmatprep.subr.mxu0 %v97
    %912 = vmatpush1.msra.mxu0 %v96
    %913 = vmatprep.subr.mxu0 %v101
    %914 = vmatpush1.msra.mxu0 %v100
    %915 = vmatprep.subr.mxu0 %v105
    %916 = vmatpush1.msra.mxu0 %v104
    %917 = vmatprep.subr.mxu0 %v109
    %918 = vmatpush1.msra.mxu0 %v108
    %919 = vmatprep.subr.mxu0 0.0
    %920 = vmatpush1.msra.mxu0 0.0
    %921 = vmatprep.subr.mxu0 0.0
    %922 = vmatpush1.msra.mxu0 0.0
    %923 = vmatprep.subr.mxu0 0.0
    %924 = vmatpush1.msra.mxu0 0.0
    %925 = vmatprep.subr.mxu0 0.0
    %926 = vmatpush1.msra.mxu0 0.0
    %927 = vmatprep.subr.mxu0 0.0
    %928 = vmatpush1.msra.mxu0 0.0
    %929 = vmatprep.subr.mxu0 0.0
    %930 = vmatpush1.msra.mxu0 0.0
    %931 = vmatprep.subr.mxu0 0.0
    %932 = vmatpush1.msra.mxu0 0.0
    %933 = vmatprep.subr.mxu0 0.0
    %934 = vmatpush1.msra.mxu0 0.0
    %935 = vmatprep.subr.mxu0 0.0
    %936 = vmatpush1.msra.mxu0 0.0
    %937 = vmatprep.subr.mxu0 0.0
    %938 = vmatpush1.msra.mxu0 0.0
    %939 = vmatprep.subr.mxu0 0.0
    %940 = vmatpush1.msra.mxu0 0.0
    %941 = vmatprep.subr.mxu0 0.0
    %942 = vmatpush1.msra.mxu0 0.0
    %943 = vmatprep.subr.mxu0 0.0
    %944 = vmatpush1.msra.mxu0 0.0
    %945 = vmatprep.subr.mxu0 0.0
    %946 = vmatpush1.msra.mxu0 0.0
    %947 = vmatprep.subr.mxu0 0.0
    %948 = vmatpush1.msra.mxu0 0.0
    %949 = vmatprep.subr.mxu0 0.0
    %950 = vmatpush1.msra.mxu0 0.0
    %951 = vmatprep.mubr.f32.mxu0 0.0
    %952 = vmatmul.mubr.f32.gmra.mrb[0].mxu0 %v810
    %v953 = vpop.f32.mrb[0].mxu0
    %v954 = vadd.f32 0.0, %v953
    %v955 = vpop.f32.mrb[0].mxu0
    %v956 = vadd.f32 0.0, %v955
    %957 = vdwg.mxu0
    %v958 = vadd.f32 %v812, %v883
    %v959 = vadd.f32 %v813, %v885
    %v960 = vadd.f32 %v814, %v954
    %v961 = vadd.f32 %v815, %v956
    %v962 = vxor.u32 %v958, 2147483648
    %v963 = vxor.u32 %v959, 2147483648
    %v964 = vxor.u32 %v960, 2147483648
    %v965 = vmul.f32 %v962, 1.442695
    %v966 = vpow.pop %v965
    %v967 = vmul.f32 %v963, 1.442695
    %v968 = vpow.pop %v967
    %v969 = vmul.f32 %v964, 1.442695
    %v970 = vpow.pop %v969
    %v971 = vadd.f32 %v966, 1.0
    %v972 = vadd.f32 %v968, 1.0
    %v973 = vadd.f32 %v970, 1.0
    %v974 = vrcp.pop %v971
    %v975 = vmul.f32 1.0, %v974
    %v976 = vrcp.pop %v972
    %v977 = vmul.f32 1.0, %v976
    %v978 = vrcp.pop %v973
    %v979 = vmul.f32 1.0, %v978
    %v980 = vtanh.pop %v961
    %v981 = vmul.f32 %v977, %v808
    %v982 = vmul.f32 %v975, %v980
    %v983 = vadd.f32 %v981, %v982
    %v984 = vtanh.pop %v983
    %v985 = vmul.f32 %v979, %v984
    %s986 = scalar_lea.vmem [#allocation4], 160
    %v987 = vld [vmem:[%s986] sm:$0xff]
    %v988 = vld [vmem:[%s986 + $0x8] sm:$0xff]
    %v989 = vld [vmem:[%s986 + $0x10] sm:$0xff]
    %v990 = vld [vmem:[%s986 + $0x18] sm:$0xff]
    %991 = vmatprep.subr.mxu0 %v47
    %992 = vmatpush1.msra.mxu0 %v46
    %993 = vmatprep.subr.mxu0 %v51
    %994 = vmatpush1.msra.mxu0 %v50
    %995 = vmatprep.subr.mxu0 %v55
    %996 = vmatpush1.msra.mxu0 %v54
    %997 = vmatprep.subr.mxu0 %v59
    %998 = vmatpush1.msra.mxu0 %v58
    %999 = vmatprep.subr.mxu0 %v63
    %1000 = vmatpush1.msra.mxu0 %v62
    %1001 = vmatprep.subr.mxu0 %v67
    %1002 = vmatpush1.msra.mxu0 %v66
    %1003 = vmatprep.subr.mxu0 %v71
    %1004 = vmatpush1.msra.mxu0 %v70
    %1005 = vmatprep.subr.mxu0 %v75
    %1006 = vmatpush1.msra.mxu0 %v74
    %1007 = vmatprep.subr.mxu0 %v79
    %1008 = vmatpush1.msra.mxu0 %v78
    %1009 = vmatprep.subr.mxu0 %v83
    %1010 = vmatpush1.msra.mxu0 %v82
    %1011 = vmatprep.subr.mxu0 %v87
    %1012 = vmatpush1.msra.mxu0 %v86
    %1013 = vmatprep.subr.mxu0 %v91
    %1014 = vmatpush1.msra.mxu0 %v90
    %1015 = vmatprep.subr.mxu0 %v95
    %1016 = vmatpush1.msra.mxu0 %v94
    %1017 = vmatprep.subr.mxu0 %v99
    %1018 = vmatpush1.msra.mxu0 %v98
    %1019 = vmatprep.subr.mxu0 %v103
    %1020 = vmatpush1.msra.mxu0 %v102
    %1021 = vmatprep.subr.mxu0 %v107
    %1022 = vmatpush1.msra.mxu0 %v106
    %1023 = vmatprep.subr.mxu0 0.0
    %1024 = vmatpush1.msra.mxu0 0.0
    %1025 = vmatprep.subr.mxu0 0.0
    %1026 = vmatpush1.msra.mxu0 0.0
    %1027 = vmatprep.subr.mxu0 0.0
    %1028 = vmatpush1.msra.mxu0 0.0
    %1029 = vmatprep.subr.mxu0 0.0
    %1030 = vmatpush1.msra.mxu0 0.0
    %1031 = vmatprep.subr.mxu0 0.0
    %1032 = vmatpush1.msra.mxu0 0.0
    %1033 = vmatprep.subr.mxu0 0.0
    %1034 = vmatpush1.msra.mxu0 0.0
    %1035 = vmatprep.subr.mxu0 0.0
    %1036 = vmatpush1.msra.mxu0 0.0
    %1037 = vmatprep.subr.mxu0 0.0
    %1038 = vmatpush1.msra.mxu0 0.0
    %1039 = vmatprep.subr.mxu0 0.0
    %1040 = vmatpush1.msra.mxu0 0.0
    %1041 = vmatprep.subr.mxu0 0.0
    %1042 = vmatpush1.msra.mxu0 0.0
    %1043 = vmatprep.subr.mxu0 0.0
    %1044 = vmatpush1.msra.mxu0 0.0
    %1045 = vmatprep.subr.mxu0 0.0
    %1046 = vmatpush1.msra.mxu0 0.0
    %1047 = vmatprep.subr.mxu0 0.0
    %1048 = vmatpush1.msra.mxu0 0.0
    %1049 = vmatprep.subr.mxu0 0.0
    %1050 = vmatpush1.msra.mxu0 0.0
    %1051 = vmatprep.subr.mxu0 0.0
    %1052 = vmatpush1.msra.mxu0 0.0
    %1053 = vmatprep.subr.mxu0 0.0
    %1054 = vmatpush1.msra.mxu0 0.0
    %1055 = vmatprep.mubr.f32.mxu0 0.0
    %1056 = vmatmul.mubr.f32.gmra.mrb[0].mxu0 %v985
    %v1057 = vpop.f32.mrb[0].mxu0
    %v1058 = vadd.f32 0.0, %v1057
    %v1059 = vpop.f32.mrb[0].mxu0
    %v1060 = vadd.f32 0.0, %v1059
    %1061 = vdwg.mxu0
    %1062 = vmatprep.subr.mxu0 %v49
    %1063 = vmatpush1.msra.mxu0 %v48
    %1064 = vmatprep.subr.mxu0 %v53
    %1065 = vmatpush1.msra.mxu0 %v52
    %1066 = vmatprep.subr.mxu0 %v57
    %1067 = vmatpush1.msra.mxu0 %v56
    %1068 = vmatprep.subr.mxu0 %v61
    %1069 = vmatpush1.msra.mxu0 %v60
    %1070 = vmatprep.subr.mxu0 %v65
    %1071 = vmatpush1.msra.mxu0 %v64
    %1072 = vmatprep.subr.mxu0 %v69
    %1073 = vmatpush1.msra.mxu0 %v68
    %1074 = vmatprep.subr.mxu0 %v73
    %1075 = vmatpush1.msra.mxu0 %v72
    %1076 = vmatprep.subr.mxu0 %v77
    %1077 = vmatpush1.msra.mxu0 %v76
    %1078 = vmatprep.subr.mxu0 %v81
    %1079 = vmatpush1.msra.mxu0 %v80
    %1080 = vmatprep.subr.mxu0 %v85
    %1081 = vmatpush1.msra.mxu0 %v84
    %1082 = vmatprep.subr.mxu0 %v89
    %1083 = vmatpush1.msra.mxu0 %v88
    %1084 = vmatprep.subr.mxu0 %v93
    %1085 = vmatpush1.msra.mxu0 %v92
    %1086 = vmatprep.subr.mxu0 %v97
    %1087 = vmatpush1.msra.mxu0 %v96
    %1088 = vmatprep.subr.mxu0 %v101
    %1089 = vmatpush1.msra.mxu0 %v100
    %1090 = vmatprep.subr.mxu0 %v105
    %1091 = vmatpush1.msra.mxu0 %v104
    %1092 = vmatprep.subr.mxu0 %v109
    %1093 = vmatpush1.msra.mxu0 %v108
    %1094 = vmatprep.subr.mxu0 0.0
    %1095 = vmatpush1.msra.mxu0 0.0
    %1096 = vmatprep.subr.mxu0 0.0
    %1097 = vmatpush1.msra.mxu0 0.0
    %1098 = vmatprep.subr.mxu0 0.0
    %1099 = vmatpush1.msra.mxu0 0.0
    %1100 = vmatprep.subr.mxu0 0.0
    %1101 = vmatpush1.msra.mxu0 0.0
    %1102 = vmatprep.subr.mxu0 0.0
    %1103 = vmatpush1.msra.mxu0 0.0
    %1104 = vmatprep.subr.mxu0 0.0
    %1105 = vmatpush1.msra.mxu0 0.0
    %1106 = vmatprep.subr.mxu0 0.0
    %1107 = vmatpush1.msra.mxu0 0.0
    %1108 = vmatprep.subr.mxu0 0.0
    %1109 = vmatpush1.msra.mxu0 0.0
    %1110 = vmatprep.subr.mxu0 0.0
    %1111 = vmatpush1.msra.mxu0 0.0
    %1112 = vmatprep.subr.mxu0 0.0
    %1113 = vmatpush1.msra.mxu0 0.0
    %1114 = vmatprep.subr.mxu0 0.0
    %1115 = vmatpush1.msra.mxu0 0.0
    %1116 = vmatprep.subr.mxu0 0.0
    %1117 = vmatpush1.msra.mxu0 0.0
    %1118 = vmatprep.subr.mxu0 0.0
    %1119 = vmatpush1.msra.mxu0 0.0
    %1120 = vmatprep.subr.mxu0 0.0
    %1121 = vmatpush1.msra.mxu0 0.0
    %1122 = vmatprep.subr.mxu0 0.0
    %1123 = vmatpush1.msra.mxu0 0.0
    %1124 = vmatprep.subr.mxu0 0.0
    %1125 = vmatpush1.msra.mxu0 0.0
    %1126 = vmatprep.mubr.f32.mxu0 0.0
    %1127 = vmatmul.mubr.f32.gmra.mrb[0].mxu0 %v985
    %v1128 = vpop.f32.mrb[0].mxu0
    %v1129 = vadd.f32 0.0, %v1128
    %v1130 = vpop.f32.mrb[0].mxu0
    %v1131 = vadd.f32 0.0, %v1130
    %1132 = vdwg.mxu0
    %v1133 = vadd.f32 %v987, %v1058
    %v1134 = vadd.f32 %v988, %v1060
    %v1135 = vadd.f32 %v989, %v1129
    %v1136 = vadd.f32 %v990, %v1131
    %v1137 = vxor.u32 %v1133, 2147483648
    %v1138 = vxor.u32 %v1134, 2147483648
    %v1139 = vxor.u32 %v1135, 2147483648
    %v1140 = vmul.f32 %v1137, 1.442695
    %v1141 = vpow.pop %v1140
    %v1142 = vmul.f32 %v1138, 1.442695
    %v1143 = vpow.pop %v1142
    %v1144 = vmul.f32 %v1139, 1.442695
    %v1145 = vpow.pop %v1144
    %v1146 = vadd.f32 %v1141, 1.0
    %v1147 = vadd.f32 %v1143, 1.0
    %v1148 = vadd.f32 %v1145, 1.0
    %v1149 = vrcp.pop %v1146
    %v1150 = vmul.f32 1.0, %v1149
    %v1151 = vrcp.pop %v1147
    %v1152 = vmul.f32 1.0, %v1151
    %v1153 = vrcp.pop %v1148
    %v1154 = vmul.f32 1.0, %v1153
    %v1155 = vtanh.pop %v1136
    %v1156 = vmul.f32 %v1152, %v983
    %v1157 = vmul.f32 %v1150, %v1155
    %v1158 = vadd.f32 %v1156, %v1157
    %v1159 = vtanh.pop %v1158
    %v1160 = vmul.f32 %v1154, %v1159
    %s1161 = scalar_lea.vmem [#allocation4], 192
    %v1162 = vld [vmem:[%s1161] sm:$0xff]
    %v1163 = vld [vmem:[%s1161 + $0x8] sm:$0xff]
    %v1164 = vld [vmem:[%s1161 + $0x10] sm:$0xff]
    %v1165 = vld [vmem:[%s1161 + $0x18] sm:$0xff]
    %1166 = vmatprep.subr.mxu0 %v47
    %1167 = vmatpush1.msra.mxu0 %v46
    %1168 = vmatprep.subr.mxu0 %v51
    %1169 = vmatpush1.msra.mxu0 %v50
    %1170 = vmatprep.subr.mxu0 %v55
    %1171 = vmatpush1.msra.mxu0 %v54
    %1172 = vmatprep.subr.mxu0 %v59
    %1173 = vmatpush1.msra.mxu0 %v58
    %1174 = vmatprep.subr.mxu0 %v63
    %1175 = vmatpush1.msra.mxu0 %v62
    %1176 = vmatprep.subr.mxu0 %v67
    %1177 = vmatpush1.msra.mxu0 %v66
    %1178 = vmatprep.subr.mxu0 %v71
    %1179 = vmatpush1.msra.mxu0 %v70
    %1180 = vmatprep.subr.mxu0 %v75
    %1181 = vmatpush1.msra.mxu0 %v74
    %1182 = vmatprep.subr.mxu0 %v79
    %1183 = vmatpush1.msra.mxu0 %v78
    %1184 = vmatprep.subr.mxu0 %v83
    %1185 = vmatpush1.msra.mxu0 %v82
    %1186 = vmatprep.subr.mxu0 %v87
    %1187 = vmatpush1.msra.mxu0 %v86
    %1188 = vmatprep.subr.mxu0 %v91
    %1189 = vmatpush1.msra.mxu0 %v90
    %1190 = vmatprep.subr.mxu0 %v95
    %1191 = vmatpush1.msra.mxu0 %v94
    %1192 = vmatprep.subr.mxu0 %v99
    %1193 = vmatpush1.msra.mxu0 %v98
    %1194 = vmatprep.subr.mxu0 %v103
    %1195 = vmatpush1.msra.mxu0 %v102
    %1196 = vmatprep.subr.mxu0 %v107
    %1197 = vmatpush1.msra.mxu0 %v106
    %1198 = vmatprep.subr.mxu0 0.0
    %1199 = vmatpush1.msra.mxu0 0.0
    %1200 = vmatprep.subr.mxu0 0.0
    %1201 = vmatpush1.msra.mxu0 0.0
    %1202 = vmatprep.subr.mxu0 0.0
    %1203 = vmatpush1.msra.mxu0 0.0
    %1204 = vmatprep.subr.mxu0 0.0
    %1205 = vmatpush1.msra.mxu0 0.0
    %1206 = vmatprep.subr.mxu0 0.0
    %1207 = vmatpush1.msra.mxu0 0.0
    %1208 = vmatprep.subr.mxu0 0.0
    %1209 = vmatpush1.msra.mxu0 0.0
    %1210 = vmatprep.subr.mxu0 0.0
    %1211 = vmatpush1.msra.mxu0 0.0
    %1212 = vmatprep.subr.mxu0 0.0
    %1213 = vmatpush1.msra.mxu0 0.0
    %1214 = vmatprep.subr.mxu0 0.0
    %1215 = vmatpush1.msra.mxu0 0.0
    %1216 = vmatprep.subr.mxu0 0.0
    %1217 = vmatpush1.msra.mxu0 0.0
    %1218 = vmatprep.subr.mxu0 0.0
    %1219 = vmatpush1.msra.mxu0 0.0
    %1220 = vmatprep.subr.mxu0 0.0
    %1221 = vmatpush1.msra.mxu0 0.0
    %1222 = vmatprep.subr.mxu0 0.0
    %1223 = vmatpush1.msra.mxu0 0.0
    %1224 = vmatprep.subr.mxu0 0.0
    %1225 = vmatpush1.msra.mxu0 0.0
    %1226 = vmatprep.subr.mxu0 0.0
    %1227 = vmatpush1.msra.mxu0 0.0
    %1228 = vmatprep.subr.mxu0 0.0
    %1229 = vmatpush1.msra.mxu0 0.0
    %1230 = vmatprep.mubr.f32.mxu0 0.0
    %1231 = vmatmul.mubr.f32.gmra.mrb[0].mxu0 %v1160
    %v1232 = vpop.f32.mrb[0].mxu0
    %v1233 = vadd.f32 0.0, %v1232
    %v1234 = vpop.f32.mrb[0].mxu0
    %v1235 = vadd.f32 0.0, %v1234
    %1236 = vdwg.mxu0
    %1237 = vmatprep.subr.mxu0 %v49
    %1238 = vmatpush1.msra.mxu0 %v48
    %1239 = vmatprep.subr.mxu0 %v53
    %1240 = vmatpush1.msra.mxu0 %v52
    %1241 = vmatprep.subr.mxu0 %v57
    %1242 = vmatpush1.msra.mxu0 %v56
    %1243 = vmatprep.subr.mxu0 %v61
    %1244 = vmatpush1.msra.mxu0 %v60
    %1245 = vmatprep.subr.mxu0 %v65
    %1246 = vmatpush1.msra.mxu0 %v64
    %1247 = vmatprep.subr.mxu0 %v69
    %1248 = vmatpush1.msra.mxu0 %v68
    %1249 = vmatprep.subr.mxu0 %v73
    %1250 = vmatpush1.msra.mxu0 %v72
    %1251 = vmatprep.subr.mxu0 %v77
    %1252 = vmatpush1.msra.mxu0 %v76
    %1253 = vmatprep.subr.mxu0 %v81
    %1254 = vmatpush1.msra.mxu0 %v80
    %1255 = vmatprep.subr.mxu0 %v85
    %1256 = vmatpush1.msra.mxu0 %v84
    %1257 = vmatprep.subr.mxu0 %v89
    %1258 = vmatpush1.msra.mxu0 %v88
    %1259 = vmatprep.subr.mxu0 %v93
    %1260 = vmatpush1.msra.mxu0 %v92
    %1261 = vmatprep.subr.mxu0 %v97
    %1262 = vmatpush1.msra.mxu0 %v96
    %1263 = vmatprep.subr.mxu0 %v101
    %1264 = vmatpush1.msra.mxu0 %v100
    %1265 = vmatprep.subr.mxu0 %v105
    %1266 = vmatpush1.msra.mxu0 %v104
    %1267 = vmatprep.subr.mxu0 %v109
    %1268 = vmatpush1.msra.mxu0 %v108
    %1269 = vmatprep.subr.mxu0 0.0
    %1270 = vmatpush1.msra.mxu0 0.0
    %1271 = vmatprep.subr.mxu0 0.0
    %1272 = vmatpush1.msra.mxu0 0.0
    %1273 = vmatprep.subr.mxu0 0.0
    %1274 = vmatpush1.msra.mxu0 0.0
    %1275 = vmatprep.subr.mxu0 0.0
    %1276 = vmatpush1.msra.mxu0 0.0
    %1277 = vmatprep.subr.mxu0 0.0
    %1278 = vmatpush1.msra.mxu0 0.0
    %1279 = vmatprep.subr.mxu0 0.0
    %1280 = vmatpush1.msra.mxu0 0.0
    %1281 = vmatprep.subr.mxu0 0.0
    %1282 = vmatpush1.msra.mxu0 0.0
    %1283 = vmatprep.subr.mxu0 0.0
    %1284 = vmatpush1.msra.mxu0 0.0
    %1285 = vmatprep.subr.mxu0 0.0
    %1286 = vmatpush1.msra.mxu0 0.0
    %1287 = vmatprep.subr.mxu0 0.0
    %1288 = vmatpush1.msra.mxu0 0.0
    %1289 = vmatprep.subr.mxu0 0.0
    %1290 = vmatpush1.msra.mxu0 0.0
    %1291 = vmatprep.subr.mxu0 0.0
    %1292 = vmatpush1.msra.mxu0 0.0
    %1293 = vmatprep.subr.mxu0 0.0
    %1294 = vmatpush1.msra.mxu0 0.0
    %1295 = vmatprep.subr.mxu0 0.0
    %1296 = vmatpush1.msra.mxu0 0.0
    %1297 = vmatprep.subr.mxu0 0.0
    %1298 = vmatpush1.msra.mxu0 0.0
    %1299 = vmatprep.subr.mxu0 0.0
    %1300 = vmatpush1.msra.mxu0 0.0
    %1301 = vmatprep.mubr.f32.mxu0 0.0
    %1302 = vmatmul.mubr.f32.gmra.mrb[0].mxu0 %v1160
    %v1303 = vpop.f32.mrb[0].mxu0
    %v1304 = vadd.f32 0.0, %v1303
    %v1305 = vpop.f32.mrb[0].mxu0
    %v1306 = vadd.f32 0.0, %v1305
    %1307 = vdwg.mxu0
    %v1308 = vadd.f32 %v1162, %v1233
    %v1309 = vadd.f32 %v1163, %v1235
    %v1310 = vadd.f32 %v1164, %v1304
    %v1311 = vadd.f32 %v1165, %v1306
    %v1312 = vxor.u32 %v1308, 2147483648
    %v1313 = vxor.u32 %v1309, 2147483648
    %v1314 = vxor.u32 %v1310, 2147483648
    %v1315 = vmul.f32 %v1312, 1.442695
    %v1316 = vpow.pop %v1315
    %v1317 = vmul.f32 %v1313, 1.442695
    %v1318 = vpow.pop %v1317
    %v1319 = vmul.f32 %v1314, 1.442695
    %v1320 = vpow.pop %v1319
    %v1321 = vadd.f32 %v1316, 1.0
    %v1322 = vadd.f32 %v1318, 1.0
    %v1323 = vadd.f32 %v1320, 1.0
    %v1324 = vrcp.pop %v1321
    %v1325 = vmul.f32 1.0, %v1324
    %v1326 = vrcp.pop %v1322
    %v1327 = vmul.f32 1.0, %v1326
    %v1328 = vrcp.pop %v1323
    %v1329 = vmul.f32 1.0, %v1328
    %v1330 = vtanh.pop %v1311
    %v1331 = vmul.f32 %v1327, %v1158
    %v1332 = vmul.f32 %v1325, %v1330
    %v1333 = vadd.f32 %v1331, %v1332
    %v1334 = vtanh.pop %v1333
    %v1335 = vmul.f32 %v1329, %v1334
    %s1336 = scalar_lea.vmem [#allocation4], 224
    %v1337 = vld [vmem:[%s1336] sm:$0xff]
    %v1338 = vld [vmem:[%s1336 + $0x8] sm:$0xff]
    %v1339 = vld [vmem:[%s1336 + $0x10] sm:$0xff]
    %v1340 = vld [vmem:[%s1336 + $0x18] sm:$0xff]
    %1341 = vmatprep.subr.mxu0 %v47
    %1342 = vmatpush1.msra.mxu0 %v46
    %1343 = vmatprep.subr.mxu0 %v51
    %1344 = vmatpush1.msra.mxu0 %v50
    %1345 = vmatprep.subr.mxu0 %v55
    %1346 = vmatpush1.msra.mxu0 %v54
    %1347 = vmatprep.subr.mxu0 %v59
    %1348 = vmatpush1.msra.mxu0 %v58
    %1349 = vmatprep.subr.mxu0 %v63
    %1350 = vmatpush1.msra.mxu0 %v62
    %1351 = vmatprep.subr.mxu0 %v67
    %1352 = vmatpush1.msra.mxu0 %v66
    %1353 = vmatprep.subr.mxu0 %v71
    %1354 = vmatpush1.msra.mxu0 %v70
    %1355 = vmatprep.subr.mxu0 %v75
    %1356 = vmatpush1.msra.mxu0 %v74
    %1357 = vmatprep.subr.mxu0 %v79
    %1358 = vmatpush1.msra.mxu0 %v78
    %1359 = vmatprep.subr.mxu0 %v83
    %1360 = vmatpush1.msra.mxu0 %v82
    %1361 = vmatprep.subr.mxu0 %v87
    %1362 = vmatpush1.msra.mxu0 %v86
    %1363 = vmatprep.subr.mxu0 %v91
    %1364 = vmatpush1.msra.mxu0 %v90
    %1365 = vmatprep.subr.mxu0 %v95
    %1366 = vmatpush1.msra.mxu0 %v94
    %1367 = vmatprep.subr.mxu0 %v99
    %1368 = vmatpush1.msra.mxu0 %v98
    %1369 = vmatprep.subr.mxu0 %v103
    %1370 = vmatpush1.msra.mxu0 %v102
    %1371 = vmatprep.subr.mxu0 %v107
    %1372 = vmatpush1.msra.mxu0 %v106
    %1373 = vmatprep.subr.mxu0 0.0
    %1374 = vmatpush1.msra.mxu0 0.0
    %1375 = vmatprep.subr.mxu0 0.0
    %1376 = vmatpush1.msra.mxu0 0.0
    %1377 = vmatprep.subr.mxu0 0.0
    %1378 = vmatpush1.msra.mxu0 0.0
    %1379 = vmatprep.subr.mxu0 0.0
    %1380 = vmatpush1.msra.mxu0 0.0
    %1381 = vmatprep.subr.mxu0 0.0
    %1382 = vmatpush1.msra.mxu0 0.0
    %1383 = vmatprep.subr.mxu0 0.0
    %1384 = vmatpush1.msra.mxu0 0.0
    %1385 = vmatprep.subr.mxu0 0.0
    %1386 = vmatpush1.msra.mxu0 0.0
    %1387 = vmatprep.subr.mxu0 0.0
    %1388 = vmatpush1.msra.mxu0 0.0
    %1389 = vmatprep.subr.mxu0 0.0
    %1390 = vmatpush1.msra.mxu0 0.0
    %1391 = vmatprep.subr.mxu0 0.0
    %1392 = vmatpush1.msra.mxu0 0.0
    %1393 = vmatprep.subr.mxu0 0.0
    %1394 = vmatpush1.msra.mxu0 0.0
    %1395 = vmatprep.subr.mxu0 0.0
    %1396 = vmatpush1.msra.mxu0 0.0
    %1397 = vmatprep.subr.mxu0 0.0
    %1398 = vmatpush1.msra.mxu0 0.0
    %1399 = vmatprep.subr.mxu0 0.0
    %1400 = vmatpush1.msra.mxu0 0.0
    %1401 = vmatprep.subr.mxu0 0.0
    %1402 = vmatpush1.msra.mxu0 0.0
    %1403 = vmatprep.subr.mxu0 0.0
    %1404 = vmatpush1.msra.mxu0 0.0
    %1405 = vmatprep.mubr.f32.mxu0 0.0
    %1406 = vmatmul.mubr.f32.gmra.mrb[0].mxu0 %v1335
    %v1407 = vpop.f32.mrb[0].mxu0
    %v1408 = vadd.f32 0.0, %v1407
    %v1409 = vpop.f32.mrb[0].mxu0
    %v1410 = vadd.f32 0.0, %v1409
    %1411 = vdwg.mxu0
    %1412 = vmatprep.subr.mxu0 %v49
    %1413 = vmatpush1.msra.mxu0 %v48
    %1414 = vmatprep.subr.mxu0 %v53
    %1415 = vmatpush1.msra.mxu0 %v52
    %1416 = vmatprep.subr.mxu0 %v57
    %1417 = vmatpush1.msra.mxu0 %v56
    %1418 = vmatprep.subr.mxu0 %v61
    %1419 = vmatpush1.msra.mxu0 %v60
    %1420 = vmatprep.subr.mxu0 %v65
    %1421 = vmatpush1.msra.mxu0 %v64
    %1422 = vmatprep.subr.mxu0 %v69
    %1423 = vmatpush1.msra.mxu0 %v68
    %1424 = vmatprep.subr.mxu0 %v73
    %1425 = vmatpush1.msra.mxu0 %v72
    %1426 = vmatprep.subr.mxu0 %v77
    %1427 = vmatpush1.msra.mxu0 %v76
    %1428 = vmatprep.subr.mxu0 %v81
    %1429 = vmatpush1.msra.mxu0 %v80
    %1430 = vmatprep.subr.mxu0 %v85
    %1431 = vmatpush1.msra.mxu0 %v84
    %1432 = vmatprep.subr.mxu0 %v89
    %1433 = vmatpush1.msra.mxu0 %v88
    %1434 = vmatprep.subr.mxu0 %v93
    %1435 = vmatpush1.msra.mxu0 %v92
    %1436 = vmatprep.subr.mxu0 %v97
    %1437 = vmatpush1.msra.mxu0 %v96
    %1438 = vmatprep.subr.mxu0 %v101
    %1439 = vmatpush1.msra.mxu0 %v100
    %1440 = vmatprep.subr.mxu0 %v105
    %1441 = vmatpush1.msra.mxu0 %v104
    %1442 = vmatprep.subr.mxu0 %v109
    %1443 = vmatpush1.msra.mxu0 %v108
    %1444 = vmatprep.subr.mxu0 0.0
    %1445 = vmatpush1.msra.mxu0 0.0
    %1446 = vmatprep.subr.mxu0 0.0
    %1447 = vmatpush1.msra.mxu0 0.0
    %1448 = vmatprep.subr.mxu0 0.0
    %1449 = vmatpush1.msra.mxu0 0.0
    %1450 = vmatprep.subr.mxu0 0.0
    %1451 = vmatpush1.msra.mxu0 0.0
    %1452 = vmatprep.subr.mxu0 0.0
    %1453 = vmatpush1.msra.mxu0 0.0
    %1454 = vmatprep.subr.mxu0 0.0
    %1455 = vmatpush1.msra.mxu0 0.0
    %1456 = vmatprep.subr.mxu0 0.0
    %1457 = vmatpush1.msra.mxu0 0.0
    %1458 = vmatprep.subr.mxu0 0.0
    %1459 = vmatpush1.msra.mxu0 0.0
    %1460 = vmatprep.subr.mxu0 0.0
    %1461 = vmatpush1.msra.mxu0 0.0
    %1462 = vmatprep.subr.mxu0 0.0
    %1463 = vmatpush1.msra.mxu0 0.0
    %1464 = vmatprep.subr.mxu0 0.0
    %1465 = vmatpush1.msra.mxu0 0.0
    %1466 = vmatprep.subr.mxu0 0.0
    %1467 = vmatpush1.msra.mxu0 0.0
    %1468 = vmatprep.subr.mxu0 0.0
    %1469 = vmatpush1.msra.mxu0 0.0
    %1470 = vmatprep.subr.mxu0 0.0
    %1471 = vmatpush1.msra.mxu0 0.0
    %1472 = vmatprep.subr.mxu0 0.0
    %1473 = vmatpush1.msra.mxu0 0.0
    %1474 = vmatprep.subr.mxu0 0.0
    %1475 = vmatpush1.msra.mxu0 0.0
    %1476 = vmatprep.mubr.f32.mxu0 0.0
    %1477 = vmatmul.mubr.f32.gmra.mrb[0].mxu0 %v1335
    %v1478 = vpop.f32.mrb[0].mxu0
    %v1479 = vadd.f32 0.0, %v1478
    %v1480 = vpop.f32.mrb[0].mxu0
    %v1481 = vadd.f32 0.0, %v1480
    %1482 = vdwg.mxu0
    %v1483 = vadd.f32 %v1337, %v1408
    %v1484 = vadd.f32 %v1338, %v1410
    %v1485 = vadd.f32 %v1339, %v1479
    %v1486 = vadd.f32 %v1340, %v1481
    %v1487 = vxor.u32 %v1483, 2147483648
    %v1488 = vxor.u32 %v1484, 2147483648
    %v1489 = vxor.u32 %v1485, 2147483648
    %v1490 = vmul.f32 %v1487, 1.442695
    %v1491 = vpow.pop %v1490
    %v1492 = vmul.f32 %v1488, 1.442695
    %v1493 = vpow.pop %v1492
    %v1494 = vmul.f32 %v1489, 1.442695
    %v1495 = vpow.pop %v1494
    %v1496 = vadd.f32 %v1491, 1.0
    %v1497 = vadd.f32 %v1493, 1.0
    %v1498 = vadd.f32 %v1495, 1.0
    %v1499 = vrcp.pop %v1496
    %v1500 = vmul.f32 1.0, %v1499
    %v1501 = vrcp.pop %v1497
    %v1502 = vmul.f32 1.0, %v1501
    %v1503 = vrcp.pop %v1498
    %v1504 = vmul.f32 1.0, %v1503
    %v1505 = vtanh.pop %v1486
    %v1506 = vmul.f32 %v1502, %v1333
    %v1507 = vmul.f32 %v1500, %v1505
    %v1508 = vadd.f32 %v1506, %v1507
    %v1509 = vtanh.pop %v1508
    %v1510 = vmul.f32 %v1504, %v1509
    %1511 = vst [vmem:[#allocation2] sm:$0xff] %v1510
    %1512 = vst [vmem:[#allocation3] sm:$0xff] %v1508
    // Predicated region
    $region22: #{tpu_custom_call.1} parent=1 // pred_check
      %p1513 = pneg %p40
    $region23: #{tpu_custom_call.1} parent=1 // pred_check_branch
      %1515 = sbr.rel (%p1513) target = $region25
    $region24: #{tpu_custom_call.1} parent=1 // pred_region
      %1516 = vst [vmem:[#allocation9] sm:$0xff] %v1510
    $region25: #{tpu_custom_call.1} parent=1 // pred_fallthru
      _
    // Predicated region
    $region26: #{tpu_custom_call.1} parent=1 // pred_check
      _
    $region27: #{tpu_custom_call.1} parent=1 // pred_check_branch
      %1518 = sbr.rel (0) target = $region29
    $region28: #{tpu_custom_call.1} parent=1 // pred_region
      %s1520 = ssub.s32 128, 128
      %1521 = vsyncadd [#allocation6], %s1520
      %s1523 = sshll.u32 [#allocation9], 4
      %s1524 = int_to_ptr.vmem [resolvable:$true] %s1523
      %1526 = dma.vmem_to_hbm [thread:$0]  %s1524, 128, %s2, [#allocation6]
    $region29: #{tpu_custom_call.1} parent=1 // pred_fallthru
      _
    // Predicated region
    $region30: #{tpu_custom_call.1} parent=1 // pred_check
      _
    $region31: #{tpu_custom_call.1} parent=1 // pred_check_branch
      %1528 = sbr.rel (0) target = $region33
    $region32: #{tpu_custom_call.1} parent=1 // pred_region
      %1529 = dma.done [#allocation6], 128
    $region33: #{tpu_custom_call.1} parent=1 // pred_fallthru
      _
    %1530 = vsyncpa [#allocation5], 1
    %1531 = vsyncpa [#allocation8], 1
    %1532 = vsyncpa [#allocation6], 1

// kernel: tpu_custom_call.1
$region0: #{tpu_custom_call.1}
  #allocation0 [shape = 'u32[]', space=smem, size = 0x4, offset = 0x4, fixed_abs, tag = 'smem constant byte address 0x4 - core index']
  #allocation1 [shape = 'u32[144,128]{1,0:T(1,128)}', space=vmem, size = 0x12000, scoped, tag = 'internal scratch']
  #allocation2 [shape = 'f32[8,128]{1,0:T(8,128)}', space=vmem, size = 0x1000, scoped, tag = 'scratch operand']
  #allocation3 [shape = 'f32[8,128]{1,0:T(8,128)}', space=vmem, size = 0x1000, scoped, tag = 'scratch operand']
  %s0 = inlined_call_operand.hbm [shape: f32[8,8,512], index: 0, kind: input, shape index: {}]
  %s1 = inlined_call_operand.hbm [shape: f32[128,512], index: 1, kind: input, shape index: {}]
  %s2 = inlined_call_operand.hbm [shape: f32[8,128], index: 2, kind: output, shape index: {}]
  %s3 = sld [smem:[#allocation0]]
  $region34: #{tpu_custom_call.1} parent=0
    _
  %s5 = ssub.s32 1, %s3
  %s6 = scalar_select 0, %s5, %s3
  $region1: #{tpu_custom_call.1} parent=0
    #allocation4 [shape = 'u8[131072]{0}', space=vmem, size = 0x20000, scoped, tag = 'input window, operand 0, single buffered']
    #allocation5 [shape = 's32[1]{0}', space=sflag, size = 0x4, scoped, tag = 'scoped memory for tpu_custom_call.1']
    #allocation6 [shape = 's32[1]{0}', space=sflag, size = 0x4, scoped, tag = 'scoped memory for tpu_custom_call.1']
    #allocation7 [shape = 'u8[262144]{0}', space=vmem, size = 0x40000, scoped, tag = 'input window, operand 1, single buffered']
    #allocation8 [shape = 's32[1]{0}', space=sflag, size = 0x4, scoped, tag = 'scoped memory for tpu_custom_call.1']
    #allocation9 [shape = 'u8[4096]{0}', space=vmem, size = 0x1000, scoped, tag = 'output window, operand 0, single buffered']
    %7 = vsyncpa [#allocation5], 0
    %8 = vsyncpa [#allocation8], 0
    %9 = vsyncpa [#allocation6], 0
    // Predicated region
    $region2: #{tpu_custom_call.1} parent=1 // pred_check
      _
    $region3: #{tpu_custom_call.1} parent=1 // pred_check_branch
      %11 = sbr.rel (0) target = $region5
    $region4: #{tpu_custom_call.1} parent=1 // pred_region
      %s13 = ssub.s32 4096, 4096
      %14 = vsyncadd [#allocation5], %s13
      %s15 = sshll.u32 [#allocation4], 4
      %s16 = int_to_ptr.vmem [resolvable:$true] %s15
      %21 = dma.hbm_to_vmem [thread:$0]  %s0, 4096, %s16, [#allocation5], 512, 512, 32
    $region5: #{tpu_custom_call.1} parent=1 // pred_fallthru
      _
    // Predicated region
    $region6: #{tpu_custom_call.1} parent=1 // pred_check
      _
    $region7: #{tpu_custom_call.1} parent=1 // pred_check_branch
      %23 = sbr.rel (0) target = $region9
    $region8: #{tpu_custom_call.1} parent=1 // pred_region
      %s25 = ssub.s32 8192, 8192
      %26 = vsyncadd [#allocation8], %s25
      %s27 = sshll.u32 [#allocation7], 4
      %s28 = int_to_ptr.vmem [resolvable:$true] %s27
      %33 = dma.hbm_to_vmem [thread:$0]  %s1, 8192, %s28, [#allocation8], 512, 512, 32
    $region9: #{tpu_custom_call.1} parent=1 // pred_fallthru
      _
    // Predicated region
    $region10: #{tpu_custom_call.1} parent=1 // pred_check
      _
    $region11: #{tpu_custom_call.1} parent=1 // pred_check_branch
      %35 = sbr.rel (0) target = $region13
    $region12: #{tpu_custom_call.1} parent=1 // pred_region
      %36 = dma.done [#allocation5], 4096
    $region13: #{tpu_custom_call.1} parent=1 // pred_fallthru
      _
    // Predicated region
    $region14: #{tpu_custom_call.1} parent=1 // pred_check
      _
    $region15: #{tpu_custom_call.1} parent=1 // pred_check_branch
      %38 = sbr.rel (0) target = $region17
    $region16: #{tpu_custom_call.1} parent=1 // pred_region
      %39 = dma.done [#allocation8], 8192
    $region17: #{tpu_custom_call.1} parent=1 // pred_fallthru
      _
    %p40 = scmp.eq.s32.totalorder 0, 0
    // Predicated region
    $region18: #{tpu_custom_call.1} parent=1 // pred_check
      %p41 = pneg %p40
    $region19: #{tpu_custom_call.1} parent=1 // pred_check_branch
      %43 = sbr.rel (%p41) target = $region21
    $region20: #{tpu_custom_call.1} parent=1 // pred_region
      %44 = vst [vmem:[#allocation2] sm:$0xff] 0.0
      %45 = vst [vmem:[#allocation3] sm:$0xff] 0.0
    $region21: #{tpu_custom_call.1} parent=1 // pred_fallthru
      _
    %v46 = vld [vmem:[#allocation7] sm:$0xff]
    %v47 = vld [vmem:[#allocation7 + $0x8] sm:$0xff]
    %v48 = vld [vmem:[#allocation7 + $0x10] sm:$0xff]
    %v49 = vld [vmem:[#allocation7 + $0x18] sm:$0xff]
    %v50 = vld [vmem:[#allocation7 + $0x20] sm:$0xff]
    %v51 = vld [vmem:[#allocation7 + $0x28] sm:$0xff]
    %v52 = vld [vmem:[#allocation7 + $0x30] sm:$0xff]
    %v53 = vld [vmem:[#allocation7 + $0x38] sm:$0xff]
    %v54 = vld [vmem:[#allocation7 + $0x40] sm:$0xff]
    %v55 = vld [vmem:[#allocation7 + $0x48] sm:$0xff]
    %v56 = vld [vmem:[#allocation7 + $0x50] sm:$0xff]
    %v57 = vld [vmem:[#allocation7 + $0x58] sm:$0xff]
    %v58 = vld [vmem:[#allocation7 + $0x60] sm:$0xff]
    %v59 = vld [vmem:[#allocation7 + $0x68] sm:$0xff]
    %v60 = vld [vmem:[#allocation7 + $0x70] sm:$0xff]
    %v61 = vld [vmem:[#allocation7 + $0x78] sm:$0xff]
    %v62 = vld [vmem:[#allocation7 + $0x80] sm:$0xff]
    %v63 = vld [vmem:[#allocation7 + $0x88] sm:$0xff]
    %v64 = vld [vmem:[#allocation7 + $0x90] sm:$0xff]
    %v65 = vld [vmem:[#allocation7 + $0x98] sm:$0xff]
    %v66 = vld [vmem:[#allocation7 + $0xa0] sm:$0xff]
    %v67 = vld [vmem:[#allocation7 + $0xa8] sm:$0xff]
    %v68 = vld [vmem:[#allocation7 + $0xb0] sm:$0xff]
    %v69 = vld [vmem:[#allocation7 + $0xb8] sm:$0xff]
    %v70 = vld [vmem:[#allocation7 + $0xc0] sm:$0xff]
    %v71 = vld [vmem:[#allocation7 + $0xc8] sm:$0xff]
    %v72 = vld [vmem:[#allocation7 + $0xd0] sm:$0xff]
    %v73 = vld [vmem:[#allocation7 + $0xd8] sm:$0xff]
    %v74 = vld [vmem:[#allocation7 + $0xe0] sm:$0xff]
    %v75 = vld [vmem:[#allocation7 + $0xe8] sm:$0xff]
    %v76 = vld [vmem:[#allocation7 + $0xf0] sm:$0xff]
    %v77 = vld [vmem:[#allocation7 + $0xf8] sm:$0xff]
    %v78 = vld [vmem:[#allocation7 + $0x100] sm:$0xff]
    %v79 = vld [vmem:[#allocation7 + $0x108] sm:$0xff]
    %v80 = vld [vmem:[#allocation7 + $0x110] sm:$0xff]
    %v81 = vld [vmem:[#allocation7 + $0x118] sm:$0xff]
    %v82 = vld [vmem:[#allocation7 + $0x120] sm:$0xff]
    %v83 = vld [vmem:[#allocation7 + $0x128] sm:$0xff]
    %v84 = vld [vmem:[#allocation7 + $0x130] sm:$0xff]
    %v85 = vld [vmem:[#allocation7 + $0x138] sm:$0xff]
    %v86 = vld [vmem:[#allocation7 + $0x140] sm:$0xff]
    %v87 = vld [vmem:[#allocation7 + $0x148] sm:$0xff]
    %v88 = vld [vmem:[#allocation7 + $0x150] sm:$0xff]
    %v89 = vld [vmem:[#allocation7 + $0x158] sm:$0xff]
    %v90 = vld [vmem:[#allocation7 + $0x160] sm:$0xff]
    %v91 = vld [vmem:[#allocation7 + $0x168] sm:$0xff]
    %v92 = vld [vmem:[#allocation7 + $0x170] sm:$0xff]
    %v93 = vld [vmem:[#allocation7 + $0x178] sm:$0xff]
    %v94 = vld [vmem:[#allocation7 + $0x180] sm:$0xff]
    %v95 = vld [vmem:[#allocation7 + $0x188] sm:$0xff]
    %v96 = vld [vmem:[#allocation7 + $0x190] sm:$0xff]
    %v97 = vld [vmem:[#allocation7 + $0x198] sm:$0xff]
    %v98 = vld [vmem:[#allocation7 + $0x1a0] sm:$0xff]
    %v99 = vld [vmem:[#allocation7 + $0x1a8] sm:$0xff]
    %v100 = vld [vmem:[#allocation7 + $0x1b0] sm:$0xff]
    %v101 = vld [vmem:[#allocation7 + $0x1b8] sm:$0xff]
    %v102 = vld [vmem:[#allocation7 + $0x1c0] sm:$0xff]
    %v103 = vld [vmem:[#allocation7 + $0x1c8] sm:$0xff]
    %v104 = vld [vmem:[#allocation7 + $0x1d0] sm:$0xff]
    %v105 = vld [vmem:[#allocation7 + $0x1d8] sm:$0xff]
    %v106 = vld [vmem:[#allocation7 + $0x1e0] sm:$0xff]
    %v107 = vld [vmem:[#allocation7 + $0x1e8] sm:$0xff]
    %v108 = vld [vmem:[#allocation7 + $0x1f0] sm:$0xff]
    %v109 = vld [vmem:[#allocation7 + $0x1f8] sm:$0xff]
    %v110 = vld [vmem:[#allocation2] sm:$0xff]
    %v111 = vld [vmem:[#allocation3] sm:$0xff]
    %v112 = vld [vmem:[#allocation4] sm:$0xff]
    %v113 = vld [vmem:[#allocation4 + $0x8] sm:$0xff]
    %v114 = vld [vmem:[#allocation4 + $0x10] sm:$0xff]
    %v115 = vld [vmem:[#allocation4 + $0x18] sm:$0xff]
    %116 = vmatprep.subr.mxu0 %v47
    %117 = vmatpush1.msra.mxu0 %v46
    %118 = vmatprep.subr.mxu0 %v51
    %119 = vmatpush1.msra.mxu0 %v50
    %120 = vmatprep.subr.mxu0 %v55
    %121 = vmatpush1.msra.mxu0 %v54
    %122 = vmatprep.subr.mxu0 %v59
    %123 = vmatpush1.msra.mxu0 %v58
    %124 = vmatprep.subr.mxu0 %v63
    %125 = vmatpush1.msra.mxu0 %v62
    %126 = vmatprep.subr.mxu0 %v67
    %127 = vmatpush1.msra.mxu0 %v66
    %128 = vmatprep.subr.mxu0 %v71
    %129 = vmatpush1.msra.mxu0 %v70
    %130 = vmatprep.subr.mxu0 %v75
    %131 = vmatpush1.msra.mxu0 %v74
    %132 = vmatprep.subr.mxu0 %v79
    %133 = vmatpush1.msra.mxu0 %v78
    %134 = vmatprep.subr.mxu0 %v83
    %135 = vmatpush1.msra.mxu0 %v82
    %136 = vmatprep.subr.mxu0 %v87
    %137 = vmatpush1.msra.mxu0 %v86
    %138 = vmatprep.subr.mxu0 %v91
    %139 = vmatpush1.msra.mxu0 %v90
    %140 = vmatprep.subr.mxu0 %v95
    %141 = vmatpush1.msra.mxu0 %v94
    %142 = vmatprep.subr.mxu0 %v99
    %143 = vmatpush1.msra.mxu0 %v98
    %144 = vmatprep.subr.mxu0 %v103
    %145 = vmatpush1.msra.mxu0 %v102
    %146 = vmatprep.subr.mxu0 %v107
    %147 = vmatpush1.msra.mxu0 %v106
    %148 = vmatprep.subr.mxu0 0.0
    %149 = vmatpush1.msra.mxu0 0.0
    %150 = vmatprep.subr.mxu0 0.0
    %151 = vmatpush1.msra.mxu0 0.0
    %152 = vmatprep.subr.mxu0 0.0
    %153 = vmatpush1.msra.mxu0 0.0
    %154 = vmatprep.subr.mxu0 0.0
    %155 = vmatpush1.msra.mxu0 0.0
    %156 = vmatprep.subr.mxu0 0.0
    %157 = vmatpush1.msra.mxu0 0.0
    %158 = vmatprep.subr.mxu0 0.0
    %159 = vmatpush1.msra.mxu0 0.0
    %160 = vmatprep.subr.mxu0 0.0
    %161 = vmatpush1.msra.mxu0 0.0
    %162 = vmatprep.subr.mxu0 0.0
    %163 = vmatpush1.msra.mxu0 0.0
    %164 = vmatprep.subr.mxu0 0.0
    %165 = vmatpush1.msra.mxu0 0.0
    %166 = vmatprep.subr.mxu0 0.0
    %167 = vmatpush1.msra.mxu0 0.0
    %168 = vmatprep.subr.mxu0 0.0
    %169 = vmatpush1.msra.mxu0 0.0
    %170 = vmatprep.subr.mxu0 0.0
    %171 = vmatpush1.msra.mxu0 0.0
    %172 = vmatprep.subr.mxu0 0.0
    %173 = vmatpush1.msra.mxu0 0.0
    %174 = vmatprep.subr.mxu0 0.0
    %175 = vmatpush1.msra.mxu0 0.0
    %176 = vmatprep.subr.mxu0 0.0
    %177 = vmatpush1.msra.mxu0 0.0
    %178 = vmatprep.subr.mxu0 0.0
    %179 = vmatpush1.msra.mxu0 0.0
    %180 = vmatprep.mubr.f32.mxu0 0.0
    %181 = vmatmul.mubr.f32.gmra.mrb[0].mxu0 %v110
    %v182 = vpop.f32.mrb[0].mxu0
    %v183 = vadd.f32 0.0, %v182
    %v184 = vpop.f32.mrb[0].mxu0
    %v185 = vadd.f32 0.0, %v184
    %186 = vdwg.mxu0
    %187 = vmatprep.subr.mxu0 %v49
    %188 = vmatpush1.msra.mxu0 %v48
    %189 = vmatprep.subr.mxu0 %v53
    %190 = vmatpush1.msra.mxu0 %v52
    %191 = vmatprep.subr.mxu0 %v57
    %192 = vmatpush1.msra.mxu0 %v56
    %193 = vmatprep.subr.mxu0 %v61
    %194 = vmatpush1.msra.mxu0 %v60
    %195 = vmatprep.subr.mxu0 %v65
    %196 = vmatpush1.msra.mxu0 %v64
    %197 = vmatprep.subr.mxu0 %v69
    %198 = vmatpush1.msra.mxu0 %v68
    %199 = vmatprep.subr.mxu0 %v73
    %200 = vmatpush1.msra.mxu0 %v72
    %201 = vmatprep.subr.mxu0 %v77
    %202 = vmatpush1.msra.mxu0 %v76
    %203 = vmatprep.subr.mxu0 %v81
    %204 = vmatpush1.msra.mxu0 %v80
    %205 = vmatprep.subr.mxu0 %v85
    %206 = vmatpush1.msra.mxu0 %v84
    %207 = vmatprep.subr.mxu0 %v89
    %208 = vmatpush1.msra.mxu0 %v88
    %209 = vmatprep.subr.mxu0 %v93
    %210 = vmatpush1.msra.mxu0 %v92
    %211 = vmatprep.subr.mxu0 %v97
    %212 = vmatpush1.msra.mxu0 %v96
    %213 = vmatprep.subr.mxu0 %v101
    %214 = vmatpush1.msra.mxu0 %v100
    %215 = vmatprep.subr.mxu0 %v105
    %216 = vmatpush1.msra.mxu0 %v104
    %217 = vmatprep.subr.mxu0 %v109
    %218 = vmatpush1.msra.mxu0 %v108
    %219 = vmatprep.subr.mxu0 0.0
    %220 = vmatpush1.msra.mxu0 0.0
    %221 = vmatprep.subr.mxu0 0.0
    %222 = vmatpush1.msra.mxu0 0.0
    %223 = vmatprep.subr.mxu0 0.0
    %224 = vmatpush1.msra.mxu0 0.0
    %225 = vmatprep.subr.mxu0 0.0
    %226 = vmatpush1.msra.mxu0 0.0
    %227 = vmatprep.subr.mxu0 0.0
    %228 = vmatpush1.msra.mxu0 0.0
    %229 = vmatprep.subr.mxu0 0.0
    %230 = vmatpush1.msra.mxu0 0.0
    %231 = vmatprep.subr.mxu0 0.0
    %232 = vmatpush1.msra.mxu0 0.0
    %233 = vmatprep.subr.mxu0 0.0
    %234 = vmatpush1.msra.mxu0 0.0
    %235 = vmatprep.subr.mxu0 0.0
    %236 = vmatpush1.msra.mxu0 0.0
    %237 = vmatprep.subr.mxu0 0.0
    %238 = vmatpush1.msra.mxu0 0.0
    %239 = vmatprep.subr.mxu0 0.0
    %240 = vmatpush1.msra.mxu0 0.0
    %241 = vmatprep.subr.mxu0 0.0
    %242 = vmatpush1.msra.mxu0 0.0
    %243 = vmatprep.subr.mxu0 0.0
    %244 = vmatpush1.msra.mxu0 0.0
    %245 = vmatprep.subr.mxu0 0.0
    %246 = vmatpush1.msra.mxu0 0.0
    %247 = vmatprep.subr.mxu0 0.0
    %248 = vmatpush1.msra.mxu0 0.0
    %249 = vmatprep.subr.mxu0 0.0
    %250 = vmatpush1.msra.mxu0 0.0
    %251 = vmatprep.mubr.f32.mxu0 0.0
    %252 = vmatmul.mubr.f32.gmra.mrb[0].mxu0 %v110
    %v253 = vpop.f32.mrb[0].mxu0
    %v254 = vadd.f32 0.0, %v253
    %v255 = vpop.f32.mrb[0].mxu0
    %v256 = vadd.f32 0.0, %v255
    %257 = vdwg.mxu0
    %v258 = vadd.f32 %v112, %v183
    %v259 = vadd.f32 %v113, %v185
    %v260 = vadd.f32 %v114, %v254
    %v261 = vadd.f32 %v115, %v256
    %v262 = vxor.u32 %v258, 2147483648
    %v263 = vxor.u32 %v259, 2147483648
    %v264 = vxor.u32 %v260, 2147483648
    %v265 = vmul.f32 %v262, 1.442695
    %v266 = vpow.pop %v265
    %v267 = vmul.f32 %v263, 1.442695
    %v268 = vpow.pop %v267
    %v269 = vmul.f32 %v264, 1.442695
    %v270 = vpow.pop %v269
    %v271 = vadd.f32 %v266, 1.0
    %v272 = vadd.f32 %v268, 1.0
    %v273 = vadd.f32 %v270, 1.0
    %v274 = vrcp.pop %v271
    %v275 = vmul.f32 1.0, %v274
    %v276 = vrcp.pop %v272
    %v277 = vmul.f32 1.0, %v276
    %v278 = vrcp.pop %v273
    %v279 = vmul.f32 1.0, %v278
    %v280 = vtanh.pop %v261
    %v281 = vmul.f32 %v277, %v111
    %v282 = vmul.f32 %v275, %v280
    %v283 = vadd.f32 %v281, %v282
    %v284 = vtanh.pop %v283
    %v285 = vmul.f32 %v279, %v284
    %s286 = scalar_lea.vmem [#allocation4], 32
    %v287 = vld [vmem:[%s286] sm:$0xff]
    %v288 = vld [vmem:[%s286 + $0x8] sm:$0xff]
    %v289 = vld [vmem:[%s286 + $0x10] sm:$0xff]
    %v290 = vld [vmem:[%s286 + $0x18] sm:$0xff]
    %291 = vmatprep.subr.mxu0 %v47
    %292 = vmatpush1.msra.mxu0 %v46
    %293 = vmatprep.subr.mxu0 %v51
    %294 = vmatpush1.msra.mxu0 %v50
    %295 = vmatprep.subr.mxu0 %v55
    %296 = vmatpush1.msra.mxu0 %v54
    %297 = vmatprep.subr.mxu0 %v59
    %298 = vmatpush1.msra.mxu0 %v58
    %299 = vmatprep.subr.mxu0 %v63
    %300 = vmatpush1.msra.mxu0 %v62
    %301 = vmatprep.subr.mxu0 %v67
    %302 = vmatpush1.msra.mxu0 %v66
    %303 = vmatprep.subr.mxu0 %v71
    %304 = vmatpush1.msra.mxu0 %v70
    %305 = vmatprep.subr.mxu0 %v75
    %306 = vmatpush1.msra.mxu0 %v74
    %307 = vmatprep.subr.mxu0 %v79
    %308 = vmatpush1.msra.mxu0 %v78
    %309 = vmatprep.subr.mxu0 %v83
    %310 = vmatpush1.msra.mxu0 %v82
    %311 = vmatprep.subr.mxu0 %v87
    %312 = vmatpush1.msra.mxu0 %v86
    %313 = vmatprep.subr.mxu0 %v91
    %314 = vmatpush1.msra.mxu0 %v90
    %315 = vmatprep.subr.mxu0 %v95
    %316 = vmatpush1.msra.mxu0 %v94
    %317 = vmatprep.subr.mxu0 %v99
    %318 = vmatpush1.msra.mxu0 %v98
    %319 = vmatprep.subr.mxu0 %v103
    %320 = vmatpush1.msra.mxu0 %v102
    %321 = vmatprep.subr.mxu0 %v107
    %322 = vmatpush1.msra.mxu0 %v106
    %323 = vmatprep.subr.mxu0 0.0
    %324 = vmatpush1.msra.mxu0 0.0
    %325 = vmatprep.subr.mxu0 0.0
    %326 = vmatpush1.msra.mxu0 0.0
    %327 = vmatprep.subr.mxu0 0.0
    %328 = vmatpush1.msra.mxu0 0.0
    %329 = vmatprep.subr.mxu0 0.0
    %330 = vmatpush1.msra.mxu0 0.0
    %331 = vmatprep.subr.mxu0 0.0
    %332 = vmatpush1.msra.mxu0 0.0
    %333 = vmatprep.subr.mxu0 0.0
    %334 = vmatpush1.msra.mxu0 0.0
    %335 = vmatprep.subr.mxu0 0.0
    %336 = vmatpush1.msra.mxu0 0.0
    %337 = vmatprep.subr.mxu0 0.0
    %338 = vmatpush1.msra.mxu0 0.0
    %339 = vmatprep.subr.mxu0 0.0
    %340 = vmatpush1.msra.mxu0 0.0
    %341 = vmatprep.subr.mxu0 0.0
    %342 = vmatpush1.msra.mxu0 0.0
    %343 = vmatprep.subr.mxu0 0.0
    %344 = vmatpush1.msra.mxu0 0.0
    %345 = vmatprep.subr.mxu0 0.0
    %346 = vmatpush1.msra.mxu0 0.0
    %347 = vmatprep.subr.mxu0 0.0
    %348 = vmatpush1.msra.mxu0 0.0
    %349 = vmatprep.subr.mxu0 0.0
    %350 = vmatpush1.msra.mxu0 0.0
    %351 = vmatprep.subr.mxu0 0.0
    %352 = vmatpush1.msra.mxu0 0.0
    %353 = vmatprep.subr.mxu0 0.0
    %354 = vmatpush1.msra.mxu0 0.0
    %355 = vmatprep.mubr.f32.mxu0 0.0
    %356 = vmatmul.mubr.f32.gmra.mrb[0].mxu0 %v285
    %v357 = vpop.f32.mrb[0].mxu0
    %v358 = vadd.f32 0.0, %v357
    %v359 = vpop.f32.mrb[0].mxu0
    %v360 = vadd.f32 0.0, %v359
    %361 = vdwg.mxu0
    %362 = vmatprep.subr.mxu0 %v49
    %363 = vmatpush1.msra.mxu0 %v48
    %364 = vmatprep.subr.mxu0 %v53
    %365 = vmatpush1.msra.mxu0 %v52
    %366 = vmatprep.subr.mxu0 %v57
    %367 = vmatpush1.msra.mxu0 %v56
    %368 = vmatprep.subr.mxu0 %v61
    %369 = vmatpush1.msra.mxu0 %v60
    %370 = vmatprep.subr.mxu0 %v65
    %371 = vmatpush1.msra.mxu0 %v64
    %372 = vmatprep.subr.mxu0 %v69
    %373 = vmatpush1.msra.mxu0 %v68
    %374 = vmatprep.subr.mxu0 %v73
    %375 = vmatpush1.msra.mxu0 %v72
    %376 = vmatprep.subr.mxu0 %v77
    %377 = vmatpush1.msra.mxu0 %v76
    %378 = vmatprep.subr.mxu0 %v81
    %379 = vmatpush1.msra.mxu0 %v80
    %380 = vmatprep.subr.mxu0 %v85
    %381 = vmatpush1.msra.mxu0 %v84
    %382 = vmatprep.subr.mxu0 %v89
    %383 = vmatpush1.msra.mxu0 %v88
    %384 = vmatprep.subr.mxu0 %v93
    %385 = vmatpush1.msra.mxu0 %v92
    %386 = vmatprep.subr.mxu0 %v97
    %387 = vmatpush1.msra.mxu0 %v96
    %388 = vmatprep.subr.mxu0 %v101
    %389 = vmatpush1.msra.mxu0 %v100
    %390 = vmatprep.subr.mxu0 %v105
    %391 = vmatpush1.msra.mxu0 %v104
    %392 = vmatprep.subr.mxu0 %v109
    %393 = vmatpush1.msra.mxu0 %v108
    %394 = vmatprep.subr.mxu0 0.0
    %395 = vmatpush1.msra.mxu0 0.0
    %396 = vmatprep.subr.mxu0 0.0
    %397 = vmatpush1.msra.mxu0 0.0
    %398 = vmatprep.subr.mxu0 0.0
    %399 = vmatpush1.msra.mxu0 0.0
    %400 = vmatprep.subr.mxu0 0.0
    %401 = vmatpush1.msra.mxu0 0.0
    %402 = vmatprep.subr.mxu0 0.0
    %403 = vmatpush1.msra.mxu0 0.0
    %404 = vmatprep.subr.mxu0 0.0
    %405 = vmatpush1.msra.mxu0 0.0
    %406 = vmatprep.subr.mxu0 0.0
    %407 = vmatpush1.msra.mxu0 0.0
    %408 = vmatprep.subr.mxu0 0.0
    %409 = vmatpush1.msra.mxu0 0.0
    %410 = vmatprep.subr.mxu0 0.0
    %411 = vmatpush1.msra.mxu0 0.0
    %412 = vmatprep.subr.mxu0 0.0
    %413 = vmatpush1.msra.mxu0 0.0
    %414 = vmatprep.subr.mxu0 0.0
    %415 = vmatpush1.msra.mxu0 0.0
    %416 = vmatprep.subr.mxu0 0.0
    %417 = vmatpush1.msra.mxu0 0.0
    %418 = vmatprep.subr.mxu0 0.0
    %419 = vmatpush1.msra.mxu0 0.0
    %420 = vmatprep.subr.mxu0 0.0
    %421 = vmatpush1.msra.mxu0 0.0
    %422 = vmatprep.subr.mxu0 0.0
    %423 = vmatpush1.msra.mxu0 0.0
    %424 = vmatprep.subr.mxu0 0.0
    %425 = vmatpush1.msra.mxu0 0.0
    %426 = vmatprep.mubr.f32.mxu0 0.0
    %427 = vmatmul.mubr.f32.gmra.mrb[0].mxu0 %v285
    %v428 = vpop.f32.mrb[0].mxu0
    %v429 = vadd.f32 0.0, %v428
    %v430 = vpop.f32.mrb[0].mxu0
    %v431 = vadd.f32 0.0, %v430
    %432 = vdwg.mxu0
    %v433 = vadd.f32 %v287, %v358
    %v434 = vadd.f32 %v288, %v360
    %v435 = vadd.f32 %v289, %v429
    %v436 = vadd.f32 %v290, %v431
    %v437 = vxor.u32 %v433, 2147483648
    %v438 = vxor.u32 %v434, 2147483648
    %v439 = vxor.u32 %v435, 2147483648
    %v440 = vmul.f32 %v437, 1.442695
    %v441 = vpow.pop %v440
    %v442 = vmul.f32 %v438, 1.442695
    %v443 = vpow.pop %v442
    %v444 = vmul.f32 %v439, 1.442695
    %v445 = vpow.pop %v444
    %v446 = vadd.f32 %v441, 1.0
    %v447 = vadd.f32 %v443, 1.0
    %v448 = vadd.f32 %v445, 1.0
    %v449 = vrcp.pop %v446
    %v450 = vmul.f32 1.0, %v449
    %v451 = vrcp.pop %v447
    %v452 = vmul.f32 1.0, %v451
    %v453 = vrcp.pop %v448
    %v454 = vmul.f32 1.0, %v453
    %v455 = vtanh.pop %v436
    %v456 = vmul.f32 %v452, %v283
    %v457 = vmul.f32 %v450, %v455
    %v458 = vadd.f32 %v456, %v457
    %v459 = vtanh.pop %v458
    %v460 = vmul.f32 %v454, %v459
    %s461 = scalar_lea.vmem [#allocation4], 64
    %v462 = vld [vmem:[%s461] sm:$0xff]
    %v463 = vld [vmem:[%s461 + $0x8] sm:$0xff]
    %v464 = vld [vmem:[%s461 + $0x10] sm:$0xff]
    %v465 = vld [vmem:[%s461 + $0x18] sm:$0xff]
    %466 = vmatprep.subr.mxu0 %v47
    %467 = vmatpush1.msra.mxu0 %v46
    %468 = vmatprep.subr.mxu0 %v51
    %469 = vmatpush1.msra.mxu0 %v50
    %470 = vmatprep.subr.mxu0 %v55
    %471 = vmatpush1.msra.mxu0 %v54
    %472 = vmatprep.subr.mxu0 %v59
    %473 = vmatpush1.msra.mxu0 %v58
    %474 = vmatprep.subr.mxu0 %v63
    %475 = vmatpush1.msra.mxu0 %v62
    %476 = vmatprep.subr.mxu0 %v67
    %477 = vmatpush1.msra.mxu0 %v66
    %478 = vmatprep.subr.mxu0 %v71
    %479 = vmatpush1.msra.mxu0 %v70
    %480 = vmatprep.subr.mxu0 %v75
    %481 = vmatpush1.msra.mxu0 %v74
    %482 = vmatprep.subr.mxu0 %v79
    %483 = vmatpush1.msra.mxu0 %v78
    %484 = vmatprep.subr.mxu0 %v83
    %485 = vmatpush1.msra.mxu0 %v82
    %486 = vmatprep.subr.mxu0 %v87
    %487 = vmatpush1.msra.mxu0 %v86
    %488 = vmatprep.subr.mxu0 %v91
    %489 = vmatpush1.msra.mxu0 %v90
    %490 = vmatprep.subr.mxu0 %v95
    %491 = vmatpush1.msra.mxu0 %v94
    %492 = vmatprep.subr.mxu0 %v99
    %493 = vmatpush1.msra.mxu0 %v98
    %494 = vmatprep.subr.mxu0 %v103
    %495 = vmatpush1.msra.mxu0 %v102
    %496 = vmatprep.subr.mxu0 %v107
    %497 = vmatpush1.msra.mxu0 %v106
    %498 = vmatprep.subr.mxu0 0.0
    %499 = vmatpush1.msra.mxu0 0.0
    %500 = vmatprep.subr.mxu0 0.0
    %501 = vmatpush1.msra.mxu0 0.0
    %502 = vmatprep.subr.mxu0 0.0
    %503 = vmatpush1.msra.mxu0 0.0
    %504 = vmatprep.subr.mxu0 0.0
    %505 = vmatpush1.msra.mxu0 0.0
    %506 = vmatprep.subr.mxu0 0.0
    %507 = vmatpush1.msra.mxu0 0.0
    %508 = vmatprep.subr.mxu0 0.0
    %509 = vmatpush1.msra.mxu0 0.0
    %510 = vmatprep.subr.mxu0 0.0
    %511 = vmatpush1.msra.mxu0 0.0
    %512 = vmatprep.subr.mxu0 0.0
    %513 = vmatpush1.msra.mxu0 0.0
    %514 = vmatprep.subr.mxu0 0.0
    %515 = vmatpush1.msra.mxu0 0.0
    %516 = vmatprep.subr.mxu0 0.0
    %517 = vmatpush1.msra.mxu0 0.0
    %518 = vmatprep.subr.mxu0 0.0
    %519 = vmatpush1.msra.mxu0 0.0
    %520 = vmatprep.subr.mxu0 0.0
    %521 = vmatpush1.msra.mxu0 0.0
    %522 = vmatprep.subr.mxu0 0.0
    %523 = vmatpush1.msra.mxu0 0.0
    %524 = vmatprep.subr.mxu0 0.0
    %525 = vmatpush1.msra.mxu0 0.0
    %526 = vmatprep.subr.mxu0 0.0
    %527 = vmatpush1.msra.mxu0 0.0
    %528 = vmatprep.subr.mxu0 0.0
    %529 = vmatpush1.msra.mxu0 0.0
    %530 = vmatprep.mubr.f32.mxu0 0.0
    %531 = vmatmul.mubr.f32.gmra.mrb[0].mxu0 %v460
    %v532 = vpop.f32.mrb[0].mxu0
    %v533 = vadd.f32 0.0, %v532
    %v534 = vpop.f32.mrb[0].mxu0
    %v535 = vadd.f32 0.0, %v534
    %536 = vdwg.mxu0
    %537 = vmatprep.subr.mxu0 %v49
    %538 = vmatpush1.msra.mxu0 %v48
    %539 = vmatprep.subr.mxu0 %v53
    %540 = vmatpush1.msra.mxu0 %v52
    %541 = vmatprep.subr.mxu0 %v57
    %542 = vmatpush1.msra.mxu0 %v56
    %543 = vmatprep.subr.mxu0 %v61
    %544 = vmatpush1.msra.mxu0 %v60
    %545 = vmatprep.subr.mxu0 %v65
    %546 = vmatpush1.msra.mxu0 %v64
    %547 = vmatprep.subr.mxu0 %v69
    %548 = vmatpush1.msra.mxu0 %v68
    %549 = vmatprep.subr.mxu0 %v73
    %550 = vmatpush1.msra.mxu0 %v72
    %551 = vmatprep.subr.mxu0 %v77
    %552 = vmatpush1.msra.mxu0 %v76
    %553 = vmatprep.subr.mxu0 %v81
    %554 = vmatpush1.msra.mxu0 %v80
    %555 = vmatprep.subr.mxu0 %v85
    %556 = vmatpush1.msra.mxu0 %v84
    %557 = vmatprep.subr.mxu0 %v89
    %558 = vmatpush1.msra.mxu0 %v88
    %559 = vmatprep.subr.mxu0 %v93
    %560 = vmatpush1.msra.mxu0 %v92
    %561 = vmatprep.subr.mxu0 %v97
    %562 = vmatpush1.msra.mxu0 %v96
    %563 = vmatprep.subr.mxu0 %v101
    %564 = vmatpush1.msra.mxu0 %v100
    %565 = vmatprep.subr.mxu0 %v105
    %566 = vmatpush1.msra.mxu0 %v104
    %567 = vmatprep.subr.mxu0 %v109
    %568 = vmatpush1.msra.mxu0 %v108
    %569 = vmatprep.subr.mxu0 0.0
    %570 = vmatpush1.msra.mxu0 0.0
    %571 = vmatprep.subr.mxu0 0.0
    %572 = vmatpush1.msra.mxu0 0.0
    %573 = vmatprep.subr.mxu0 0.0
    %574 = vmatpush1.msra.mxu0 0.0
    %575 = vmatprep.subr.mxu0 0.0
    %576 = vmatpush1.msra.mxu0 0.0
    %577 = vmatprep.subr.mxu0 0.0
    %578 = vmatpush1.msra.mxu0 0.0
    %579 = vmatprep.subr.mxu0 0.0
    %580 = vmatpush1.msra.mxu0 0.0
    %581 = vmatprep.subr.mxu0 0.0
    %582 = vmatpush1.msra.mxu0 0.0
    %583 = vmatprep.subr.mxu0 0.0
    %584 = vmatpush1.msra.mxu0 0.0
    %585 = vmatprep.subr.mxu0 0.0
    %586 = vmatpush1.msra.mxu0 0.0
    %587 = vmatprep.subr.mxu0 0.0
    %588 = vmatpush1.msra.mxu0 0.0
    %589 = vmatprep.subr.mxu0 0.0
    %590 = vmatpush1.msra.mxu0 0.0
    %591 = vmatprep.subr.mxu0 0.0
    %592 = vmatpush1.msra.mxu0 0.0
    %593 = vmatprep.subr.mxu0 0.0
    %594 = vmatpush1.msra.mxu0 0.0
    %595 = vmatprep.subr.mxu0 0.0
    %596 = vmatpush1.msra.mxu0 0.0
    %597 = vmatprep.subr.mxu0 0.0
    %598 = vmatpush1.msra.mxu0 0.0
    %599 = vmatprep.subr.mxu0 0.0
    %600 = vmatpush1.msra.mxu0 0.0
    %601 = vmatprep.mubr.f32.mxu0 0.0
    %602 = vmatmul.mubr.f32.gmra.mrb[0].mxu0 %v460
    %v603 = vpop.f32.mrb[0].mxu0
    %v604 = vadd.f32 0.0, %v603
    %v605 = vpop.f32.mrb[0].mxu0
    %v606 = vadd.f32 0.0, %v605
    %607 = vdwg.mxu0
    %v608 = vadd.f32 %v462, %v533
    %v609 = vadd.f32 %v463, %v535
    %v610 = vadd.f32 %v464, %v604
    %v611 = vadd.f32 %v465, %v606
    %v612 = vxor.u32 %v608, 2147483648
    %v613 = vxor.u32 %v609, 2147483648
    %v614 = vxor.u32 %v610, 2147483648
    %v615 = vmul.f32 %v612, 1.442695
    %v616 = vpow.pop %v615
    %v617 = vmul.f32 %v613, 1.442695
    %v618 = vpow.pop %v617
    %v619 = vmul.f32 %v614, 1.442695
    %v620 = vpow.pop %v619
    %v621 = vadd.f32 %v616, 1.0
    %v622 = vadd.f32 %v618, 1.0
    %v623 = vadd.f32 %v620, 1.0
    %v624 = vrcp.pop %v621
    %v625 = vmul.f32 1.0, %v624
    %v626 = vrcp.pop %v622
    %v627 = vmul.f32 1.0, %v626
    %v628 = vrcp.pop %v623
    %v629 = vmul.f32 1.0, %v628
    %v630 = vtanh.pop %v611
    %v631 = vmul.f32 %v627, %v458
    %v632 = vmul.f32 %v625, %v630
    %v633 = vadd.f32 %v631, %v632
    %v634 = vtanh.pop %v633
    %v635 = vmul.f32 %v629, %v634
    %s636 = scalar_lea.vmem [#allocation4], 96
    %v637 = vld [vmem:[%s636] sm:$0xff]
    %v638 = vld [vmem:[%s636 + $0x8] sm:$0xff]
    %v639 = vld [vmem:[%s636 + $0x10] sm:$0xff]
    %v640 = vld [vmem:[%s636 + $0x18] sm:$0xff]
    %641 = vmatprep.subr.mxu0 %v47
    %642 = vmatpush1.msra.mxu0 %v46
    %643 = vmatprep.subr.mxu0 %v51
    %644 = vmatpush1.msra.mxu0 %v50
    %645 = vmatprep.subr.mxu0 %v55
    %646 = vmatpush1.msra.mxu0 %v54
    %647 = vmatprep.subr.mxu0 %v59
    %648 = vmatpush1.msra.mxu0 %v58
    %649 = vmatprep.subr.mxu0 %v63
    %650 = vmatpush1.msra.mxu0 %v62
    %651 = vmatprep.subr.mxu0 %v67
    %652 = vmatpush1.msra.mxu0 %v66
    %653 = vmatprep.subr.mxu0 %v71
    %654 = vmatpush1.msra.mxu0 %v70
    %655 = vmatprep.subr.mxu0 %v75
    %656 = vmatpush1.msra.mxu0 %v74
    %657 = vmatprep.subr.mxu0 %v79
    %658 = vmatpush1.msra.mxu0 %v78
    %659 = vmatprep.subr.mxu0 %v83
    %660 = vmatpush1.msra.mxu0 %v82
    %661 = vmatprep.subr.mxu0 %v87
    %662 = vmatpush1.msra.mxu0 %v86
    %663 = vmatprep.subr.mxu0 %v91
    %664 = vmatpush1.msra.mxu0 %v90
    %665 = vmatprep.subr.mxu0 %v95
    %666 = vmatpush1.msra.mxu0 %v94
    %667 = vmatprep.subr.mxu0 %v99
    %668 = vmatpush1.msra.mxu0 %v98
    %669 = vmatprep.subr.mxu0 %v103
    %670 = vmatpush1.msra.mxu0 %v102
    %671 = vmatprep.subr.mxu0 %v107
    %672 = vmatpush1.msra.mxu0 %v106
    %673 = vmatprep.subr.mxu0 0.0
    %674 = vmatpush1.msra.mxu0 0.0
    %675 = vmatprep.subr.mxu0 0.0
    %676 = vmatpush1.msra.mxu0 0.0
    %677 = vmatprep.subr.mxu0 0.0
    %678 = vmatpush1.msra.mxu0 0.0
    %679 = vmatprep.subr.mxu0 0.0
    %680 = vmatpush1.msra.mxu0 0.0
    %681 = vmatprep.subr.mxu0 0.0
    %682 = vmatpush1.msra.mxu0 0.0
    %683 = vmatprep.subr.mxu0 0.0
    %684 = vmatpush1.msra.mxu0 0.0
    %685 = vmatprep.subr.mxu0 0.0
    %686 = vmatpush1.msra.mxu0 0.0
    %687 = vmatprep.subr.mxu0 0.0
    %688 = vmatpush1.msra.mxu0 0.0
    %689 = vmatprep.subr.mxu0 0.0
    %690 = vmatpush1.msra.mxu0 0.0
    %691 = vmatprep.subr.mxu0 0.0
    %692 = vmatpush1.msra.mxu0 0.0
    %693 = vmatprep.subr.mxu0 0.0
    %694 = vmatpush1.msra.mxu0 0.0
    %695 = vmatprep.subr.mxu0 0.0
    %696 = vmatpush1.msra.mxu0 0.0
    %697 = vmatprep.subr.mxu0 0.0
    %698 = vmatpush1.msra.mxu0 0.0
    %699 = vmatprep.subr.mxu0 0.0
    %700 = vmatpush1.msra.mxu0 0.0
    %701 = vmatprep.subr.mxu0 0.0
    %702 = vmatpush1.msra.mxu0 0.0
    %703 = vmatprep.subr.mxu0 0.0
    %704 = vmatpush1.msra.mxu0 0.0
    %705 = vmatprep.mubr.f32.mxu0 0.0
    %706 = vmatmul.mubr.f32.gmra.mrb[0].mxu0 %v635
    %v707 = vpop.f32.mrb[0].mxu0
    %v708 = vadd.f32 0.0, %v707
    %v709 = vpop.f32.mrb[0].mxu0
    %v710 = vadd.f32 0.0, %v709
    %711 = vdwg.mxu0
    %712 = vmatprep.subr.mxu0 %v49
    %713 = vmatpush1.msra.mxu0 %v48
    %714 = vmatprep.subr.mxu0 %v53
    %715 = vmatpush1.msra.mxu0 %v52
    %716 = vmatprep.subr.mxu0 %v57
    %717 = vmatpush1.msra.mxu0 %v56
    %718 = vmatprep.subr.mxu0 %v61
    %719 = vmatpush1.msra.mxu0 %v60
    %720 = vmatprep.subr.mxu0 %v65
    %721 = vmatpush1.msra.mxu0 %v64
    %722 = vmatprep.subr.mxu0 %v69
    %723 = vmatpush1.msra.mxu0 %v68
    %724 = vmatprep.subr.mxu0 %v73
    %725 = vmatpush1.msra.mxu0 %v72
    %726 = vmatprep.subr.mxu0 %v77
    %727 = vmatpush1.msra.mxu0 %v76
    %728 = vmatprep.subr.mxu0 %v81
    %729 = vmatpush1.msra.mxu0 %v80
    %730 = vmatprep.subr.mxu0 %v85
    %731 = vmatpush1.msra.mxu0 %v84
    %732 = vmatprep.subr.mxu0 %v89
    %733 = vmatpush1.msra.mxu0 %v88
    %734 = vmatprep.subr.mxu0 %v93
    %735 = vmatpush1.msra.mxu0 %v92
    %736 = vmatprep.subr.mxu0 %v97
    %737 = vmatpush1.msra.mxu0 %v96
    %738 = vmatprep.subr.mxu0 %v101
    %739 = vmatpush1.msra.mxu0 %v100
    %740 = vmatprep.subr.mxu0 %v105
    %741 = vmatpush1.msra.mxu0 %v104
    %742 = vmatprep.subr.mxu0 %v109
    %743 = vmatpush1.msra.mxu0 %v108
    %744 = vmatprep.subr.mxu0 0.0
    %745 = vmatpush1.msra.mxu0 0.0
    %746 = vmatprep.subr.mxu0 0.0
    %747 = vmatpush1.msra.mxu0 0.0
    %748 = vmatprep.subr.mxu0 0.0
    %749 = vmatpush1.msra.mxu0 0.0
    %750 = vmatprep.subr.mxu0 0.0
    %751 = vmatpush1.msra.mxu0 0.0
    %752 = vmatprep.subr.mxu0 0.0
    %753 = vmatpush1.msra.mxu0 0.0
    %754 = vmatprep.subr.mxu0 0.0
    %755 = vmatpush1.msra.mxu0 0.0
    %756 = vmatprep.subr.mxu0 0.0
    %757 = vmatpush1.msra.mxu0 0.0
    %758 = vmatprep.subr.mxu0 0.0
    %759 = vmatpush1.msra.mxu0 0.0
    %760 = vmatprep.subr.mxu0 0.0
    %761 = vmatpush1.msra.mxu0 0.0
    %762 = vmatprep.subr.mxu0 0.0
    %763 = vmatpush1.msra.mxu0 0.0
    %764 = vmatprep.subr.mxu0 0.0
    %765 = vmatpush1.msra.mxu0 0.0
    %766 = vmatprep.subr.mxu0 0.0
    %767 = vmatpush1.msra.mxu0 0.0
    %768 = vmatprep.subr.mxu0 0.0
    %769 = vmatpush1.msra.mxu0 0.0
    %770 = vmatprep.subr.mxu0 0.0
    %771 = vmatpush1.msra.mxu0 0.0
    %772 = vmatprep.subr.mxu0 0.0
    %773 = vmatpush1.msra.mxu0 0.0
    %774 = vmatprep.subr.mxu0 0.0
    %775 = vmatpush1.msra.mxu0 0.0
    %776 = vmatprep.mubr.f32.mxu0 0.0
    %777 = vmatmul.mubr.f32.gmra.mrb[0].mxu0 %v635
    %v778 = vpop.f32.mrb[0].mxu0
    %v779 = vadd.f32 0.0, %v778
    %v780 = vpop.f32.mrb[0].mxu0
    %v781 = vadd.f32 0.0, %v780
    %782 = vdwg.mxu0
    %v783 = vadd.f32 %v637, %v708
    %v784 = vadd.f32 %v638, %v710
    %v785 = vadd.f32 %v639, %v779
    %v786 = vadd.f32 %v640, %v781
    %v787 = vxor.u32 %v783, 2147483648
    %v788 = vxor.u32 %v784, 2147483648
    %v789 = vxor.u32 %v785, 2147483648
    %v790 = vmul.f32 %v787, 1.442695
    %v791 = vpow.pop %v790
    %v792 = vmul.f32 %v788, 1.442695
    %v793 = vpow.pop %v792
    %v794 = vmul.f32 %v789, 1.442695
    %v795 = vpow.pop %v794
    %v796 = vadd.f32 %v791, 1.0
    %v797 = vadd.f32 %v793, 1.0
    %v798 = vadd.f32 %v795, 1.0
    %v799 = vrcp.pop %v796
    %v800 = vmul.f32 1.0, %v799
    %v801 = vrcp.pop %v797
    %v802 = vmul.f32 1.0, %v801
    %v803 = vrcp.pop %v798
    %v804 = vmul.f32 1.0, %v803
    %v805 = vtanh.pop %v786
    %v806 = vmul.f32 %v802, %v633
    %v807 = vmul.f32 %v800, %v805
    %v808 = vadd.f32 %v806, %v807
    %v809 = vtanh.pop %v808
    %v810 = vmul.f32 %v804, %v809
    %s811 = scalar_lea.vmem [#allocation4], 128
    %v812 = vld [vmem:[%s811] sm:$0xff]
    %v813 = vld [vmem:[%s811 + $0x8] sm:$0xff]
    %v814 = vld [vmem:[%s811 + $0x10] sm:$0xff]
    %v815 = vld [vmem:[%s811 + $0x18] sm:$0xff]
    %816 = vmatprep.subr.mxu0 %v47
    %817 = vmatpush1.msra.mxu0 %v46
    %818 = vmatprep.subr.mxu0 %v51
    %819 = vmatpush1.msra.mxu0 %v50
    %820 = vmatprep.subr.mxu0 %v55
    %821 = vmatpush1.msra.mxu0 %v54
    %822 = vmatprep.subr.mxu0 %v59
    %823 = vmatpush1.msra.mxu0 %v58
    %824 = vmatprep.subr.mxu0 %v63
    %825 = vmatpush1.msra.mxu0 %v62
    %826 = vmatprep.subr.mxu0 %v67
    %827 = vmatpush1.msra.mxu0 %v66
    %828 = vmatprep.subr.mxu0 %v71
    %829 = vmatpush1.msra.mxu0 %v70
    %830 = vmatprep.subr.mxu0 %v75
    %831 = vmatpush1.msra.mxu0 %v74
    %832 = vmatprep.subr.mxu0 %v79
    %833 = vmatpush1.msra.mxu0 %v78
    %834 = vmatprep.subr.mxu0 %v83
    %835 = vmatpush1.msra.mxu0 %v82
    %836 = vmatprep.subr.mxu0 %v87
    %837 = vmatpush1.msra.mxu0 %v86
    %838 = vmatprep.subr.mxu0 %v91
    %839 = vmatpush1.msra.mxu0 %v90
    %840 = vmatprep.subr.mxu0 %v95
    %841 = vmatpush1.msra.mxu0 %v94
    %842 = vmatprep.subr.mxu0 %v99
    %843 = vmatpush1.msra.mxu0 %v98
    %844 = vmatprep.subr.mxu0 %v103
    %845 = vmatpush1.msra.mxu0 %v102
    %846 = vmatprep.subr.mxu0 %v107
    %847 = vmatpush1.msra.mxu0 %v106
    %848 = vmatprep.subr.mxu0 0.0
    %849 = vmatpush1.msra.mxu0 0.0
    %850 = vmatprep.subr.mxu0 0.0
    %851 = vmatpush1.msra.mxu0 0.0
    %852 = vmatprep.subr.mxu0 0.0
    %853 = vmatpush1.msra.mxu0 0.0
    %854 = vmatprep.subr.mxu0 0.0
    %855 = vmatpush1.msra.mxu0 0.0
    %856 = vmatprep.subr.mxu0 0.0
    %857 = vmatpush1.msra.mxu0 0.0
    %858 = vmatprep.subr.mxu0 0.0
    %859 = vmatpush1.msra.mxu0 0.0
    %860 = vmatprep.subr.mxu0 0.0
    %861 = vmatpush1.msra.mxu0 0.0
    %862 = vmatprep.subr.mxu0 0.0
    %863 = vmatpush1.msra.mxu0 0.0
    %864 = vmatprep.subr.mxu0 0.0
    %865 = vmatpush1.msra.mxu0 0.0
    %866 = vmatprep.subr.mxu0 0.0
    %867 = vmatpush1.msra.mxu0 0.0
    %868 = vmatprep.subr.mxu0 0.0
    %869 = vmatpush1.msra.mxu0 0.0
    %870 = vmatprep.subr.mxu0 0.0
    %871 = vmatpush1.msra.mxu0 0.0
    %872 = vmatprep.subr.mxu0 0.0
    %873 = vmatpush1.msra.mxu0 0.0
    %874 = vmatprep.subr.mxu0 0.0
    %875 = vmatpush1.msra.mxu0 0.0
    %876 = vmatprep.subr.mxu0 0.0
    %877 = vmatpush1.msra.mxu0 0.0
    %878 = vmatprep.subr.mxu0 0.0
    %879 = vmatpush1.msra.mxu0 0.0
    %880 = vmatprep.mubr.f32.mxu0 0.0
    %881 = vmatmul.mubr.f32.gmra.mrb[0].mxu0 %v810
    %v882 = vpop.f32.mrb[0].mxu0
    %v883 = vadd.f32 0.0, %v882
    %v884 = vpop.f32.mrb[0].mxu0
    %v885 = vadd.f32 0.0, %v884
    %886 = vdwg.mxu0
    %887 = vmatprep.subr.mxu0 %v49
    %888 = vmatpush1.msra.mxu0 %v48
    %889 = vmatprep.subr.mxu0 %v53
    %890 = vmatpush1.msra.mxu0 %v52
    %891 = vmatprep.subr.mxu0 %v57
    %892 = vmatpush1.msra.mxu0 %v56
    %893 = vmatprep.subr.mxu0 %v61
    %894 = vmatpush1.msra.mxu0 %v60
    %895 = vmatprep.subr.mxu0 %v65
    %896 = vmatpush1.msra.mxu0 %v64
    %897 = vmatprep.subr.mxu0 %v69
    %898 = vmatpush1.msra.mxu0 %v68
    %899 = vmatprep.subr.mxu0 %v73
    %900 = vmatpush1.msra.mxu0 %v72
    %901 = vmatprep.subr.mxu0 %v77
    %902 = vmatpush1.msra.mxu0 %v76
    %903 = vmatprep.subr.mxu0 %v81
    %904 = vmatpush1.msra.mxu0 %v80
    %905 = vmatprep.subr.mxu0 %v85
    %906 = vmatpush1.msra.mxu0 %v84
    %907 = vmatprep.subr.mxu0 %v89
    %908 = vmatpush1.msra.mxu0 %v88
    %909 = vmatprep.subr.mxu0 %v93
    %910 = vmatpush1.msra.mxu0 %v92
    %911 = vmatprep.subr.mxu0 %v97
    %912 = vmatpush1.msra.mxu0 %v96
    %913 = vmatprep.subr.mxu0 %v101
    %914 = vmatpush1.msra.mxu0 %v100
    %915 = vmatprep.subr.mxu0 %v105
    %916 = vmatpush1.msra.mxu0 %v104
    %917 = vmatprep.subr.mxu0 %v109
    %918 = vmatpush1.msra.mxu0 %v108
    %919 = vmatprep.subr.mxu0 0.0
    %920 = vmatpush1.msra.mxu0 0.0
    %921 = vmatprep.subr.mxu0 0.0
    %922 = vmatpush1.msra.mxu0 0.0
    %923 = vmatprep.subr.mxu0 0.0
    %924 = vmatpush1.msra.mxu0 0.0
    %925 = vmatprep.subr.mxu0 0.0
    %926 = vmatpush1.msra.mxu0 0.0
    %927 = vmatprep.subr.mxu0 0.0
    %928 = vmatpush1.msra.mxu0 0.0
    %929 = vmatprep.subr.mxu0 0.0
    %930 = vmatpush1.msra.mxu0 0.0
    %931 = vmatprep.subr.mxu0 0.0
    %932 = vmatpush1.msra.mxu0 0.0
    %933 = vmatprep.subr.mxu0 0.0
    %934 = vmatpush1.msra.mxu0 0.0
    %935 = vmatprep.subr.mxu0 0.0
    %936 = vmatpush1.msra.mxu0 0.0
    %937 = vmatprep.subr.mxu0 0.0
    %938 = vmatpush1.msra.mxu0 0.0
    %939 = vmatprep.subr.mxu0 0.0
    %940 = vmatpush1.msra.mxu0 0.0
    %941 = vmatprep.subr.mxu0 0.0
    %942 = vmatpush1.msra.mxu0 0.0
    %943 = vmatprep.subr.mxu0 0.0
    %944 = vmatpush1.msra.mxu0 0.0
    %945 = vmatprep.subr.mxu0 0.0
    %946 = vmatpush1.msra.mxu0 0.0
    %947 = vmatprep.subr.mxu0 0.0
    %948 = vmatpush1.msra.mxu0 0.0
    %949 = vmatprep.subr.mxu0 0.0
    %950 = vmatpush1.msra.mxu0 0.0
    %951 = vmatprep.mubr.f32.mxu0 0.0
    %952 = vmatmul.mubr.f32.gmra.mrb[0].mxu0 %v810
    %v953 = vpop.f32.mrb[0].mxu0
    %v954 = vadd.f32 0.0, %v953
    %v955 = vpop.f32.mrb[0].mxu0
    %v956 = vadd.f32 0.0, %v955
    %957 = vdwg.mxu0
    %v958 = vadd.f32 %v812, %v883
    %v959 = vadd.f32 %v813, %v885
    %v960 = vadd.f32 %v814, %v954
    %v961 = vadd.f32 %v815, %v956
    %v962 = vxor.u32 %v958, 2147483648
    %v963 = vxor.u32 %v959, 2147483648
    %v964 = vxor.u32 %v960, 2147483648
    %v965 = vmul.f32 %v962, 1.442695
    %v966 = vpow.pop %v965
    %v967 = vmul.f32 %v963, 1.442695
    %v968 = vpow.pop %v967
    %v969 = vmul.f32 %v964, 1.442695
    %v970 = vpow.pop %v969
    %v971 = vadd.f32 %v966, 1.0
    %v972 = vadd.f32 %v968, 1.0
    %v973 = vadd.f32 %v970, 1.0
    %v974 = vrcp.pop %v971
    %v975 = vmul.f32 1.0, %v974
    %v976 = vrcp.pop %v972
    %v977 = vmul.f32 1.0, %v976
    %v978 = vrcp.pop %v973
    %v979 = vmul.f32 1.0, %v978
    %v980 = vtanh.pop %v961
    %v981 = vmul.f32 %v977, %v808
    %v982 = vmul.f32 %v975, %v980
    %v983 = vadd.f32 %v981, %v982
    %v984 = vtanh.pop %v983
    %v985 = vmul.f32 %v979, %v984
    %s986 = scalar_lea.vmem [#allocation4], 160
    %v987 = vld [vmem:[%s986] sm:$0xff]
    %v988 = vld [vmem:[%s986 + $0x8] sm:$0xff]
    %v989 = vld [vmem:[%s986 + $0x10] sm:$0xff]
    %v990 = vld [vmem:[%s986 + $0x18] sm:$0xff]
    %991 = vmatprep.subr.mxu0 %v47
    %992 = vmatpush1.msra.mxu0 %v46
    %993 = vmatprep.subr.mxu0 %v51
    %994 = vmatpush1.msra.mxu0 %v50
    %995 = vmatprep.subr.mxu0 %v55
    %996 = vmatpush1.msra.mxu0 %v54
    %997 = vmatprep.subr.mxu0 %v59
    %998 = vmatpush1.msra.mxu0 %v58
    %999 = vmatprep.subr.mxu0 %v63
    %1000 = vmatpush1.msra.mxu0 %v62
    %1001 = vmatprep.subr.mxu0 %v67
    %1002 = vmatpush1.msra.mxu0 %v66
    %1003 = vmatprep.subr.mxu0 %v71
    %1004 = vmatpush1.msra.mxu0 %v70
    %1005 = vmatprep.subr.mxu0 %v75
    %1006 = vmatpush1.msra.mxu0 %v74
    %1007 = vmatprep.subr.mxu0 %v79
    %1008 = vmatpush1.msra.mxu0 %v78
    %1009 = vmatprep.subr.mxu0 %v83
    %1010 = vmatpush1.msra.mxu0 %v82
    %1011 = vmatprep.subr.mxu0 %v87
    %1012 = vmatpush1.msra.mxu0 %v86
    %1013 = vmatprep.subr.mxu0 %v91
    %1014 = vmatpush1.msra.mxu0 %v90
    %1015 = vmatprep.subr.mxu0 %v95
    %1016 = vmatpush1.msra.mxu0 %v94
    %1017 = vmatprep.subr.mxu0 %v99
    %1018 = vmatpush1.msra.mxu0 %v98
    %1019 = vmatprep.subr.mxu0 %v103
    %1020 = vmatpush1.msra.mxu0 %v102
    %1021 = vmatprep.subr.mxu0 %v107
    %1022 = vmatpush1.msra.mxu0 %v106
    %1023 = vmatprep.subr.mxu0 0.0
    %1024 = vmatpush1.msra.mxu0 0.0
    %1025 = vmatprep.subr.mxu0 0.0
    %1026 = vmatpush1.msra.mxu0 0.0
    %1027 = vmatprep.subr.mxu0 0.0
    %1028 = vmatpush1.msra.mxu0 0.0
    %1029 = vmatprep.subr.mxu0 0.0
    %1030 = vmatpush1.msra.mxu0 0.0
    %1031 = vmatprep.subr.mxu0 0.0
    %1032 = vmatpush1.msra.mxu0 0.0
    %1033 = vmatprep.subr.mxu0 0.0
    %1034 = vmatpush1.msra.mxu0 0.0
    %1035 = vmatprep.subr.mxu0 0.0
    %1036 = vmatpush1.msra.mxu0 0.0
    %1037 = vmatprep.subr.mxu0 0.0
    %1038 = vmatpush1.msra.mxu0 0.0
    %1039 = vmatprep.subr.mxu0 0.0
    %1040 = vmatpush1.msra.mxu0 0.0
    %1041 = vmatprep.subr.mxu0 0.0
    %1042 = vmatpush1.msra.mxu0 0.0
    %1043 = vmatprep.subr.mxu0 0.0
    %1044 = vmatpush1.msra.mxu0 0.0
    %1045 = vmatprep.subr.mxu0 0.0
    %1046 = vmatpush1.msra.mxu0 0.0
    %1047 = vmatprep.subr.mxu0 0.0
    %1048 = vmatpush1.msra.mxu0 0.0
    %1049 = vmatprep.subr.mxu0 0.0
    %1050 = vmatpush1.msra.mxu0 0.0
    %1051 = vmatprep.subr.mxu0 0.0
    %1052 = vmatpush1.msra.mxu0 0.0
    %1053 = vmatprep.subr.mxu0 0.0
    %1054 = vmatpush1.msra.mxu0 0.0
    %1055 = vmatprep.mubr.f32.mxu0 0.0
    %1056 = vmatmul.mubr.f32.gmra.mrb[0].mxu0 %v985
    %v1057 = vpop.f32.mrb[0].mxu0
    %v1058 = vadd.f32 0.0, %v1057
    %v1059 = vpop.f32.mrb[0].mxu0
    %v1060 = vadd.f32 0.0, %v1059
    %1061 = vdwg.mxu0
    %1062 = vmatprep.subr.mxu0 %v49
    %1063 = vmatpush1.msra.mxu0 %v48
    %1064 = vmatprep.subr.mxu0 %v53
    %1065 = vmatpush1.msra.mxu0 %v52
    %1066 = vmatprep.subr.mxu0 %v57
    %1067 = vmatpush1.msra.mxu0 %v56
    %1068 = vmatprep.subr.mxu0 %v61
    %1069 = vmatpush1.msra.mxu0 %v60
    %1070 = vmatprep.subr.mxu0 %v65
    %1071 = vmatpush1.msra.mxu0 %v64
    %1072 = vmatprep.subr.mxu0 %v69
    %1073 = vmatpush1.msra.mxu0 %v68
    %1074 = vmatprep.subr.mxu0 %v73
    %1075 = vmatpush1.msra.mxu0 %v72
    %1076 = vmatprep.subr.mxu0 %v77
    %1077 = vmatpush1.msra.mxu0 %v76
    %1078 = vmatprep.subr.mxu0 %v81
    %1079 = vmatpush1.msra.mxu0 %v80
    %1080 = vmatprep.subr.mxu0 %v85
    %1081 = vmatpush1.msra.mxu0 %v84
    %1082 = vmatprep.subr.mxu0 %v89
    %1083 = vmatpush1.msra.mxu0 %v88
    %1084 = vmatprep.subr.mxu0 %v93
    %1085 = vmatpush1.msra.mxu0 %v92
    %1086 = vmatprep.subr.mxu0 %v97
    %1087 = vmatpush1.msra.mxu0 %v96
    %1088 = vmatprep.subr.mxu0 %v101
    %1089 = vmatpush1.msra.mxu0 %v100
    %1090 = vmatprep.subr.mxu0 %v105
    %1091 = vmatpush1.msra.mxu0 %v104
    %1092 = vmatprep.subr.mxu0 %v109
    %1093 = vmatpush1.msra.mxu0 %v108
    %1094 = vmatprep.subr.mxu0 0.0
    %1095 = vmatpush1.msra.mxu0 0.0
    %1096 = vmatprep.subr.mxu0 0.0
    %1097 = vmatpush1.msra.mxu0 0.0
    %1098 = vmatprep.subr.mxu0 0.0
    %1099 = vmatpush1.msra.mxu0 0.0
    %1100 = vmatprep.subr.mxu0 0.0
    %1101 = vmatpush1.msra.mxu0 0.0
    %1102 = vmatprep.subr.mxu0 0.0
    %1103 = vmatpush1.msra.mxu0 0.0
    %1104 = vmatprep.subr.mxu0 0.0
    %1105 = vmatpush1.msra.mxu0 0.0
    %1106 = vmatprep.subr.mxu0 0.0
    %1107 = vmatpush1.msra.mxu0 0.0
    %1108 = vmatprep.subr.mxu0 0.0
    %1109 = vmatpush1.msra.mxu0 0.0
    %1110 = vmatprep.subr.mxu0 0.0
    %1111 = vmatpush1.msra.mxu0 0.0
    %1112 = vmatprep.subr.mxu0 0.0
    %1113 = vmatpush1.msra.mxu0 0.0
    %1114 = vmatprep.subr.mxu0 0.0
    %1115 = vmatpush1.msra.mxu0 0.0
    %1116 = vmatprep.subr.mxu0 0.0
    %1117 = vmatpush1.msra.mxu0 0.0
    %1118 = vmatprep.subr.mxu0 0.0
    %1119 = vmatpush1.msra.mxu0 0.0
    %1120 = vmatprep.subr.mxu0 0.0
    %1121 = vmatpush1.msra.mxu0 0.0
    %1122 = vmatprep.subr.mxu0 0.0
    %1123 = vmatpush1.msra.mxu0 0.0
    %1124 = vmatprep.subr.mxu0 0.0
    %1125 = vmatpush1.msra.mxu0 0.0
    %1126 = vmatprep.mubr.f32.mxu0 0.0
    %1127 = vmatmul.mubr.f32.gmra.mrb[0].mxu0 %v985
    %v1128 = vpop.f32.mrb[0].mxu0
    %v1129 = vadd.f32 0.0, %v1128
    %v1130 = vpop.f32.mrb[0].mxu0
    %v1131 = vadd.f32 0.0, %v1130
    %1132 = vdwg.mxu0
    %v1133 = vadd.f32 %v987, %v1058
    %v1134 = vadd.f32 %v988, %v1060
    %v1135 = vadd.f32 %v989, %v1129
    %v1136 = vadd.f32 %v990, %v1131
    %v1137 = vxor.u32 %v1133, 2147483648
    %v1138 = vxor.u32 %v1134, 2147483648
    %v1139 = vxor.u32 %v1135, 2147483648
    %v1140 = vmul.f32 %v1137, 1.442695
    %v1141 = vpow.pop %v1140
    %v1142 = vmul.f32 %v1138, 1.442695
    %v1143 = vpow.pop %v1142
    %v1144 = vmul.f32 %v1139, 1.442695
    %v1145 = vpow.pop %v1144
    %v1146 = vadd.f32 %v1141, 1.0
    %v1147 = vadd.f32 %v1143, 1.0
    %v1148 = vadd.f32 %v1145, 1.0
    %v1149 = vrcp.pop %v1146
    %v1150 = vmul.f32 1.0, %v1149
    %v1151 = vrcp.pop %v1147
    %v1152 = vmul.f32 1.0, %v1151
    %v1153 = vrcp.pop %v1148
    %v1154 = vmul.f32 1.0, %v1153
    %v1155 = vtanh.pop %v1136
    %v1156 = vmul.f32 %v1152, %v983
    %v1157 = vmul.f32 %v1150, %v1155
    %v1158 = vadd.f32 %v1156, %v1157
    %v1159 = vtanh.pop %v1158
    %v1160 = vmul.f32 %v1154, %v1159
    %s1161 = scalar_lea.vmem [#allocation4], 192
    %v1162 = vld [vmem:[%s1161] sm:$0xff]
    %v1163 = vld [vmem:[%s1161 + $0x8] sm:$0xff]
    %v1164 = vld [vmem:[%s1161 + $0x10] sm:$0xff]
    %v1165 = vld [vmem:[%s1161 + $0x18] sm:$0xff]
    %1166 = vmatprep.subr.mxu0 %v47
    %1167 = vmatpush1.msra.mxu0 %v46
    %1168 = vmatprep.subr.mxu0 %v51
    %1169 = vmatpush1.msra.mxu0 %v50
    %1170 = vmatprep.subr.mxu0 %v55
    %1171 = vmatpush1.msra.mxu0 %v54
    %1172 = vmatprep.subr.mxu0 %v59
    %1173 = vmatpush1.msra.mxu0 %v58
    %1174 = vmatprep.subr.mxu0 %v63
    %1175 = vmatpush1.msra.mxu0 %v62
    %1176 = vmatprep.subr.mxu0 %v67
    %1177 = vmatpush1.msra.mxu0 %v66
    %1178 = vmatprep.subr.mxu0 %v71
    %1179 = vmatpush1.msra.mxu0 %v70
    %1180 = vmatprep.subr.mxu0 %v75
    %1181 = vmatpush1.msra.mxu0 %v74
    %1182 = vmatprep.subr.mxu0 %v79
    %1183 = vmatpush1.msra.mxu0 %v78
    %1184 = vmatprep.subr.mxu0 %v83
    %1185 = vmatpush1.msra.mxu0 %v82
    %1186 = vmatprep.subr.mxu0 %v87
    %1187 = vmatpush1.msra.mxu0 %v86
    %1188 = vmatprep.subr.mxu0 %v91
    %1189 = vmatpush1.msra.mxu0 %v90
    %1190 = vmatprep.subr.mxu0 %v95
    %1191 = vmatpush1.msra.mxu0 %v94
    %1192 = vmatprep.subr.mxu0 %v99
    %1193 = vmatpush1.msra.mxu0 %v98
    %1194 = vmatprep.subr.mxu0 %v103
    %1195 = vmatpush1.msra.mxu0 %v102
    %1196 = vmatprep.subr.mxu0 %v107
    %1197 = vmatpush1.msra.mxu0 %v106
    %1198 = vmatprep.subr.mxu0 0.0
    %1199 = vmatpush1.msra.mxu0 0.0
    %1200 = vmatprep.subr.mxu0 0.0
    %1201 = vmatpush1.msra.mxu0 0.0
    %1202 = vmatprep.subr.mxu0 0.0
    %1203 = vmatpush1.msra.mxu0 0.0
    %1204 = vmatprep.subr.mxu0 0.0
    %1205 = vmatpush1.msra.mxu0 0.0
    %1206 = vmatprep.subr.mxu0 0.0
    %1207 = vmatpush1.msra.mxu0 0.0
    %1208 = vmatprep.subr.mxu0 0.0
    %1209 = vmatpush1.msra.mxu0 0.0
    %1210 = vmatprep.subr.mxu0 0.0
    %1211 = vmatpush1.msra.mxu0 0.0
    %1212 = vmatprep.subr.mxu0 0.0
    %1213 = vmatpush1.msra.mxu0 0.0
    %1214 = vmatprep.subr.mxu0 0.0
    %1215 = vmatpush1.msra.mxu0 0.0
    %1216 = vmatprep.subr.mxu0 0.0
    %1217 = vmatpush1.msra.mxu0 0.0
    %1218 = vmatprep.subr.mxu0 0.0
    %1219 = vmatpush1.msra.mxu0 0.0
    %1220 = vmatprep.subr.mxu0 0.0
    %1221 = vmatpush1.msra.mxu0 0.0
    %1222 = vmatprep.subr.mxu0 0.0
    %1223 = vmatpush1.msra.mxu0 0.0
    %1224 = vmatprep.subr.mxu0 0.0
    %1225 = vmatpush1.msra.mxu0 0.0
    %1226 = vmatprep.subr.mxu0 0.0
    %1227 = vmatpush1.msra.mxu0 0.0
    %1228 = vmatprep.subr.mxu0 0.0
    %1229 = vmatpush1.msra.mxu0 0.0
    %1230 = vmatprep.mubr.f32.mxu0 0.0
    %1231 = vmatmul.mubr.f32.gmra.mrb[0].mxu0 %v1160
    %v1232 = vpop.f32.mrb[0].mxu0
    %v1233 = vadd.f32 0.0, %v1232
    %v1234 = vpop.f32.mrb[0].mxu0
    %v1235 = vadd.f32 0.0, %v1234
    %1236 = vdwg.mxu0
    %1237 = vmatprep.subr.mxu0 %v49
    %1238 = vmatpush1.msra.mxu0 %v48
    %1239 = vmatprep.subr.mxu0 %v53
    %1240 = vmatpush1.msra.mxu0 %v52
    %1241 = vmatprep.subr.mxu0 %v57
    %1242 = vmatpush1.msra.mxu0 %v56
    %1243 = vmatprep.subr.mxu0 %v61
    %1244 = vmatpush1.msra.mxu0 %v60
    %1245 = vmatprep.subr.mxu0 %v65
    %1246 = vmatpush1.msra.mxu0 %v64
    %1247 = vmatprep.subr.mxu0 %v69
    %1248 = vmatpush1.msra.mxu0 %v68
    %1249 = vmatprep.subr.mxu0 %v73
    %1250 = vmatpush1.msra.mxu0 %v72
    %1251 = vmatprep.subr.mxu0 %v77
    %1252 = vmatpush1.msra.mxu0 %v76
    %1253 = vmatprep.subr.mxu0 %v81
    %1254 = vmatpush1.msra.mxu0 %v80
    %1255 = vmatprep.subr.mxu0 %v85
    %1256 = vmatpush1.msra.mxu0 %v84
    %1257 = vmatprep.subr.mxu0 %v89
    %1258 = vmatpush1.msra.mxu0 %v88
    %1259 = vmatprep.subr.mxu0 %v93
    %1260 = vmatpush1.msra.mxu0 %v92
    %1261 = vmatprep.subr.mxu0 %v97
    %1262 = vmatpush1.msra.mxu0 %v96
    %1263 = vmatprep.subr.mxu0 %v101
    %1264 = vmatpush1.msra.mxu0 %v100
    %1265 = vmatprep.subr.mxu0 %v105
    %1266 = vmatpush1.msra.mxu0 %v104
    %1267 = vmatprep.subr.mxu0 %v109
    %1268 = vmatpush1.msra.mxu0 %v108
    %1269 = vmatprep.subr.mxu0 0.0
    %1270 = vmatpush1.msra.mxu0 0.0
    %1271 = vmatprep.subr.mxu0 0.0
    %1272 = vmatpush1.msra.mxu0 0.0
    %1273 = vmatprep.subr.mxu0 0.0
    %1274 = vmatpush1.msra.mxu0 0.0
    %1275 = vmatprep.subr.mxu0 0.0
    %1276 = vmatpush1.msra.mxu0 0.0
    %1277 = vmatprep.subr.mxu0 0.0
    %1278 = vmatpush1.msra.mxu0 0.0
    %1279 = vmatprep.subr.mxu0 0.0
    %1280 = vmatpush1.msra.mxu0 0.0
    %1281 = vmatprep.subr.mxu0 0.0
    %1282 = vmatpush1.msra.mxu0 0.0
    %1283 = vmatprep.subr.mxu0 0.0
    %1284 = vmatpush1.msra.mxu0 0.0
    %1285 = vmatprep.subr.mxu0 0.0
    %1286 = vmatpush1.msra.mxu0 0.0
    %1287 = vmatprep.subr.mxu0 0.0
    %1288 = vmatpush1.msra.mxu0 0.0
    %1289 = vmatprep.subr.mxu0 0.0
    %1290 = vmatpush1.msra.mxu0 0.0
    %1291 = vmatprep.subr.mxu0 0.0
    %1292 = vmatpush1.msra.mxu0 0.0
    %1293 = vmatprep.subr.mxu0 0.0
    %1294 = vmatpush1.msra.mxu0 0.0
    %1295 = vmatprep.subr.mxu0 0.0
    %1296 = vmatpush1.msra.mxu0 0.0
    %1297 = vmatprep.subr.mxu0 0.0
    %1298 = vmatpush1.msra.mxu0 0.0
    %1299 = vmatprep.subr.mxu0 0.0
    %1300 = vmatpush1.msra.mxu0 0.0
    %1301 = vmatprep.mubr.f32.mxu0 0.0
    %1302 = vmatmul.mubr.f32.gmra.mrb[0].mxu0 %v1160
    %v1303 = vpop.f32.mrb[0].mxu0
    %v1304 = vadd.f32 0.0, %v1303
    %v1305 = vpop.f32.mrb[0].mxu0
    %v1306 = vadd.f32 0.0, %v1305
    %1307 = vdwg.mxu0
    %v1308 = vadd.f32 %v1162, %v1233
    %v1309 = vadd.f32 %v1163, %v1235
    %v1310 = vadd.f32 %v1164, %v1304
    %v1311 = vadd.f32 %v1165, %v1306
    %v1312 = vxor.u32 %v1308, 2147483648
    %v1313 = vxor.u32 %v1309, 2147483648
    %v1314 = vxor.u32 %v1310, 2147483648
    %v1315 = vmul.f32 %v1312, 1.442695
    %v1316 = vpow.pop %v1315
    %v1317 = vmul.f32 %v1313, 1.442695
    %v1318 = vpow.pop %v1317
    %v1319 = vmul.f32 %v1314, 1.442695
    %v1320 = vpow.pop %v1319
    %v1321 = vadd.f32 %v1316, 1.0
    %v1322 = vadd.f32 %v1318, 1.0
    %v1323 = vadd.f32 %v1320, 1.0
    %v1324 = vrcp.pop %v1321
    %v1325 = vmul.f32 1.0, %v1324
    %v1326 = vrcp.pop %v1322
    %v1327 = vmul.f32 1.0, %v1326
    %v1328 = vrcp.pop %v1323
    %v1329 = vmul.f32 1.0, %v1328
    %v1330 = vtanh.pop %v1311
    %v1331 = vmul.f32 %v1327, %v1158
    %v1332 = vmul.f32 %v1325, %v1330
    %v1333 = vadd.f32 %v1331, %v1332
    %v1334 = vtanh.pop %v1333
    %v1335 = vmul.f32 %v1329, %v1334
    %s1336 = scalar_lea.vmem [#allocation4], 224
    %v1337 = vld [vmem:[%s1336] sm:$0xff]
    %v1338 = vld [vmem:[%s1336 + $0x8] sm:$0xff]
    %v1339 = vld [vmem:[%s1336 + $0x10] sm:$0xff]
    %v1340 = vld [vmem:[%s1336 + $0x18] sm:$0xff]
    %1341 = vmatprep.subr.mxu0 %v47
    %1342 = vmatpush1.msra.mxu0 %v46
    %1343 = vmatprep.subr.mxu0 %v51
    %1344 = vmatpush1.msra.mxu0 %v50
    %1345 = vmatprep.subr.mxu0 %v55
    %1346 = vmatpush1.msra.mxu0 %v54
    %1347 = vmatprep.subr.mxu0 %v59
    %1348 = vmatpush1.msra.mxu0 %v58
    %1349 = vmatprep.subr.mxu0 %v63
    %1350 = vmatpush1.msra.mxu0 %v62
    %1351 = vmatprep.subr.mxu0 %v67
    %1352 = vmatpush1.msra.mxu0 %v66
    %1353 = vmatprep.subr.mxu0 %v71
    %1354 = vmatpush1.msra.mxu0 %v70
    %1355 = vmatprep.subr.mxu0 %v75
    %1356 = vmatpush1.msra.mxu0 %v74
    %1357 = vmatprep.subr.mxu0 %v79
    %1358 = vmatpush1.msra.mxu0 %v78
    %1359 = vmatprep.subr.mxu0 %v83
    %1360 = vmatpush1.msra.mxu0 %v82
    %1361 = vmatprep.subr.mxu0 %v87
    %1362 = vmatpush1.msra.mxu0 %v86
    %1363 = vmatprep.subr.mxu0 %v91
    %1364 = vmatpush1.msra.mxu0 %v90
    %1365 = vmatprep.subr.mxu0 %v95
    %1366 = vmatpush1.msra.mxu0 %v94
    %1367 = vmatprep.subr.mxu0 %v99
    %1368 = vmatpush1.msra.mxu0 %v98
    %1369 = vmatprep.subr.mxu0 %v103
    %1370 = vmatpush1.msra.mxu0 %v102
    %1371 = vmatprep.subr.mxu0 %v107
    %1372 = vmatpush1.msra.mxu0 %v106
    %1373 = vmatprep.subr.mxu0 0.0
    %1374 = vmatpush1.msra.mxu0 0.0
    %1375 = vmatprep.subr.mxu0 0.0
    %1376 = vmatpush1.msra.mxu0 0.0
    %1377 = vmatprep.subr.mxu0 0.0
    %1378 = vmatpush1.msra.mxu0 0.0
    %1379 = vmatprep.subr.mxu0 0.0
    %1380 = vmatpush1.msra.mxu0 0.0
    %1381 = vmatprep.subr.mxu0 0.0
    %1382 = vmatpush1.msra.mxu0 0.0
    %1383 = vmatprep.subr.mxu0 0.0
    %1384 = vmatpush1.msra.mxu0 0.0
    %1385 = vmatprep.subr.mxu0 0.0
    %1386 = vmatpush1.msra.mxu0 0.0
    %1387 = vmatprep.subr.mxu0 0.0
    %1388 = vmatpush1.msra.mxu0 0.0
    %1389 = vmatprep.subr.mxu0 0.0
    %1390 = vmatpush1.msra.mxu0 0.0
    %1391 = vmatprep.subr.mxu0 0.0
    %1392 = vmatpush1.msra.mxu0 0.0
    %1393 = vmatprep.subr.mxu0 0.0
    %1394 = vmatpush1.msra.mxu0 0.0
    %1395 = vmatprep.subr.mxu0 0.0
    %1396 = vmatpush1.msra.mxu0 0.0
    %1397 = vmatprep.subr.mxu0 0.0
    %1398 = vmatpush1.msra.mxu0 0.0
    %1399 = vmatprep.subr.mxu0 0.0
    %1400 = vmatpush1.msra.mxu0 0.0
    %1401 = vmatprep.subr.mxu0 0.0
    %1402 = vmatpush1.msra.mxu0 0.0
    %1403 = vmatprep.subr.mxu0 0.0
    %1404 = vmatpush1.msra.mxu0 0.0
    %1405 = vmatprep.mubr.f32.mxu0 0.0
    %1406 = vmatmul.mubr.f32.gmra.mrb[0].mxu0 %v1335
    %v1407 = vpop.f32.mrb[0].mxu0
    %v1408 = vadd.f32 0.0, %v1407
    %v1409 = vpop.f32.mrb[0].mxu0
    %v1410 = vadd.f32 0.0, %v1409
    %1411 = vdwg.mxu0
    %1412 = vmatprep.subr.mxu0 %v49
    %1413 = vmatpush1.msra.mxu0 %v48
    %1414 = vmatprep.subr.mxu0 %v53
    %1415 = vmatpush1.msra.mxu0 %v52
    %1416 = vmatprep.subr.mxu0 %v57
    %1417 = vmatpush1.msra.mxu0 %v56
    %1418 = vmatprep.subr.mxu0 %v61
    %1419 = vmatpush1.msra.mxu0 %v60
    %1420 = vmatprep.subr.mxu0 %v65
    %1421 = vmatpush1.msra.mxu0 %v64
    %1422 = vmatprep.subr.mxu0 %v69
    %1423 = vmatpush1.msra.mxu0 %v68
    %1424 = vmatprep.subr.mxu0 %v73
    %1425 = vmatpush1.msra.mxu0 %v72
    %1426 = vmatprep.subr.mxu0 %v77
    %1427 = vmatpush1.msra.mxu0 %v76
    %1428 = vmatprep.subr.mxu0 %v81
    %1429 = vmatpush1.msra.mxu0 %v80
    %1430 = vmatprep.subr.mxu0 %v85
    %1431 = vmatpush1.msra.mxu0 %v84
    %1432 = vmatprep.subr.mxu0 %v89
    %1433 = vmatpush1.msra.mxu0 %v88
    %1434 = vmatprep.subr.mxu0 %v93
    %1435 = vmatpush1.msra.mxu0 %v92
    %1436 = vmatprep.subr.mxu0 %v97
    %1437 = vmatpush1.msra.mxu0 %v96
    %1438 = vmatprep.subr.mxu0 %v101
    %1439 = vmatpush1.msra.mxu0 %v100
    %1440 = vmatprep.subr.mxu0 %v105
    %1441 = vmatpush1.msra.mxu0 %v104
    %1442 = vmatprep.subr.mxu0 %v109
    %1443 = vmatpush1.msra.mxu0 %v108
    %1444 = vmatprep.subr.mxu0 0.0
    %1445 = vmatpush1.msra.mxu0 0.0
    %1446 = vmatprep.subr.mxu0 0.0
    %1447 = vmatpush1.msra.mxu0 0.0
    %1448 = vmatprep.subr.mxu0 0.0
    %1449 = vmatpush1.msra.mxu0 0.0
    %1450 = vmatprep.subr.mxu0 0.0
    %1451 = vmatpush1.msra.mxu0 0.0
    %1452 = vmatprep.subr.mxu0 0.0
    %1453 = vmatpush1.msra.mxu0 0.0
    %1454 = vmatprep.subr.mxu0 0.0
    %1455 = vmatpush1.msra.mxu0 0.0
    %1456 = vmatprep.subr.mxu0 0.0
    %1457 = vmatpush1.msra.mxu0 0.0
    %1458 = vmatprep.subr.mxu0 0.0
    %1459 = vmatpush1.msra.mxu0 0.0
    %1460 = vmatprep.subr.mxu0 0.0
    %1461 = vmatpush1.msra.mxu0 0.0
    %1462 = vmatprep.subr.mxu0 0.0
    %1463 = vmatpush1.msra.mxu0 0.0
    %1464 = vmatprep.subr.mxu0 0.0
    %1465 = vmatpush1.msra.mxu0 0.0
    %1466 = vmatprep.subr.mxu0 0.0
    %1467 = vmatpush1.msra.mxu0 0.0
    %1468 = vmatprep.subr.mxu0 0.0
    %1469 = vmatpush1.msra.mxu0 0.0
    %1470 = vmatprep.subr.mxu0 0.0
    %1471 = vmatpush1.msra.mxu0 0.0
    %1472 = vmatprep.subr.mxu0 0.0
    %1473 = vmatpush1.msra.mxu0 0.0
    %1474 = vmatprep.subr.mxu0 0.0
    %1475 = vmatpush1.msra.mxu0 0.0
    %1476 = vmatprep.mubr.f32.mxu0 0.0
    %1477 = vmatmul.mubr.f32.gmra.mrb[0].mxu0 %v1335
    %v1478 = vpop.f32.mrb[0].mxu0
    %v1479 = vadd.f32 0.0, %v1478
    %v1480 = vpop.f32.mrb[0].mxu0
    %v1481 = vadd.f32 0.0, %v1480
    %1482 = vdwg.mxu0
    %v1483 = vadd.f32 %v1337, %v1408
    %v1484 = vadd.f32 %v1338, %v1410
    %v1485 = vadd.f32 %v1339, %v1479
    %v1486 = vadd.f32 %v1340, %v1481
    %v1487 = vxor.u32 %v1483, 2147483648
    %v1488 = vxor.u32 %v1484, 2147483648
    %v1489 = vxor.u32 %v1485, 2147483648
    %v1490 = vmul.f32 %v1487, 1.442695
    %v1491 = vpow.pop %v1490
    %v1492 = vmul.f32 %v1488, 1.442695
    %v1493 = vpow.pop %v1492
    %v1494 = vmul.f32 %v1489, 1.442695
    %v1495 = vpow.pop %v1494
    %v1496 = vadd.f32 %v1491, 1.0
    %v1497 = vadd.f32 %v1493, 1.0
    %v1498 = vadd.f32 %v1495, 1.0
    %v1499 = vrcp.pop %v1496
    %v1500 = vmul.f32 1.0, %v1499
    %v1501 = vrcp.pop %v1497
    %v1502 = vmul.f32 1.0, %v1501
    %v1503 = vrcp.pop %v1498
    %v1504 = vmul.f32 1.0, %v1503
    %v1505 = vtanh.pop %v1486
    %v1506 = vmul.f32 %v1502, %v1333
    %v1507 = vmul.f32 %v1500, %v1505
    %v1508 = vadd.f32 %v1506, %v1507
    %v1509 = vtanh.pop %v1508
    %v1510 = vmul.f32 %v1504, %v1509
    %1511 = vst [vmem:[#allocation2] sm:$0xff] %v1510
    %1512 = vst [vmem:[#allocation3] sm:$0xff] %v1508
    // Predicated region
    $region22: #{tpu_custom_call.1} parent=1 // pred_check
      %p1513 = pneg %p40
    $region23: #{tpu_custom_call.1} parent=1 // pred_check_branch
      %1515 = sbr.rel (%p1513) target = $region25
    $region24: #{tpu_custom_call.1} parent=1 // pred_region
      %1516 = vst [vmem:[#allocation9] sm:$0xff] %v1510
    $region25: #{tpu_custom_call.1} parent=1 // pred_fallthru
      _
    // Predicated region
    $region26: #{tpu_custom_call.1} parent=1 // pred_check
      _
    $region27: #{tpu_custom_call.1} parent=1 // pred_check_branch
      %1518 = sbr.rel (0) target = $region29
    $region28: #{tpu_custom_call.1} parent=1 // pred_region
      %s1520 = ssub.s32 128, 128
      %1521 = vsyncadd [#allocation6], %s1520
      %s1523 = sshll.u32 [#allocation9], 4
      %s1524 = int_to_ptr.vmem [resolvable:$true] %s1523
      %1526 = dma.vmem_to_hbm [thread:$0]  %s1524, 128, %s2, [#allocation6]
    $region29: #{tpu_custom_call.1} parent=1 // pred_fallthru
      _
    // Predicated region
    $region30: #{tpu_custom_call.1} parent=1 // pred_check
      _
    $region31: #{tpu_custom_call.1} parent=1 // pred_check_branch
      %1528 = sbr.rel (0) target = $region33
    $region32: #{tpu_custom_call.1} parent=1 // pred_region
      %1529 = dma.done [#allocation6], 128
    $region33: #{tpu_custom_call.1} parent=1 // pred_fallthru
      _
    %1530 = vsyncpa [#allocation5], 1
    %1531 = vsyncpa [#allocation8], 1
    %1532 = vsyncpa [#allocation6], 1

</llo_original>
